<compile_context>
chip_gen: v7x
topology: tpu7x:2x2x1
jax: 0.10.0
libtpu: 0.0.40
codegen_flags: <defaults>
</compile_context>

<pallas_src>
from functools import partial

import numpy as np
import jax
import jax.numpy as jnp
from jax.experimental import pallas as pl
from jax.experimental.pallas import tpu as pltpu

LANE = 128


def _rup(x, m):
    return ((x + m - 1) // m) * m


# ----------------------------- dimension logic -----------------------------
def encoder_dims(input_dim, hidden_dim, latent_dim, hidden_layers, y_dim):
    dims = np.linspace(hidden_dim, latent_dim, hidden_layers + 1, dtype=int)[0:-1]
    dims = np.concatenate(([input_dim + y_dim], dims))
    return [int(d) for d in dims]


def decoder_dims(input_dim, hidden_dim, latent_dim, hidden_layers, y_dim):
    dims = np.linspace(latent_dim + y_dim, hidden_dim, hidden_layers + 1, dtype=int)
    return [int(d) for d in dims]


# --------------------------------- kernel ----------------------------------
def _cvae_kernel(n_enc_rest, n_dec_rest, latent_pad, *refs):
    """Refs (in order):
         x (TB, in_pad) bf16, y (TB, y_pad) bf16, eps (TB, latent_pad) f32,
         encoder layer 0 (split):  We0_x bf16, We0_y bf16, be0 f32,
         encoder rest:             (W bf16, b f32) * n_enc_rest,
         fused heads:              Whead (h_pad, 2*latent_pad) bf16, bhead f32,
         decoder layer 0 (split):  Wd0_z bf16, Wd0_y bf16, bd0 f32,
         decoder rest:             (W bf16, b f32) * n_dec_rest,
         output head:              Wout bf16, bout f32,
       Outputs: gen (TB, in_pad) f32, mu (TB, latent_pad) f32, logvar f32.
    """
    it = iter(refs)
    x_ref, y_ref, eps_ref = next(it), next(it), next(it)
    We0x, We0y, be0 = next(it), next(it), next(it)
    enc = [(next(it), next(it)) for _ in range(n_enc_rest)]
    Whead, bhead = next(it), next(it)
    Wd0z, Wd0y, bd0 = next(it), next(it), next(it)
    dec = [(next(it), next(it)) for _ in range(n_dec_rest)]
    Wout, bout = next(it), next(it)
    gen_ref, mu_ref, logvar_ref = next(it), next(it), next(it)

    f32, bf16 = jnp.float32, jnp.bfloat16
    relu = lambda v: jnp.maximum(v, 0.0)

    def dot(a, W_ref):
        # bf16 MXU operands, f32 accumulation.
        return jnp.dot(a, W_ref[...], preferred_element_type=f32)

    # ------------------------------- encoder -------------------------------
    # layer 0: cat(x, y) @ W  ==  x @ W[:in] + y @ W[in:]   (no concat needed)
    h = relu(dot(x_ref[...], We0x) + dot(y_ref[...], We0y) + be0[...]).astype(bf16)
    for W, b in enc:
        h = relu(dot(h, W) + b[...]).astype(bf16)

    # fused mu|logvar head: one matmul with N = 2*latent_pad, then lane-slice.
    hs = dot(h, Whead) + bhead[...]                       # (TB, 2*latent_pad) f32
    mu_ref[...] = hs[:, :latent_pad]
    logvar_ref[...] = hs[:, latent_pad:]

    # ---- reparameterize: eps * exp(logvar/2) + mu (f32) ----
    # Re-read from the output refs (already in VMEM) to keep live ranges short.
    x_sample = eps_ref[...] * jnp.exp(logvar_ref[...] * 0.5) + mu_ref[...]

    # ------------------------------- decoder -------------------------------
    # layer 0: cat(x_sample, y) @ W as two accumulating matmuls (no scratch).
    d = relu(
        dot(x_sample.astype(bf16), Wd0z) + dot(y_ref[...], Wd0y) + bd0[...]
    ).astype(bf16)
    for W, b in dec:
        d = relu(dot(d, W) + b[...]).astype(bf16)
    gen_ref[...] = dot(d, Wout) + bout[...]               # f32


# ------------------------------ parameter init ------------------------------
def _linear_init(key, fan_in, fan_out):
    k1, k2 = jax.random.split(key)
    bound = 1.0 / np.sqrt(fan_in)
    W = jax.random.uniform(k1, (fan_in, fan_out), jnp.float32, -bound, bound)
    b = jax.random.uniform(k2, (1, fan_out), jnp.float32, -bound, bound)
    return W, b


def init_cvae_params(key, input_dim, hidden_dim, latent_dim, hidden_layers, y_dim):
    e_dims = encoder_dims(input_dim, hidden_dim, latent_dim, hidden_layers, y_dim)
    d_dims = decoder_dims(input_dim, hidden_dim, latent_dim, hidden_layers, y_dim)
    params = {"enc": [], "dec": []}
    for i in range(len(e_dims) - 1):
        key, sub = jax.random.split(key)
        params["enc"].append(_linear_init(sub, e_dims[i], e_dims[i + 1]))
    key, sub = jax.random.split(key)
    params["mu"] = _linear_init(sub, e_dims[-1], latent_dim)
    key, sub = jax.random.split(key)
    params["var"] = _linear_init(sub, e_dims[-1], latent_dim)
    for i in range(len(d_dims) - 1):
        key, sub = jax.random.split(key)
        params["dec"].append(_linear_init(sub, d_dims[i], d_dims[i + 1]))
    key, sub = jax.random.split(key)
    params["out"] = _linear_init(sub, hidden_dim, input_dim)
    return params


# ------------------------- generation-aware config --------------------------
def _vmem_ceiling_and_tile_cap():
    """Per-core VMEM ceiling and max batch tile, derived from the chip."""
    try:
        cap = int(pltpu.get_tpu_info().vmem_capacity_bytes)
    except Exception:
        cap = 64 << 20  # conservative: assume v7x-like 64 MiB per TensorCore
    if cap >= (100 << 20):          # v5e / v6e: 128 MiB physical VMEM
        return 96 << 20, 1024
    return 52 << 20, 512            # v7x: 64 MiB per TensorCore


# --------------------------------- wrapper ----------------------------------
def cvae_forward(params, x, y, eps, latent_dim, *, batch_tile=None):
    f32, bf16 = jnp.float32, jnp.bfloat16
    n_enc_rest = len(params["enc"]) - 1
    n_dec_rest = len(params["dec"]) - 1
    B, input_dim = x.shape
    y_dim = y.shape[1]

    vmem_ceiling, tb_cap = _vmem_ceiling_and_tile_cap()
    if batch_tile is None:
        batch_tile = tb_cap

    # ---- batch tiling (multiple of 32 sublanes) ----
    TB = min(batch_tile, _rup(B, 32))
    B_pad = _rup(B, TB)
    # Ensure >=2 grid steps when the batch allows it, so the "parallel" batch
    # axis spans both v7x TensorCores (no-op on single-TC v5e/v6e).
    if B_pad // TB < 2 and B_pad >= 64:
        TB = B_pad // 2          # B_pad is a multiple of 32, so TB is too
    B_pad = _rup(B, TB)
    grid = (B_pad // TB,)

    # ---- lane padding targets ----
    in_pad = _rup(input_dim, LANE)
    y_pad = _rup(y_dim, LANE)
    latent_pad = _rup(latent_dim, LANE)

    def pad_act(a, feat_pad, dtype):
        out = jnp.zeros((B_pad, feat_pad), f32).at[:B, : a.shape[1]].set(a)
        return out.astype(dtype)

    def pad_w(W):
        kp, np_ = _rup(W.shape[0], LANE), _rup(W.shape[1], LANE)
        return jnp.zeros((kp, np_), f32).at[: W.shape[0], : W.shape[1]].set(W).astype(bf16)

    def pad_b(b):
        np_ = _rup(b.shape[1], LANE)
        return jnp.zeros((1, np_), f32).at[:, : b.shape[1]].set(b)

    x_p = pad_act(x, in_pad, bf16)
    y_p = pad_act(y, y_pad, bf16)
    eps_p = pad_act(eps, latent_pad, f32)   # padded lanes must stay exactly 0

    # ---- split encoder layer 0 weight into x-rows / y-rows ----
    We0, be0 = params["enc"][0]
    We0x_p = pad_w(We0[:input_dim])
    We0y_p = pad_w(We0[input_dim:])
    be0_p = pad_b(be0)

    # ---- fused mu|var head ----
    Wmu, bmu = params["mu"]
    Wvar, bvar = params["var"]
    h_last = Wmu.shape[0]
    h_last_pad = _rup(h_last, LANE)
    Whead = jnp.zeros((h_last_pad, 2 * latent_pad), f32)
    Whead = Whead.at[:h_last, :latent_dim].set(Wmu)
    Whead = Whead.at[:h_last, latent_pad : latent_pad + latent_dim].set(Wvar)
    Whead = Whead.astype(bf16)
    bhead = jnp.zeros((1, 2 * latent_pad), f32)
    bhead = bhead.at[:, :latent_dim].set(bmu)
    bhead = bhead.at[:, latent_pad : latent_pad + latent_dim].set(bvar)

    # ---- split decoder layer 0 weight into z-rows / y-rows ----
    Wd0, bd0 = params["dec"][0]
    Wd0z_p = pad_w(Wd0[:latent_dim])
    Wd0y_p = pad_w(Wd0[latent_dim:])
    bd0_p = pad_b(bd0)

    # ---- flat input list ----
    act_inputs = [x_p, y_p, eps_p]
    act_feats = [in_pad, y_pad, latent_pad]
    res_inputs = [We0x_p, We0y_p, be0_p]
    for W, b in params["enc"][1:]:
        res_inputs += [pad_w(W), pad_b(b)]
    res_inputs += [Whead, bhead, Wd0z_p, Wd0y_p, bd0_p]
    for W, b in params["dec"][1:]:
        res_inputs += [pad_w(W), pad_b(b)]
    res_inputs += [pad_w(params["out"][0]), pad_b(params["out"][1])]
    inputs = act_inputs + res_inputs

    out_shape = (
        jax.ShapeDtypeStruct((B_pad, in_pad), f32),      # generated_x (padded)
        jax.ShapeDtypeStruct((B_pad, latent_pad), f32),  # z_mu (padded)
        jax.ShapeDtypeStruct((B_pad, latent_pad), f32),  # z_var / log-var (padded)
    )

    def act_spec(feat):
        return pl.BlockSpec((TB, feat), lambda i: (i, 0))

    out_specs = (act_spec(in_pad), act_spec(latent_pad), act_spec(latent_pad))

    # ---- cost estimate (same for both buffering variants) ----
    weight_bytes = sum(int(np.prod(a.shape)) * a.dtype.itemsize for a in res_inputs)
    flops_per_row = sum(
        2 * a.shape[0] * a.shape[1] for a in res_inputs if a.shape[0] > 1
    )
    io_bytes = sum(int(np.prod(a.shape)) * a.dtype.itemsize for a in inputs) + sum(
        int(np.prod(s.shape)) * 4 for s in out_shape
    )
    cost = pl.CostEstimate(
        flops=int(B_pad * flops_per_row),
        transcendentals=int(B_pad * latent_pad),
        bytes_accessed=int(io_bytes),
    )

    def build(single_buffer_weights):
        def resident_spec(a):
            # Constant index_map -> stays VMEM-resident across grid steps.
            if single_buffer_weights:
                return pl.BlockSpec(a.shape, lambda i: (0, 0),
                                    pipeline_mode=pl.Buffered(1))
            return pl.BlockSpec(a.shape, lambda i: (0, 0))

        in_specs = [act_spec(f) for f in act_feats] + [resident_spec(a) for a in res_inputs]

        wmult = 1 if single_buffer_weights else 2
        act_tile_bytes = (
            2 * (TB * in_pad * 2 + TB * y_pad * 2 + TB * latent_pad * 4)      # inputs, 2-buf
            + 2 * (TB * in_pad * 4 + 2 * TB * latent_pad * 4)                 # outputs, 2-buf
        )
        budget = wmult * weight_bytes + act_tile_bytes + (4 << 20)
        vmem_limit = int(min(vmem_ceiling, max(16 << 20, budget)))

        return pl.pallas_call(
            partial(_cvae_kernel, n_enc_rest, n_dec_rest, latent_pad),
            grid=grid,
            in_specs=in_specs,
            out_specs=out_specs,
            out_shape=out_shape,
            compiler_params=pltpu.CompilerParams(
                dimension_semantics=("parallel",),
                vmem_limit_bytes=vmem_limit,
            ),
            cost_estimate=cost,
        )

    try:
        gen_p, mu_p, logvar_p = build(True)(*inputs)
    except Exception:
        # Fallback if this jax build rejects pipeline_mode=pl.Buffered(1).
        gen_p, mu_p, logvar_p = build(False)(*inputs)

    return (
        gen_p[:B, :input_dim],
        mu_p[:B, :latent_dim],
        logvar_p[:B, :latent_dim],
    )


# ------------------------------ reference (jnp) ------------------------------
def cvae_reference(params, x, y, eps):
    relu = lambda v: jnp.maximum(v, 0.0)
    h = jnp.concatenate([x, y], axis=1)
    for W, b in params["enc"]:
        h = relu(h @ W + b)
    mu = h @ params["mu"][0] + params["mu"][1]
    logvar = h @ params["var"][0] + params["var"][1]
    std = jnp.exp(logvar / 2.0)
    x_sample = eps * std + mu
    d = jnp.concatenate([x_sample, y], axis=1)
    for W, b in params["dec"]:
        d = relu(d @ W + b)
    gen = d @ params["out"][0] + params["out"][1]
    return gen, mu, logvar


# ----------------------------------- main ------------------------------------
if __name__ == "__main__":
    B = 8
    input_dim = 32
    hidden_dim = 32
    latent_dim = 16
    hidden_layers = 2
    y_dim = 8

    key = jax.random.PRNGKey(0)
    kp, kx, ky, keps = jax.random.split(key, 4)

    params = init_cvae_params(kp, input_dim, hidden_dim, latent_dim,
                              hidden_layers, y_dim)
    x = jax.random.normal(kx, (B, input_dim), jnp.float32)
    y = jax.random.normal(ky, (B, y_dim), jnp.float32)
    eps = jax.random.normal(keps, (B, latent_dim), jnp.float32)  # torch.randn_like

    gen, mu, logvar = cvae_forward(params, x, y, eps, latent_dim)
    jax.block_until_ready((gen, mu, logvar))

    gen_r, mu_r, logvar_r = cvae_reference(params, x, y, eps)
    assert gen.shape == (B, input_dim)
    assert mu.shape == (B, latent_dim) and logvar.shape == (B, latent_dim)
    # bf16 MXU operands with f32 accumulation -> loosened tolerances vs f32 reference
    np.testing.assert_allclose(np.asarray(mu), np.asarray(mu_r), rtol=2e-2, atol=2e-2)
    np.testing.assert_allclose(np.asarray(logvar), np.asarray(logvar_r), rtol=2e-2, atol=2e-2)
    np.testing.assert_allclose(np.asarray(gen), np.asarray(gen_r), rtol=5e-2, atol=5e-2)

    print("KERNEL_OK")
</pallas_src>

<mosaic_0001>
module attributes {stable_mosaic.version = 11 : i64} {
  func.func @_cvae_kernel(%arg0: i32, %arg1: memref<32x128xbf16, #tpu.memory_space<vmem>>, %arg2: memref<32x128xbf16, #tpu.memory_space<vmem>>, %arg3: memref<32x128xf32, #tpu.memory_space<vmem>>, %arg4: memref<128x128xbf16, #tpu.memory_space<vmem>>, %arg5: memref<128x128xbf16, #tpu.memory_space<vmem>>, %arg6: memref<1x128xf32, #tpu.memory_space<vmem>>, %arg7: memref<128x128xbf16, #tpu.memory_space<vmem>>, %arg8: memref<1x128xf32, #tpu.memory_space<vmem>>, %arg9: memref<128x256xbf16, #tpu.memory_space<vmem>>, %arg10: memref<1x256xf32, #tpu.memory_space<vmem>>, %arg11: memref<128x128xbf16, #tpu.memory_space<vmem>>, %arg12: memref<128x128xbf16, #tpu.memory_space<vmem>>, %arg13: memref<1x128xf32, #tpu.memory_space<vmem>>, %arg14: memref<128x128xbf16, #tpu.memory_space<vmem>>, %arg15: memref<1x128xf32, #tpu.memory_space<vmem>>, %arg16: memref<128x128xbf16, #tpu.memory_space<vmem>>, %arg17: memref<1x128xf32, #tpu.memory_space<vmem>>, %arg18: memref<32x128xf32, #tpu.memory_space<vmem>>, %arg19: memref<32x128xf32, #tpu.memory_space<vmem>>, %arg20: memref<32x128xf32, #tpu.memory_space<vmem>>) attributes {dimension_semantics = [#tpu.dimension_semantics<parallel>], iteration_bounds = array<i64: 1>, scalar_prefetch = 0 : i64, scratch_operands = 0 : i64, tpu.core_type = #tpu.core_type<tc>, window_params = [{transform_indices = @transform_0, window_bounds = array<i64: 32, 128>}, {transform_indices = @transform_1, window_bounds = array<i64: 32, 128>}, {transform_indices = @transform_2, window_bounds = array<i64: 32, 128>}, {pipeline_mode = #tpu.pipeline_mode<synchronous>, transform_indices = @transform_3, window_bounds = array<i64: 128, 128>}, {pipeline_mode = #tpu.pipeline_mode<synchronous>, transform_indices = @transform_4, window_bounds = array<i64: 128, 128>}, {pipeline_mode = #tpu.pipeline_mode<synchronous>, transform_indices = @transform_5, window_bounds = array<i64: 1, 128>}, {pipeline_mode = #tpu.pipeline_mode<synchronous>, transform_indices = @transform_6, window_bounds = array<i64: 128, 128>}, {pipeline_mode = #tpu.pipeline_mode<synchronous>, transform_indices = @transform_7, window_bounds = array<i64: 1, 128>}, {pipeline_mode = #tpu.pipeline_mode<synchronous>, transform_indices = @transform_8, window_bounds = array<i64: 128, 256>}, {pipeline_mode = #tpu.pipeline_mode<synchronous>, transform_indices = @transform_9, window_bounds = array<i64: 1, 256>}, {pipeline_mode = #tpu.pipeline_mode<synchronous>, transform_indices = @transform_10, window_bounds = array<i64: 128, 128>}, {pipeline_mode = #tpu.pipeline_mode<synchronous>, transform_indices = @transform_11, window_bounds = array<i64: 128, 128>}, {pipeline_mode = #tpu.pipeline_mode<synchronous>, transform_indices = @transform_12, window_bounds = array<i64: 1, 128>}, {pipeline_mode = #tpu.pipeline_mode<synchronous>, transform_indices = @transform_13, window_bounds = array<i64: 128, 128>}, {pipeline_mode = #tpu.pipeline_mode<synchronous>, transform_indices = @transform_14, window_bounds = array<i64: 1, 128>}, {pipeline_mode = #tpu.pipeline_mode<synchronous>, transform_indices = @transform_15, window_bounds = array<i64: 128, 128>}, {pipeline_mode = #tpu.pipeline_mode<synchronous>, transform_indices = @transform_16, window_bounds = array<i64: 1, 128>}, {transform_indices = @transform_17, window_bounds = array<i64: 32, 128>}, {transform_indices = @transform_18, window_bounds = array<i64: 32, 128>}, {transform_indices = @transform_19, window_bounds = array<i64: 32, 128>}]} {
    %c0 = arith.constant 0 : index
    %c0_0 = arith.constant 0 : index
    %0 = vector.load %arg1[%c0, %c0_0] : memref<32x128xbf16, #tpu.memory_space<vmem>>, vector<32x128xbf16>
    %c0_1 = arith.constant 0 : index
    %c0_2 = arith.constant 0 : index
    %1 = vector.load %arg4[%c0_1, %c0_2] : memref<128x128xbf16, #tpu.memory_space<vmem>>, vector<128x128xbf16>
    %cst = arith.constant dense<0.000000e+00> : vector<32x128xf32>
    %2 = tpu.matmul %0, %1, %cst {dimension_numbers = #tpu.dot_dimension_numbers<[1], [0], [0], [1], [0, 0, 1, 1], [], []>} : vector<32x128xbf16>, vector<128x128xbf16>, vector<32x128xf32> -> vector<32x128xf32>
    %c0_3 = arith.constant 0 : index
    %c0_4 = arith.constant 0 : index
    %3 = vector.load %arg2[%c0_3, %c0_4] : memref<32x128xbf16, #tpu.memory_space<vmem>>, vector<32x128xbf16>
    %c0_5 = arith.constant 0 : index
    %c0_6 = arith.constant 0 : index
    %4 = vector.load %arg5[%c0_5, %c0_6] : memref<128x128xbf16, #tpu.memory_space<vmem>>, vector<128x128xbf16>
    %cst_7 = arith.constant dense<0.000000e+00> : vector<32x128xf32>
    %5 = tpu.matmul %3, %4, %cst_7 {dimension_numbers = #tpu.dot_dimension_numbers<[1], [0], [0], [1], [0, 0, 1, 1], [], []>} : vector<32x128xbf16>, vector<128x128xbf16>, vector<32x128xf32> -> vector<32x128xf32>
    %6 = arith.addf %2, %5 : vector<32x128xf32>
    %c0_8 = arith.constant 0 : index
    %c0_9 = arith.constant 0 : index
    %7 = vector.load %arg6[%c0_8, %c0_9] : memref<1x128xf32, #tpu.memory_space<vmem>>, vector<1x128xf32>
    %8 = vector.broadcast %7 : vector<1x128xf32> to vector<32x128xf32>
    %9 = arith.addf %6, %8 : vector<32x128xf32>
    %cst_10 = arith.constant 0.000000e+00 : f32
    %10 = vector.broadcast %cst_10 : f32 to vector<32x128xf32>
    %11 = arith.maximumf %9, %10 : vector<32x128xf32>
    %12 = arith.truncf %11 : vector<32x128xf32> to vector<32x128xbf16>
    %c0_11 = arith.constant 0 : index
    %c0_12 = arith.constant 0 : index
    %13 = vector.load %arg7[%c0_11, %c0_12] : memref<128x128xbf16, #tpu.memory_space<vmem>>, vector<128x128xbf16>
    %cst_13 = arith.constant dense<0.000000e+00> : vector<32x128xf32>
    %14 = tpu.matmul %12, %13, %cst_13 {dimension_numbers = #tpu.dot_dimension_numbers<[1], [0], [0], [1], [0, 0, 1, 1], [], []>} : vector<32x128xbf16>, vector<128x128xbf16>, vector<32x128xf32> -> vector<32x128xf32>
    %c0_14 = arith.constant 0 : index
    %c0_15 = arith.constant 0 : index
    %15 = vector.load %arg8[%c0_14, %c0_15] : memref<1x128xf32, #tpu.memory_space<vmem>>, vector<1x128xf32>
    %16 = vector.broadcast %15 : vector<1x128xf32> to vector<32x128xf32>
    %17 = arith.addf %14, %16 : vector<32x128xf32>
    %cst_16 = arith.constant 0.000000e+00 : f32
    %18 = vector.broadcast %cst_16 : f32 to vector<32x128xf32>
    %19 = arith.maximumf %17, %18 : vector<32x128xf32>
    %20 = arith.truncf %19 : vector<32x128xf32> to vector<32x128xbf16>
    %c0_17 = arith.constant 0 : index
    %c0_18 = arith.constant 0 : index
    %21 = vector.load %arg9[%c0_17, %c0_18] : memref<128x256xbf16, #tpu.memory_space<vmem>>, vector<128x256xbf16>
    %cst_19 = arith.constant dense<0.000000e+00> : vector<32x256xf32>
    %22 = tpu.matmul %20, %21, %cst_19 {dimension_numbers = #tpu.dot_dimension_numbers<[1], [0], [0], [1], [0, 0, 1, 1], [], []>} : vector<32x128xbf16>, vector<128x256xbf16>, vector<32x256xf32> -> vector<32x256xf32>
    %c0_20 = arith.constant 0 : index
    %c0_21 = arith.constant 0 : index
    %23 = vector.load %arg10[%c0_20, %c0_21] : memref<1x256xf32, #tpu.memory_space<vmem>>, vector<1x256xf32>
    %24 = vector.broadcast %23 : vector<1x256xf32> to vector<32x256xf32>
    %25 = arith.addf %22, %24 : vector<32x256xf32>
    %26 = vector.extract_strided_slice %25 {offsets = [0, 0], sizes = [32, 128], strides = [1, 1]} : vector<32x256xf32> to vector<32x128xf32>
    %c0_22 = arith.constant 0 : index
    %c0_23 = arith.constant 0 : index
    %27 = vector.load %arg19[%c0_22, %c0_23] : memref<32x128xf32, #tpu.memory_space<vmem>>, vector<32x128xf32>
    tpu.vector_store %arg19[%c0_22, %c0_23], %26 {strides = array<i32>} : memref<32x128xf32, #tpu.memory_space<vmem>>, vector<32x128xf32>,
    %28 = vector.extract_strided_slice %25 {offsets = [0, 128], sizes = [32, 128], strides = [1, 1]} : vector<32x256xf32> to vector<32x128xf32>
    %c0_24 = arith.constant 0 : index
    %c0_25 = arith.constant 0 : index
    %29 = vector.load %arg20[%c0_24, %c0_25] : memref<32x128xf32, #tpu.memory_space<vmem>>, vector<32x128xf32>
    tpu.vector_store %arg20[%c0_24, %c0_25], %28 {strides = array<i32>} : memref<32x128xf32, #tpu.memory_space<vmem>>, vector<32x128xf32>,
    %c0_26 = arith.constant 0 : index
    %c0_27 = arith.constant 0 : index
    %30 = vector.load %arg3[%c0_26, %c0_27] : memref<32x128xf32, #tpu.memory_space<vmem>>, vector<32x128xf32>
    %c0_28 = arith.constant 0 : index
    %c0_29 = arith.constant 0 : index
    %31 = vector.load %arg20[%c0_28, %c0_29] : memref<32x128xf32, #tpu.memory_space<vmem>>, vector<32x128xf32>
    %cst_30 = arith.constant 5.000000e-01 : f32
    %32 = vector.broadcast %cst_30 : f32 to vector<32x128xf32>
    %33 = arith.mulf %31, %32 : vector<32x128xf32>
    %34 = math.exp %33 : vector<32x128xf32>
    %35 = arith.mulf %30, %34 : vector<32x128xf32>
    %c0_31 = arith.constant 0 : index
    %c0_32 = arith.constant 0 : index
    %36 = vector.load %arg19[%c0_31, %c0_32] : memref<32x128xf32, #tpu.memory_space<vmem>>, vector<32x128xf32>
    %37 = arith.addf %35, %36 : vector<32x128xf32>
    %38 = arith.truncf %37 : vector<32x128xf32> to vector<32x128xbf16>
    %c0_33 = arith.constant 0 : index
    %c0_34 = arith.constant 0 : index
    %39 = vector.load %arg11[%c0_33, %c0_34] : memref<128x128xbf16, #tpu.memory_space<vmem>>, vector<128x128xbf16>
    %cst_35 = arith.constant dense<0.000000e+00> : vector<32x128xf32>
    %40 = tpu.matmul %38, %39, %cst_35 {dimension_numbers = #tpu.dot_dimension_numbers<[1], [0], [0], [1], [0, 0, 1, 1], [], []>} : vector<32x128xbf16>, vector<128x128xbf16>, vector<32x128xf32> -> vector<32x128xf32>
    %c0_36 = arith.constant 0 : index
    %c0_37 = arith.constant 0 : index
    %41 = vector.load %arg2[%c0_36, %c0_37] : memref<32x128xbf16, #tpu.memory_space<vmem>>, vector<32x128xbf16>
    %c0_38 = arith.constant 0 : index
    %c0_39 = arith.constant 0 : index
    %42 = vector.load %arg12[%c0_38, %c0_39] : memref<128x128xbf16, #tpu.memory_space<vmem>>, vector<128x128xbf16>
    %cst_40 = arith.constant dense<0.000000e+00> : vector<32x128xf32>
    %43 = tpu.matmul %41, %42, %cst_40 {dimension_numbers = #tpu.dot_dimension_numbers<[1], [0], [0], [1], [0, 0, 1, 1], [], []>} : vector<32x128xbf16>, vector<128x128xbf16>, vector<32x128xf32> -> vector<32x128xf32>
    %44 = arith.addf %40, %43 : vector<32x128xf32>
    %c0_41 = arith.constant 0 : index
    %c0_42 = arith.constant 0 : index
    %45 = vector.load %arg13[%c0_41, %c0_42] : memref<1x128xf32, #tpu.memory_space<vmem>>, vector<1x128xf32>
    %46 = vector.broadcast %45 : vector<1x128xf32> to vector<32x128xf32>
    %47 = arith.addf %44, %46 : vector<32x128xf32>
    %cst_43 = arith.constant 0.000000e+00 : f32
    %48 = vector.broadcast %cst_43 : f32 to vector<32x128xf32>
    %49 = arith.maximumf %47, %48 : vector<32x128xf32>
    %50 = arith.truncf %49 : vector<32x128xf32> to vector<32x128xbf16>
    %c0_44 = arith.constant 0 : index
    %c0_45 = arith.constant 0 : index
    %51 = vector.load %arg14[%c0_44, %c0_45] : memref<128x128xbf16, #tpu.memory_space<vmem>>, vector<128x128xbf16>
    %cst_46 = arith.constant dense<0.000000e+00> : vector<32x128xf32>
    %52 = tpu.matmul %50, %51, %cst_46 {dimension_numbers = #tpu.dot_dimension_numbers<[1], [0], [0], [1], [0, 0, 1, 1], [], []>} : vector<32x128xbf16>, vector<128x128xbf16>, vector<32x128xf32> -> vector<32x128xf32>
    %c0_47 = arith.constant 0 : index
    %c0_48 = arith.constant 0 : index
    %53 = vector.load %arg15[%c0_47, %c0_48] : memref<1x128xf32, #tpu.memory_space<vmem>>, vector<1x128xf32>
    %54 = vector.broadcast %53 : vector<1x128xf32> to vector<32x128xf32>
    %55 = arith.addf %52, %54 : vector<32x128xf32>
    %cst_49 = arith.constant 0.000000e+00 : f32
    %56 = vector.broadcast %cst_49 : f32 to vector<32x128xf32>
    %57 = arith.maximumf %55, %56 : vector<32x128xf32>
    %58 = arith.truncf %57 : vector<32x128xf32> to vector<32x128xbf16>
    %c0_50 = arith.constant 0 : index
    %c0_51 = arith.constant 0 : index
    %59 = vector.load %arg16[%c0_50, %c0_51] : memref<128x128xbf16, #tpu.memory_space<vmem>>, vector<128x128xbf16>
    %cst_52 = arith.constant dense<0.000000e+00> : vector<32x128xf32>
    %60 = tpu.matmul %58, %59, %cst_52 {dimension_numbers = #tpu.dot_dimension_numbers<[1], [0], [0], [1], [0, 0, 1, 1], [], []>} : vector<32x128xbf16>, vector<128x128xbf16>, vector<32x128xf32> -> vector<32x128xf32>
    %c0_53 = arith.constant 0 : index
    %c0_54 = arith.constant 0 : index
    %61 = vector.load %arg17[%c0_53, %c0_54] : memref<1x128xf32, #tpu.memory_space<vmem>>, vector<1x128xf32>
    %62 = vector.broadcast %61 : vector<1x128xf32> to vector<32x128xf32>
    %63 = arith.addf %60, %62 : vector<32x128xf32>
    %c0_55 = arith.constant 0 : index
    %c0_56 = arith.constant 0 : index
    %64 = vector.load %arg18[%c0_55, %c0_56] : memref<32x128xf32, #tpu.memory_space<vmem>>, vector<32x128xf32>
    tpu.vector_store %arg18[%c0_55, %c0_56], %63 {strides = array<i32>} : memref<32x128xf32, #tpu.memory_space<vmem>>, vector<32x128xf32>,
    return
  }
  func.func @transform_0(%arg0: i32) -> (i32, i32) {
    %c0_i32 = arith.constant 0 : i32
    %c0_i32_0 = arith.constant 0 : i32
    return %arg0, %c0_i32 : i32, i32
  }
  func.func @transform_1(%arg0: i32) -> (i32, i32) {
    %c0_i32 = arith.constant 0 : i32
    %c0_i32_0 = arith.constant 0 : i32
    return %arg0, %c0_i32 : i32, i32
  }
  func.func @transform_2(%arg0: i32) -> (i32, i32) {
    %c0_i32 = arith.constant 0 : i32
    %c0_i32_0 = arith.constant 0 : i32
    return %arg0, %c0_i32 : i32, i32
  }
  func.func @transform_3(%arg0: i32) -> (i32, i32) {
    %c0_i32 = arith.constant 0 : i32
    %c0_i32_0 = arith.constant 0 : i32
    %c0_i32_1 = arith.constant 0 : i32
    return %c0_i32, %c0_i32_0 : i32, i32
  }
  func.func @transform_4(%arg0: i32) -> (i32, i32) {
    %c0_i32 = arith.constant 0 : i32
    %c0_i32_0 = arith.constant 0 : i32
    %c0_i32_1 = arith.constant 0 : i32
    return %c0_i32, %c0_i32_0 : i32, i32
  }
  func.func @transform_5(%arg0: i32) -> (i32, i32) {
    %c0_i32 = arith.constant 0 : i32
    %c0_i32_0 = arith.constant 0 : i32
    %c0_i32_1 = arith.constant 0 : i32
    return %c0_i32, %c0_i32_0 : i32, i32
  }
  func.func @transform_6(%arg0: i32) -> (i32, i32) {
    %c0_i32 = arith.constant 0 : i32
    %c0_i32_0 = arith.constant 0 : i32
    %c0_i32_1 = arith.constant 0 : i32
    return %c0_i32, %c0_i32_0 : i32, i32
  }
  func.func @transform_7(%arg0: i32) -> (i32, i32) {
    %c0_i32 = arith.constant 0 : i32
    %c0_i32_0 = arith.constant 0 : i32
    %c0_i32_1 = arith.constant 0 : i32
    return %c0_i32, %c0_i32_0 : i32, i32
  }
  func.func @transform_8(%arg0: i32) -> (i32, i32) {
    %c0_i32 = arith.constant 0 : i32
    %c0_i32_0 = arith.constant 0 : i32
    %c0_i32_1 = arith.constant 0 : i32
    return %c0_i32, %c0_i32_0 : i32, i32
  }
  func.func @transform_9(%arg0: i32) -> (i32, i32) {
    %c0_i32 = arith.constant 0 : i32
    %c0_i32_0 = arith.constant 0 : i32
    %c0_i32_1 = arith.constant 0 : i32
    return %c0_i32, %c0_i32_0 : i32, i32
  }
  func.func @transform_10(%arg0: i32) -> (i32, i32) {
    %c0_i32 = arith.constant 0 : i32
    %c0_i32_0 = arith.constant 0 : i32
    %c0_i32_1 = arith.constant 0 : i32
    return %c0_i32, %c0_i32_0 : i32, i32
  }
  func.func @transform_11(%arg0: i32) -> (i32, i32) {
    %c0_i32 = arith.constant 0 : i32
    %c0_i32_0 = arith.constant 0 : i32
    %c0_i32_1 = arith.constant 0 : i32
    return %c0_i32, %c0_i32_0 : i32, i32
  }
  func.func @transform_12(%arg0: i32) -> (i32, i32) {
    %c0_i32 = arith.constant 0 : i32
    %c0_i32_0 = arith.constant 0 : i32
    %c0_i32_1 = arith.constant 0 : i32
    return %c0_i32, %c0_i32_0 : i32, i32
  }
  func.func @transform_13(%arg0: i32) -> (i32, i32) {
    %c0_i32 = arith.constant 0 : i32
    %c0_i32_0 = arith.constant 0 : i32
    %c0_i32_1 = arith.constant 0 : i32
    return %c0_i32, %c0_i32_0 : i32, i32
  }
  func.func @transform_14(%arg0: i32) -> (i32, i32) {
    %c0_i32 = arith.constant 0 : i32
    %c0_i32_0 = arith.constant 0 : i32
    %c0_i32_1 = arith.constant 0 : i32
    return %c0_i32, %c0_i32_0 : i32, i32
  }
  func.func @transform_15(%arg0: i32) -> (i32, i32) {
    %c0_i32 = arith.constant 0 : i32
    %c0_i32_0 = arith.constant 0 : i32
    %c0_i32_1 = arith.constant 0 : i32
    return %c0_i32, %c0_i32_0 : i32, i32
  }
  func.func @transform_16(%arg0: i32) -> (i32, i32) {
    %c0_i32 = arith.constant 0 : i32
    %c0_i32_0 = arith.constant 0 : i32
    %c0_i32_1 = arith.constant 0 : i32
    return %c0_i32, %c0_i32_0 : i32, i32
  }
  func.func @transform_17(%arg0: i32) -> (i32, i32) {
    %c0_i32 = arith.constant 0 : i32
    %c0_i32_0 = arith.constant 0 : i32
    return %arg0, %c0_i32 : i32, i32
  }
  func.func @transform_18(%arg0: i32) -> (i32, i32) {
    %c0_i32 = arith.constant 0 : i32
    %c0_i32_0 = arith.constant 0 : i32
    return %arg0, %c0_i32 : i32, i32
  }
  func.func @transform_19(%arg0: i32) -> (i32, i32) {
    %c0_i32 = arith.constant 0 : i32
    %c0_i32_0 = arith.constant 0 : i32
    return %arg0, %c0_i32 : i32, i32
  }
}

module attributes {stable_mosaic.version = 11 : i64} {
  func.func @_cvae_kernel(%arg0: i32, %arg1: memref<32x128xbf16, #tpu.memory_space<vmem>>, %arg2: memref<32x128xbf16, #tpu.memory_space<vmem>>, %arg3: memref<32x128xf32, #tpu.memory_space<vmem>>, %arg4: memref<128x128xbf16, #tpu.memory_space<vmem>>, %arg5: memref<128x128xbf16, #tpu.memory_space<vmem>>, %arg6: memref<1x128xf32, #tpu.memory_space<vmem>>, %arg7: memref<128x128xbf16, #tpu.memory_space<vmem>>, %arg8: memref<1x128xf32, #tpu.memory_space<vmem>>, %arg9: memref<128x256xbf16, #tpu.memory_space<vmem>>, %arg10: memref<1x256xf32, #tpu.memory_space<vmem>>, %arg11: memref<128x128xbf16, #tpu.memory_space<vmem>>, %arg12: memref<128x128xbf16, #tpu.memory_space<vmem>>, %arg13: memref<1x128xf32, #tpu.memory_space<vmem>>, %arg14: memref<128x128xbf16, #tpu.memory_space<vmem>>, %arg15: memref<1x128xf32, #tpu.memory_space<vmem>>, %arg16: memref<128x128xbf16, #tpu.memory_space<vmem>>, %arg17: memref<1x128xf32, #tpu.memory_space<vmem>>, %arg18: memref<32x128xf32, #tpu.memory_space<vmem>>, %arg19: memref<32x128xf32, #tpu.memory_space<vmem>>, %arg20: memref<32x128xf32, #tpu.memory_space<vmem>>) attributes {dimension_semantics = [#tpu.dimension_semantics<parallel>], iteration_bounds = array<i64: 1>, scalar_prefetch = 0 : i64, scratch_operands = 0 : i64, tpu.core_type = #tpu.core_type<tc>, window_params = [{transform_indices = @transform_0, window_bounds = array<i64: 32, 128>}, {transform_indices = @transform_1, window_bounds = array<i64: 32, 128>}, {transform_indices = @transform_2, window_bounds = array<i64: 32, 128>}, {pipeline_mode = #tpu.pipeline_mode<synchronous>, transform_indices = @transform_3, window_bounds = array<i64: 128, 128>}, {pipeline_mode = #tpu.pipeline_mode<synchronous>, transform_indices = @transform_4, window_bounds = array<i64: 128, 128>}, {pipeline_mode = #tpu.pipeline_mode<synchronous>, transform_indices = @transform_5, window_bounds = array<i64: 1, 128>}, {pipeline_mode = #tpu.pipeline_mode<synchronous>, transform_indices = @transform_6, window_bounds = array<i64: 128, 128>}, {pipeline_mode = #tpu.pipeline_mode<synchronous>, transform_indices = @transform_7, window_bounds = array<i64: 1, 128>}, {pipeline_mode = #tpu.pipeline_mode<synchronous>, transform_indices = @transform_8, window_bounds = array<i64: 128, 256>}, {pipeline_mode = #tpu.pipeline_mode<synchronous>, transform_indices = @transform_9, window_bounds = array<i64: 1, 256>}, {pipeline_mode = #tpu.pipeline_mode<synchronous>, transform_indices = @transform_10, window_bounds = array<i64: 128, 128>}, {pipeline_mode = #tpu.pipeline_mode<synchronous>, transform_indices = @transform_11, window_bounds = array<i64: 128, 128>}, {pipeline_mode = #tpu.pipeline_mode<synchronous>, transform_indices = @transform_12, window_bounds = array<i64: 1, 128>}, {pipeline_mode = #tpu.pipeline_mode<synchronous>, transform_indices = @transform_13, window_bounds = array<i64: 128, 128>}, {pipeline_mode = #tpu.pipeline_mode<synchronous>, transform_indices = @transform_14, window_bounds = array<i64: 1, 128>}, {pipeline_mode = #tpu.pipeline_mode<synchronous>, transform_indices = @transform_15, window_bounds = array<i64: 128, 128>}, {pipeline_mode = #tpu.pipeline_mode<synchronous>, transform_indices = @transform_16, window_bounds = array<i64: 1, 128>}, {transform_indices = @transform_17, window_bounds = array<i64: 32, 128>}, {transform_indices = @transform_18, window_bounds = array<i64: 32, 128>}, {transform_indices = @transform_19, window_bounds = array<i64: 32, 128>}]} {
    %c0 = arith.constant 0 : index
    %c0_0 = arith.constant 0 : index
    %0 = vector.load %arg1[%c0, %c0_0] : memref<32x128xbf16, #tpu.memory_space<vmem>>, vector<32x128xbf16>
    %c0_1 = arith.constant 0 : index
    %c0_2 = arith.constant 0 : index
    %1 = vector.load %arg4[%c0_1, %c0_2] : memref<128x128xbf16, #tpu.memory_space<vmem>>, vector<128x128xbf16>
    %cst = arith.constant dense<0.000000e+00> : vector<32x128xf32>
    %2 = tpu.matmul %0, %1, %cst {dimension_numbers = #tpu.dot_dimension_numbers<[1], [0], [0], [1], [0, 0, 1, 1], [], []>} : vector<32x128xbf16>, vector<128x128xbf16>, vector<32x128xf32> -> vector<32x128xf32>
    %c0_3 = arith.constant 0 : index
    %c0_4 = arith.constant 0 : index
    %3 = vector.load %arg2[%c0_3, %c0_4] : memref<32x128xbf16, #tpu.memory_space<vmem>>, vector<32x128xbf16>
    %c0_5 = arith.constant 0 : index
    %c0_6 = arith.constant 0 : index
    %4 = vector.load %arg5[%c0_5, %c0_6] : memref<128x128xbf16, #tpu.memory_space<vmem>>, vector<128x128xbf16>
    %cst_7 = arith.constant dense<0.000000e+00> : vector<32x128xf32>
    %5 = tpu.matmul %3, %4, %cst_7 {dimension_numbers = #tpu.dot_dimension_numbers<[1], [0], [0], [1], [0, 0, 1, 1], [], []>} : vector<32x128xbf16>, vector<128x128xbf16>, vector<32x128xf32> -> vector<32x128xf32>
    %6 = arith.addf %2, %5 : vector<32x128xf32>
    %c0_8 = arith.constant 0 : index
    %c0_9 = arith.constant 0 : index
    %7 = vector.load %arg6[%c0_8, %c0_9] : memref<1x128xf32, #tpu.memory_space<vmem>>, vector<1x128xf32>
    %8 = vector.broadcast %7 : vector<1x128xf32> to vector<32x128xf32>
    %9 = arith.addf %6, %8 : vector<32x128xf32>
    %cst_10 = arith.constant 0.000000e+00 : f32
    %10 = vector.broadcast %cst_10 : f32 to vector<32x128xf32>
    %11 = arith.maximumf %9, %10 : vector<32x128xf32>
    %12 = arith.truncf %11 : vector<32x128xf32> to vector<32x128xbf16>
    %c0_11 = arith.constant 0 : index
    %c0_12 = arith.constant 0 : index
    %13 = vector.load %arg7[%c0_11, %c0_12] : memref<128x128xbf16, #tpu.memory_space<vmem>>, vector<128x128xbf16>
    %cst_13 = arith.constant dense<0.000000e+00> : vector<32x128xf32>
    %14 = tpu.matmul %12, %13, %cst_13 {dimension_numbers = #tpu.dot_dimension_numbers<[1], [0], [0], [1], [0, 0, 1, 1], [], []>} : vector<32x128xbf16>, vector<128x128xbf16>, vector<32x128xf32> -> vector<32x128xf32>
    %c0_14 = arith.constant 0 : index
    %c0_15 = arith.constant 0 : index
    %15 = vector.load %arg8[%c0_14, %c0_15] : memref<1x128xf32, #tpu.memory_space<vmem>>, vector<1x128xf32>
    %16 = vector.broadcast %15 : vector<1x128xf32> to vector<32x128xf32>
    %17 = arith.addf %14, %16 : vector<32x128xf32>
    %cst_16 = arith.constant 0.000000e+00 : f32
    %18 = vector.broadcast %cst_16 : f32 to vector<32x128xf32>
    %19 = arith.maximumf %17, %18 : vector<32x128xf32>
    %20 = arith.truncf %19 : vector<32x128xf32> to vector<32x128xbf16>
    %c0_17 = arith.constant 0 : index
    %c0_18 = arith.constant 0 : index
    %21 = vector.load %arg9[%c0_17, %c0_18] : memref<128x256xbf16, #tpu.memory_space<vmem>>, vector<128x256xbf16>
    %cst_19 = arith.constant dense<0.000000e+00> : vector<32x256xf32>
    %22 = tpu.matmul %20, %21, %cst_19 {dimension_numbers = #tpu.dot_dimension_numbers<[1], [0], [0], [1], [0, 0, 1, 1], [], []>} : vector<32x128xbf16>, vector<128x256xbf16>, vector<32x256xf32> -> vector<32x256xf32>
    %c0_20 = arith.constant 0 : index
    %c0_21 = arith.constant 0 : index
    %23 = vector.load %arg10[%c0_20, %c0_21] : memref<1x256xf32, #tpu.memory_space<vmem>>, vector<1x256xf32>
    %24 = vector.broadcast %23 : vector<1x256xf32> to vector<32x256xf32>
    %25 = arith.addf %22, %24 : vector<32x256xf32>
    %26 = vector.extract_strided_slice %25 {offsets = [0, 0], sizes = [32, 128], strides = [1, 1]} : vector<32x256xf32> to vector<32x128xf32>
    %c0_22 = arith.constant 0 : index
    %c0_23 = arith.constant 0 : index
    %27 = vector.load %arg19[%c0_22, %c0_23] : memref<32x128xf32, #tpu.memory_space<vmem>>, vector<32x128xf32>
    tpu.vector_store %arg19[%c0_22, %c0_23], %26 {strides = array<i32>} : memref<32x128xf32, #tpu.memory_space<vmem>>, vector<32x128xf32>,
    %28 = vector.extract_strided_slice %25 {offsets = [0, 128], sizes = [32, 128], strides = [1, 1]} : vector<32x256xf32> to vector<32x128xf32>
    %c0_24 = arith.constant 0 : index
    %c0_25 = arith.constant 0 : index
    %29 = vector.load %arg20[%c0_24, %c0_25] : memref<32x128xf32, #tpu.memory_space<vmem>>, vector<32x128xf32>
    tpu.vector_store %arg20[%c0_24, %c0_25], %28 {strides = array<i32>} : memref<32x128xf32, #tpu.memory_space<vmem>>, vector<32x128xf32>,
    %c0_26 = arith.constant 0 : index
    %c0_27 = arith.constant 0 : index
    %30 = vector.load %arg3[%c0_26, %c0_27] : memref<32x128xf32, #tpu.memory_space<vmem>>, vector<32x128xf32>
    %c0_28 = arith.constant 0 : index
    %c0_29 = arith.constant 0 : index
    %31 = vector.load %arg20[%c0_28, %c0_29] : memref<32x128xf32, #tpu.memory_space<vmem>>, vector<32x128xf32>
    %cst_30 = arith.constant 5.000000e-01 : f32
    %32 = vector.broadcast %cst_30 : f32 to vector<32x128xf32>
    %33 = arith.mulf %31, %32 : vector<32x128xf32>
    %34 = math.exp %33 : vector<32x128xf32>
    %35 = arith.mulf %30, %34 : vector<32x128xf32>
    %c0_31 = arith.constant 0 : index
    %c0_32 = arith.constant 0 : index
    %36 = vector.load %arg19[%c0_31, %c0_32] : memref<32x128xf32, #tpu.memory_space<vmem>>, vector<32x128xf32>
    %37 = arith.addf %35, %36 : vector<32x128xf32>
    %38 = arith.truncf %37 : vector<32x128xf32> to vector<32x128xbf16>
    %c0_33 = arith.constant 0 : index
    %c0_34 = arith.constant 0 : index
    %39 = vector.load %arg11[%c0_33, %c0_34] : memref<128x128xbf16, #tpu.memory_space<vmem>>, vector<128x128xbf16>
    %cst_35 = arith.constant dense<0.000000e+00> : vector<32x128xf32>
    %40 = tpu.matmul %38, %39, %cst_35 {dimension_numbers = #tpu.dot_dimension_numbers<[1], [0], [0], [1], [0, 0, 1, 1], [], []>} : vector<32x128xbf16>, vector<128x128xbf16>, vector<32x128xf32> -> vector<32x128xf32>
    %c0_36 = arith.constant 0 : index
    %c0_37 = arith.constant 0 : index
    %41 = vector.load %arg2[%c0_36, %c0_37] : memref<32x128xbf16, #tpu.memory_space<vmem>>, vector<32x128xbf16>
    %c0_38 = arith.constant 0 : index
    %c0_39 = arith.constant 0 : index
    %42 = vector.load %arg12[%c0_38, %c0_39] : memref<128x128xbf16, #tpu.memory_space<vmem>>, vector<128x128xbf16>
    %cst_40 = arith.constant dense<0.000000e+00> : vector<32x128xf32>
    %43 = tpu.matmul %41, %42, %cst_40 {dimension_numbers = #tpu.dot_dimension_numbers<[1], [0], [0], [1], [0, 0, 1, 1], [], []>} : vector<32x128xbf16>, vector<128x128xbf16>, vector<32x128xf32> -> vector<32x128xf32>
    %44 = arith.addf %40, %43 : vector<32x128xf32>
    %c0_41 = arith.constant 0 : index
    %c0_42 = arith.constant 0 : index
    %45 = vector.load %arg13[%c0_41, %c0_42] : memref<1x128xf32, #tpu.memory_space<vmem>>, vector<1x128xf32>
    %46 = vector.broadcast %45 : vector<1x128xf32> to vector<32x128xf32>
    %47 = arith.addf %44, %46 : vector<32x128xf32>
    %cst_43 = arith.constant 0.000000e+00 : f32
    %48 = vector.broadcast %cst_43 : f32 to vector<32x128xf32>
    %49 = arith.maximumf %47, %48 : vector<32x128xf32>
    %50 = arith.truncf %49 : vector<32x128xf32> to vector<32x128xbf16>
    %c0_44 = arith.constant 0 : index
    %c0_45 = arith.constant 0 : index
    %51 = vector.load %arg14[%c0_44, %c0_45] : memref<128x128xbf16, #tpu.memory_space<vmem>>, vector<128x128xbf16>
    %cst_46 = arith.constant dense<0.000000e+00> : vector<32x128xf32>
    %52 = tpu.matmul %50, %51, %cst_46 {dimension_numbers = #tpu.dot_dimension_numbers<[1], [0], [0], [1], [0, 0, 1, 1], [], []>} : vector<32x128xbf16>, vector<128x128xbf16>, vector<32x128xf32> -> vector<32x128xf32>
    %c0_47 = arith.constant 0 : index
    %c0_48 = arith.constant 0 : index
    %53 = vector.load %arg15[%c0_47, %c0_48] : memref<1x128xf32, #tpu.memory_space<vmem>>, vector<1x128xf32>
    %54 = vector.broadcast %53 : vector<1x128xf32> to vector<32x128xf32>
    %55 = arith.addf %52, %54 : vector<32x128xf32>
    %cst_49 = arith.constant 0.000000e+00 : f32
    %56 = vector.broadcast %cst_49 : f32 to vector<32x128xf32>
    %57 = arith.maximumf %55, %56 : vector<32x128xf32>
    %58 = arith.truncf %57 : vector<32x128xf32> to vector<32x128xbf16>
    %c0_50 = arith.constant 0 : index
    %c0_51 = arith.constant 0 : index
    %59 = vector.load %arg16[%c0_50, %c0_51] : memref<128x128xbf16, #tpu.memory_space<vmem>>, vector<128x128xbf16>
    %cst_52 = arith.constant dense<0.000000e+00> : vector<32x128xf32>
    %60 = tpu.matmul %58, %59, %cst_52 {dimension_numbers = #tpu.dot_dimension_numbers<[1], [0], [0], [1], [0, 0, 1, 1], [], []>} : vector<32x128xbf16>, vector<128x128xbf16>, vector<32x128xf32> -> vector<32x128xf32>
    %c0_53 = arith.constant 0 : index
    %c0_54 = arith.constant 0 : index
    %61 = vector.load %arg17[%c0_53, %c0_54] : memref<1x128xf32, #tpu.memory_space<vmem>>, vector<1x128xf32>
    %62 = vector.broadcast %61 : vector<1x128xf32> to vector<32x128xf32>
    %63 = arith.addf %60, %62 : vector<32x128xf32>
    %c0_55 = arith.constant 0 : index
    %c0_56 = arith.constant 0 : index
    %64 = vector.load %arg18[%c0_55, %c0_56] : memref<32x128xf32, #tpu.memory_space<vmem>>, vector<32x128xf32>
    tpu.vector_store %arg18[%c0_55, %c0_56], %63 {strides = array<i32>} : memref<32x128xf32, #tpu.memory_space<vmem>>, vector<32x128xf32>,
    return
  }
  func.func @transform_0(%arg0: i32) -> (i32, i32) {
    %c0_i32 = arith.constant 0 : i32
    %c0_i32_0 = arith.constant 0 : i32
    return %arg0, %c0_i32 : i32, i32
  }
  func.func @transform_1(%arg0: i32) -> (i32, i32) {
    %c0_i32 = arith.constant 0 : i32
    %c0_i32_0 = arith.constant 0 : i32
    return %arg0, %c0_i32 : i32, i32
  }
  func.func @transform_2(%arg0: i32) -> (i32, i32) {
    %c0_i32 = arith.constant 0 : i32
    %c0_i32_0 = arith.constant 0 : i32
    return %arg0, %c0_i32 : i32, i32
  }
  func.func @transform_3(%arg0: i32) -> (i32, i32) {
    %c0_i32 = arith.constant 0 : i32
    %c0_i32_0 = arith.constant 0 : i32
    %c0_i32_1 = arith.constant 0 : i32
    return %c0_i32, %c0_i32_0 : i32, i32
  }
  func.func @transform_4(%arg0: i32) -> (i32, i32) {
    %c0_i32 = arith.constant 0 : i32
    %c0_i32_0 = arith.constant 0 : i32
    %c0_i32_1 = arith.constant 0 : i32
    return %c0_i32, %c0_i32_0 : i32, i32
  }
  func.func @transform_5(%arg0: i32) -> (i32, i32) {
    %c0_i32 = arith.constant 0 : i32
    %c0_i32_0 = arith.constant 0 : i32
    %c0_i32_1 = arith.constant 0 : i32
    return %c0_i32, %c0_i32_0 : i32, i32
  }
  func.func @transform_6(%arg0: i32) -> (i32, i32) {
    %c0_i32 = arith.constant 0 : i32
    %c0_i32_0 = arith.constant 0 : i32
    %c0_i32_1 = arith.constant 0 : i32
    return %c0_i32, %c0_i32_0 : i32, i32
  }
  func.func @transform_7(%arg0: i32) -> (i32, i32) {
    %c0_i32 = arith.constant 0 : i32
    %c0_i32_0 = arith.constant 0 : i32
    %c0_i32_1 = arith.constant 0 : i32
    return %c0_i32, %c0_i32_0 : i32, i32
  }
  func.func @transform_8(%arg0: i32) -> (i32, i32) {
    %c0_i32 = arith.constant 0 : i32
    %c0_i32_0 = arith.constant 0 : i32
    %c0_i32_1 = arith.constant 0 : i32
    return %c0_i32, %c0_i32_0 : i32, i32
  }
  func.func @transform_9(%arg0: i32) -> (i32, i32) {
    %c0_i32 = arith.constant 0 : i32
    %c0_i32_0 = arith.constant 0 : i32
    %c0_i32_1 = arith.constant 0 : i32
    return %c0_i32, %c0_i32_0 : i32, i32
  }
  func.func @transform_10(%arg0: i32) -> (i32, i32) {
    %c0_i32 = arith.constant 0 : i32
    %c0_i32_0 = arith.constant 0 : i32
    %c0_i32_1 = arith.constant 0 : i32
    return %c0_i32, %c0_i32_0 : i32, i32
  }
  func.func @transform_11(%arg0: i32) -> (i32, i32) {
    %c0_i32 = arith.constant 0 : i32
    %c0_i32_0 = arith.constant 0 : i32
    %c0_i32_1 = arith.constant 0 : i32
    return %c0_i32, %c0_i32_0 : i32, i32
  }
  func.func @transform_12(%arg0: i32) -> (i32, i32) {
    %c0_i32 = arith.constant 0 : i32
    %c0_i32_0 = arith.constant 0 : i32
    %c0_i32_1 = arith.constant 0 : i32
    return %c0_i32, %c0_i32_0 : i32, i32
  }
  func.func @transform_13(%arg0: i32) -> (i32, i32) {
    %c0_i32 = arith.constant 0 : i32
    %c0_i32_0 = arith.constant 0 : i32
    %c0_i32_1 = arith.constant 0 : i32
    return %c0_i32, %c0_i32_0 : i32, i32
  }
  func.func @transform_14(%arg0: i32) -> (i32, i32) {
    %c0_i32 = arith.constant 0 : i32
    %c0_i32_0 = arith.constant 0 : i32
    %c0_i32_1 = arith.constant 0 : i32
    return %c0_i32, %c0_i32_0 : i32, i32
  }
  func.func @transform_15(%arg0: i32) -> (i32, i32) {
    %c0_i32 = arith.constant 0 : i32
    %c0_i32_0 = arith.constant 0 : i32
    %c0_i32_1 = arith.constant 0 : i32
    return %c0_i32, %c0_i32_0 : i32, i32
  }
  func.func @transform_16(%arg0: i32) -> (i32, i32) {
    %c0_i32 = arith.constant 0 : i32
    %c0_i32_0 = arith.constant 0 : i32
    %c0_i32_1 = arith.constant 0 : i32
    return %c0_i32, %c0_i32_0 : i32, i32
  }
  func.func @transform_17(%arg0: i32) -> (i32, i32) {
    %c0_i32 = arith.constant 0 : i32
    %c0_i32_0 = arith.constant 0 : i32
    return %arg0, %c0_i32 : i32, i32
  }
  func.func @transform_18(%arg0: i32) -> (i32, i32) {
    %c0_i32 = arith.constant 0 : i32
    %c0_i32_0 = arith.constant 0 : i32
    return %arg0, %c0_i32 : i32, i32
  }
  func.func @transform_19(%arg0: i32) -> (i32, i32) {
    %c0_i32 = arith.constant 0 : i32
    %c0_i32_0 = arith.constant 0 : i32
    return %arg0, %c0_i32 : i32, i32
  }
}

</mosaic_0001>

<llo_original>
// kernel: tpu_custom_call.1
$region0: #{tpu_custom_call.1}
  #allocation0 [shape = 'u32[]', space=smem, size = 0x4, offset = 0x4, fixed_abs, tag = 'smem constant byte address 0x4 - core index']
  #allocation1 [shape = 'u32[144,128]{1,0:T(1,128)}', space=vmem, size = 0x12000, scoped, tag = 'internal scratch']
  %s0 = inlined_call_operand.hbm [shape: bf16[32,128], index: 0, kind: input, shape index: {}]
  %s1 = inlined_call_operand.hbm [shape: bf16[32,128], index: 1, kind: input, shape index: {}]
  %s2 = inlined_call_operand.hbm [shape: f32[32,128], index: 2, kind: input, shape index: {}]
  %s3 = inlined_call_operand.hbm [shape: bf16[128,128], index: 3, kind: input, shape index: {}]
  %s4 = inlined_call_operand.hbm [shape: bf16[128,128], index: 4, kind: input, shape index: {}]
  %s5 = inlined_call_operand.vmem [shape: f32[1,128], index: 5, kind: input, shape index: {}]
  %s6 = inlined_call_operand.hbm [shape: bf16[128,128], index: 6, kind: input, shape index: {}]
  %s7 = inlined_call_operand.vmem [shape: f32[1,128], index: 7, kind: input, shape index: {}]
  %s8 = inlined_call_operand.hbm [shape: bf16[128,256], index: 8, kind: input, shape index: {}]
  %s9 = inlined_call_operand.vmem [shape: f32[1,256], index: 9, kind: input, shape index: {}]
  %s10 = inlined_call_operand.hbm [shape: bf16[128,128], index: 10, kind: input, shape index: {}]
  %s11 = inlined_call_operand.hbm [shape: bf16[128,128], index: 11, kind: input, shape index: {}]
  %s12 = inlined_call_operand.vmem [shape: f32[1,128], index: 12, kind: input, shape index: {}]
  %s13 = inlined_call_operand.hbm [shape: bf16[128,128], index: 13, kind: input, shape index: {}]
  %s14 = inlined_call_operand.vmem [shape: f32[1,128], index: 14, kind: input, shape index: {}]
  %s15 = inlined_call_operand.hbm [shape: bf16[128,128], index: 15, kind: input, shape index: {}]
  %s16 = inlined_call_operand.vmem [shape: f32[1,128], index: 16, kind: input, shape index: {}]
  %s17 = inlined_call_operand.hbm [shape: f32[32,128], index: 17, kind: output, shape index: {0}]
  %s18 = inlined_call_operand.hbm [shape: f32[32,128], index: 18, kind: output, shape index: {1}]
  %s19 = inlined_call_operand.hbm [shape: f32[32,128], index: 19, kind: output, shape index: {2}]
  %20 = xla_tuple %s17, %s18, %s19
  %s21 = sld [smem:[#allocation0]]
  $region138: #{tpu_custom_call.1} parent=0
    _
  %s23 = ssub.s32 1, %s21
  %s24 = scalar_select 0, %s23, %s21
  $region1: #{tpu_custom_call.1} parent=0
    #allocation2 [shape = 'u8[8192]{0}', space=vmem, size = 0x2000, scoped, tag = 'input window, operand 0, single buffered']
    #allocation3 [shape = 's32[1]{0}', space=sflag, size = 0x4, scoped, tag = 'scoped memory for tpu_custom_call.1']
    #allocation4 [shape = 's32[1]{0}', space=sflag, size = 0x4, scoped, tag = 'scoped memory for tpu_custom_call.1']
    #allocation5 [shape = 'u8[8192]{0}', space=vmem, size = 0x2000, scoped, tag = 'input window, operand 1, single buffered']
    #allocation6 [shape = 's32[1]{0}', space=sflag, size = 0x4, scoped, tag = 'scoped memory for tpu_custom_call.1']
    #allocation7 [shape = 'u8[16384]{0}', space=vmem, size = 0x4000, scoped, tag = 'input window, operand 2, single buffered']
    #allocation8 [shape = 'u8[32768]{0}', space=vmem, size = 0x8000, scoped, tag = 'input window, operand 3, single buffered']
    #allocation9 [shape = 's32[1]{0}', space=sflag, size = 0x4, scoped, tag = 'scoped memory for tpu_custom_call.1']
    #allocation10 [shape = 'u8[32768]{0}', space=vmem, size = 0x8000, scoped, tag = 'input window, operand 4, single buffered']
    #allocation11 [shape = 'u8[32768]{0}', space=vmem, size = 0x8000, scoped, tag = 'input window, operand 6, single buffered']
    #allocation12 [shape = 's32[1]{0}', space=sflag, size = 0x4, scoped, tag = 'scoped memory for tpu_custom_call.1']
    #allocation13 [shape = 'u8[65536]{0}', space=vmem, size = 0x10000, scoped, tag = 'input window, operand 8, single buffered']
    #allocation14 [shape = 'u8[32768]{0}', space=vmem, size = 0x8000, scoped, tag = 'input window, operand 10, single buffered']
    #allocation15 [shape = 's32[1]{0}', space=sflag, size = 0x4, scoped, tag = 'scoped memory for tpu_custom_call.1']
    #allocation16 [shape = 'u8[32768]{0}', space=vmem, size = 0x8000, scoped, tag = 'input window, operand 11, single buffered']
    #allocation17 [shape = 'u8[32768]{0}', space=vmem, size = 0x8000, scoped, tag = 'input window, operand 13, single buffered']
    #allocation18 [shape = 's32[1]{0}', space=sflag, size = 0x4, scoped, tag = 'scoped memory for tpu_custom_call.1']
    #allocation19 [shape = 'u8[32768]{0}', space=vmem, size = 0x8000, scoped, tag = 'input window, operand 15, single buffered']
    #allocation20 [shape = 'u8[16384]{0}', space=vmem, size = 0x4000, scoped, tag = 'output window, operand 0, single buffered']
    #allocation21 [shape = 'u8[16384]{0}', space=vmem, size = 0x4000, scoped, tag = 'output window, operand 1, single buffered']
    #allocation22 [shape = 's32[1]{0}', space=sflag, size = 0x4, scoped, tag = 'scoped memory for tpu_custom_call.1']
    #allocation23 [shape = 'u8[16384]{0}', space=vmem, size = 0x4000, scoped, tag = 'output window, operand 2, single buffered']
    %25 = vsyncpa [#allocation3], 0
    %26 = vsyncpa [#allocation6], 0
    %27 = vsyncpa [#allocation9], 0
    %28 = vsyncpa [#allocation12], 0
    %29 = vsyncpa [#allocation15], 0
    %30 = vsyncpa [#allocation18], 0
    %31 = vsyncpa [#allocation4], 0
    %32 = vsyncpa [#allocation22], 0
    // Predicated region
    $region2: #{tpu_custom_call.1} parent=1 // pred_check
      _
    $region3: #{tpu_custom_call.1} parent=1 // pred_check_branch
      %34 = sbr.rel (0) target = $region5
    $region4: #{tpu_custom_call.1} parent=1 // pred_region
      %s36 = ssub.s32 256, 256
      %37 = vsyncadd [#allocation3], %s36
      %s38 = sshll.u32 [#allocation2], 4
      %s39 = int_to_ptr.vmem [resolvable:$true] %s38
      %44 = dma.hbm_to_vmem [thread:$0]  %s0, 256, %s39, [#allocation3], 64, 64, 4
    $region5: #{tpu_custom_call.1} parent=1 // pred_fallthru
      _
    // Predicated region
    $region6: #{tpu_custom_call.1} parent=1 // pred_check
      _
    $region7: #{tpu_custom_call.1} parent=1 // pred_check_branch
      %46 = sbr.rel (0) target = $region9
    $region8: #{tpu_custom_call.1} parent=1 // pred_region
      %s48 = ssub.s32 256, 256
      %49 = vsyncadd [#allocation6], %s48
      %s50 = sshll.u32 [#allocation5], 4
      %s51 = int_to_ptr.vmem [resolvable:$true] %s50
      %56 = dma.hbm_to_vmem [thread:$0]  %s1, 256, %s51, [#allocation6], 64, 64, 4
    $region9: #{tpu_custom_call.1} parent=1 // pred_fallthru
      _
    // Predicated region
    $region10: #{tpu_custom_call.1} parent=1 // pred_check
      _
    $region11: #{tpu_custom_call.1} parent=1 // pred_check_branch
      %58 = sbr.rel (0) target = $region13
    $region12: #{tpu_custom_call.1} parent=1 // pred_region
      %s60 = ssub.s32 512, 512
      %61 = vsyncadd [#allocation6], %s60
      %s62 = sshll.u32 [#allocation7], 4
      %s63 = int_to_ptr.vmem [resolvable:$true] %s62
      %68 = dma.hbm_to_vmem [thread:$0]  %s2, 512, %s63, [#allocation6], 128, 128, 8
    $region13: #{tpu_custom_call.1} parent=1 // pred_fallthru
      _
    // Predicated region
    $region14: #{tpu_custom_call.1} parent=1 // pred_check
      _
    $region15: #{tpu_custom_call.1} parent=1 // pred_check_branch
      %70 = sbr.rel (0) target = $region17
    $region16: #{tpu_custom_call.1} parent=1 // pred_region
      %s72 = ssub.s32 1024, 1024
      %73 = vsyncadd [#allocation9], %s72
      %s74 = sshll.u32 [#allocation8], 4
      %s75 = int_to_ptr.vmem [resolvable:$true] %s74
      %80 = dma.hbm_to_vmem [thread:$0]  %s3, 1024, %s75, [#allocation9], 64, 64, 4
    $region17: #{tpu_custom_call.1} parent=1 // pred_fallthru
      _
    // Predicated region
    $region18: #{tpu_custom_call.1} parent=1 // pred_check
      _
    $region19: #{tpu_custom_call.1} parent=1 // pred_check_branch
      %82 = sbr.rel (0) target = $region21
    $region20: #{tpu_custom_call.1} parent=1 // pred_region
      %s84 = ssub.s32 1024, 1024
      %85 = vsyncadd [#allocation9], %s84
      %s86 = sshll.u32 [#allocation10], 4
      %s87 = int_to_ptr.vmem [resolvable:$true] %s86
      %92 = dma.hbm_to_vmem [thread:$0]  %s4, 1024, %s87, [#allocation9], 64, 64, 4
    $region21: #{tpu_custom_call.1} parent=1 // pred_fallthru
      _
    // Predicated region
    $region22: #{tpu_custom_call.1} parent=1 // pred_check
      _
    $region23: #{tpu_custom_call.1} parent=1 // pred_check_branch
      %94 = sbr.rel (0) target = $region25
    $region24: #{tpu_custom_call.1} parent=1 // pred_region
      _
    $region25: #{tpu_custom_call.1} parent=1 // pred_fallthru
      _
    // Predicated region
    $region26: #{tpu_custom_call.1} parent=1 // pred_check
      _
    $region27: #{tpu_custom_call.1} parent=1 // pred_check_branch
      %96 = sbr.rel (0) target = $region29
    $region28: #{tpu_custom_call.1} parent=1 // pred_region
      %s98 = ssub.s32 1024, 1024
      %99 = vsyncadd [#allocation12], %s98
      %s100 = sshll.u32 [#allocation11], 4
      %s101 = int_to_ptr.vmem [resolvable:$true] %s100
      %106 = dma.hbm_to_vmem [thread:$0]  %s6, 1024, %s101, [#allocation12], 64, 64, 4
    $region29: #{tpu_custom_call.1} parent=1 // pred_fallthru
      _
    // Predicated region
    $region30: #{tpu_custom_call.1} parent=1 // pred_check
      _
    $region31: #{tpu_custom_call.1} parent=1 // pred_check_branch
      %108 = sbr.rel (0) target = $region33
    $region32: #{tpu_custom_call.1} parent=1 // pred_region
      _
    $region33: #{tpu_custom_call.1} parent=1 // pred_fallthru
      _
    // Predicated region
    $region34: #{tpu_custom_call.1} parent=1 // pred_check
      _
    $region35: #{tpu_custom_call.1} parent=1 // pred_check_branch
      %110 = sbr.rel (0) target = $region37
    $region36: #{tpu_custom_call.1} parent=1 // pred_region
      %s112 = ssub.s32 2048, 2048
      %113 = vsyncadd [#allocation12], %s112
      %s114 = sshll.u32 [#allocation13], 4
      %s115 = int_to_ptr.vmem [resolvable:$true] %s114
      %120 = dma.hbm_to_vmem [thread:$0]  %s8, 2048, %s115, [#allocation12], 128, 128, 8
    $region37: #{tpu_custom_call.1} parent=1 // pred_fallthru
      _
    // Predicated region
    $region38: #{tpu_custom_call.1} parent=1 // pred_check
      _
    $region39: #{tpu_custom_call.1} parent=1 // pred_check_branch
      %122 = sbr.rel (0) target = $region41
    $region40: #{tpu_custom_call.1} parent=1 // pred_region
      _
    $region41: #{tpu_custom_call.1} parent=1 // pred_fallthru
      _
    // Predicated region
    $region42: #{tpu_custom_call.1} parent=1 // pred_check
      _
    $region43: #{tpu_custom_call.1} parent=1 // pred_check_branch
      %124 = sbr.rel (0) target = $region45
    $region44: #{tpu_custom_call.1} parent=1 // pred_region
      %s126 = ssub.s32 1024, 1024
      %127 = vsyncadd [#allocation15], %s126
      %s128 = sshll.u32 [#allocation14], 4
      %s129 = int_to_ptr.vmem [resolvable:$true] %s128
      %134 = dma.hbm_to_vmem [thread:$0]  %s10, 1024, %s129, [#allocation15], 64, 64, 4
    $region45: #{tpu_custom_call.1} parent=1 // pred_fallthru
      _
    // Predicated region
    $region46: #{tpu_custom_call.1} parent=1 // pred_check
      _
    $region47: #{tpu_custom_call.1} parent=1 // pred_check_branch
      %136 = sbr.rel (0) target = $region49
    $region48: #{tpu_custom_call.1} parent=1 // pred_region
      %s138 = ssub.s32 1024, 1024
      %139 = vsyncadd [#allocation15], %s138
      %s140 = sshll.u32 [#allocation16], 4
      %s141 = int_to_ptr.vmem [resolvable:$true] %s140
      %146 = dma.hbm_to_vmem [thread:$0]  %s11, 1024, %s141, [#allocation15], 64, 64, 4
    $region49: #{tpu_custom_call.1} parent=1 // pred_fallthru
      _
    // Predicated region
    $region50: #{tpu_custom_call.1} parent=1 // pred_check
      _
    $region51: #{tpu_custom_call.1} parent=1 // pred_check_branch
      %148 = sbr.rel (0) target = $region53
    $region52: #{tpu_custom_call.1} parent=1 // pred_region
      _
    $region53: #{tpu_custom_call.1} parent=1 // pred_fallthru
      _
    // Predicated region
    $region54: #{tpu_custom_call.1} parent=1 // pred_check
      _
    $region55: #{tpu_custom_call.1} parent=1 // pred_check_branch
      %150 = sbr.rel (0) target = $region57
    $region56: #{tpu_custom_call.1} parent=1 // pred_region
      %s152 = ssub.s32 1024, 1024
      %153 = vsyncadd [#allocation18], %s152
      %s154 = sshll.u32 [#allocation17], 4
      %s155 = int_to_ptr.vmem [resolvable:$true] %s154
      %160 = dma.hbm_to_vmem [thread:$0]  %s13, 1024, %s155, [#allocation18], 64, 64, 4
    $region57: #{tpu_custom_call.1} parent=1 // pred_fallthru
      _
    // Predicated region
    $region58: #{tpu_custom_call.1} parent=1 // pred_check
      _
    $region59: #{tpu_custom_call.1} parent=1 // pred_check_branch
      %162 = sbr.rel (0) target = $region61
    $region60: #{tpu_custom_call.1} parent=1 // pred_region
      _
    $region61: #{tpu_custom_call.1} parent=1 // pred_fallthru
      _
    // Predicated region
    $region62: #{tpu_custom_call.1} parent=1 // pred_check
      _
    $region63: #{tpu_custom_call.1} parent=1 // pred_check_branch
      %164 = sbr.rel (0) target = $region65
    $region64: #{tpu_custom_call.1} parent=1 // pred_region
      %s166 = ssub.s32 1024, 1024
      %167 = vsyncadd [#allocation18], %s166
      %s168 = sshll.u32 [#allocation19], 4
      %s169 = int_to_ptr.vmem [resolvable:$true] %s168
      %174 = dma.hbm_to_vmem [thread:$0]  %s15, 1024, %s169, [#allocation18], 64, 64, 4
    $region65: #{tpu_custom_call.1} parent=1 // pred_fallthru
      _
    // Predicated region
    $region66: #{tpu_custom_call.1} parent=1 // pred_check
      _
    $region67: #{tpu_custom_call.1} parent=1 // pred_check_branch
      %176 = sbr.rel (0) target = $region69
    $region68: #{tpu_custom_call.1} parent=1 // pred_region
      _
    $region69: #{tpu_custom_call.1} parent=1 // pred_fallthru
      _
    // Predicated region
    $region70: #{tpu_custom_call.1} parent=1 // pred_check
      _
    $region71: #{tpu_custom_call.1} parent=1 // pred_check_branch
      %178 = sbr.rel (0) target = $region73
    $region72: #{tpu_custom_call.1} parent=1 // pred_region
      %179 = dma.done [#allocation3], 256
    $region73: #{tpu_custom_call.1} parent=1 // pred_fallthru
      _
    // Predicated region
    $region74: #{tpu_custom_call.1} parent=1 // pred_check
      _
    $region75: #{tpu_custom_call.1} parent=1 // pred_check_branch
      %181 = sbr.rel (0) target = $region77
    $region76: #{tpu_custom_call.1} parent=1 // pred_region
      %182 = dma.done [#allocation6], 256
    $region77: #{tpu_custom_call.1} parent=1 // pred_fallthru
      _
    // Predicated region
    $region78: #{tpu_custom_call.1} parent=1 // pred_check
      _
    $region79: #{tpu_custom_call.1} parent=1 // pred_check_branch
      %184 = sbr.rel (0) target = $region81
    $region80: #{tpu_custom_call.1} parent=1 // pred_region
      %185 = dma.done [#allocation6], 512
    $region81: #{tpu_custom_call.1} parent=1 // pred_fallthru
      _
    // Predicated region
    $region82: #{tpu_custom_call.1} parent=1 // pred_check
      _
    $region83: #{tpu_custom_call.1} parent=1 // pred_check_branch
      %187 = sbr.rel (0) target = $region85
    $region84: #{tpu_custom_call.1} parent=1 // pred_region
      %188 = dma.done [#allocation9], 1024
    $region85: #{tpu_custom_call.1} parent=1 // pred_fallthru
      _
    // Predicated region
    $region86: #{tpu_custom_call.1} parent=1 // pred_check
      _
    $region87: #{tpu_custom_call.1} parent=1 // pred_check_branch
      %190 = sbr.rel (0) target = $region89
    $region88: #{tpu_custom_call.1} parent=1 // pred_region
      %191 = dma.done [#allocation9], 1024
    $region89: #{tpu_custom_call.1} parent=1 // pred_fallthru
      _
    // Predicated region
    $region90: #{tpu_custom_call.1} parent=1 // pred_check
      _
    $region91: #{tpu_custom_call.1} parent=1 // pred_check_branch
      %193 = sbr.rel (0) target = $region93
    $region92: #{tpu_custom_call.1} parent=1 // pred_region
      %194 = dma.done [#allocation12], 1024
    $region93: #{tpu_custom_call.1} parent=1 // pred_fallthru
      _
    // Predicated region
    $region94: #{tpu_custom_call.1} parent=1 // pred_check
      _
    $region95: #{tpu_custom_call.1} parent=1 // pred_check_branch
      %196 = sbr.rel (0) target = $region97
    $region96: #{tpu_custom_call.1} parent=1 // pred_region
      %197 = dma.done [#allocation12], 2048
    $region97: #{tpu_custom_call.1} parent=1 // pred_fallthru
      _
    // Predicated region
    $region98: #{tpu_custom_call.1} parent=1 // pred_check
      _
    $region99: #{tpu_custom_call.1} parent=1 // pred_check_branch
      %199 = sbr.rel (0) target = $region101
    $region100: #{tpu_custom_call.1} parent=1 // pred_region
      %200 = dma.done [#allocation15], 1024
    $region101: #{tpu_custom_call.1} parent=1 // pred_fallthru
      _
    // Predicated region
    $region102: #{tpu_custom_call.1} parent=1 // pred_check
      _
    $region103: #{tpu_custom_call.1} parent=1 // pred_check_branch
      %202 = sbr.rel (0) target = $region105
    $region104: #{tpu_custom_call.1} parent=1 // pred_region
      %203 = dma.done [#allocation15], 1024
    $region105: #{tpu_custom_call.1} parent=1 // pred_fallthru
      _
    // Predicated region
    $region106: #{tpu_custom_call.1} parent=1 // pred_check
      _
    $region107: #{tpu_custom_call.1} parent=1 // pred_check_branch
      %205 = sbr.rel (0) target = $region109
    $region108: #{tpu_custom_call.1} parent=1 // pred_region
      %206 = dma.done [#allocation18], 1024
    $region109: #{tpu_custom_call.1} parent=1 // pred_fallthru
      _
    // Predicated region
    $region110: #{tpu_custom_call.1} parent=1 // pred_check
      _
    $region111: #{tpu_custom_call.1} parent=1 // pred_check_branch
      %208 = sbr.rel (0) target = $region113
    $region112: #{tpu_custom_call.1} parent=1 // pred_region
      %209 = dma.done [#allocation18], 1024
    $region113: #{tpu_custom_call.1} parent=1 // pred_fallthru
      _
    %v211 = vld [vmem:[#allocation2] sm:$0xf]
    %v212 = vld [vmem:[#allocation2 + $0x4] sm:$0xf]
    %v213 = vld [vmem:[#allocation2 + $0x8] sm:$0xf]
    %v214 = vld [vmem:[#allocation2 + $0xc] sm:$0xf]
    %v215 = vld [vmem:[#allocation8] sm:$0xf]
    %v216 = vld [vmem:[#allocation8 + $0x4] sm:$0xf]
    %v217 = vld [vmem:[#allocation8 + $0x8] sm:$0xf]
    %v218 = vld [vmem:[#allocation8 + $0xc] sm:$0xf]
    %v219 = vld [vmem:[#allocation8 + $0x10] sm:$0xf]
    %v220 = vld [vmem:[#allocation8 + $0x14] sm:$0xf]
    %v221 = vld [vmem:[#allocation8 + $0x18] sm:$0xf]
    %v222 = vld [vmem:[#allocation8 + $0x1c] sm:$0xf]
    %v223 = vld [vmem:[#allocation8 + $0x20] sm:$0xf]
    %v224 = vld [vmem:[#allocation8 + $0x24] sm:$0xf]
    %v225 = vld [vmem:[#allocation8 + $0x28] sm:$0xf]
    %v226 = vld [vmem:[#allocation8 + $0x2c] sm:$0xf]
    %v227 = vld [vmem:[#allocation8 + $0x30] sm:$0xf]
    %v228 = vld [vmem:[#allocation8 + $0x34] sm:$0xf]
    %v229 = vld [vmem:[#allocation8 + $0x38] sm:$0xf]
    %v230 = vld [vmem:[#allocation8 + $0x3c] sm:$0xf]
    %v231 = vld [vmem:[#allocation5] sm:$0xf]
    %v232 = vld [vmem:[#allocation5 + $0x4] sm:$0xf]
    %v233 = vld [vmem:[#allocation5 + $0x8] sm:$0xf]
    %v234 = vld [vmem:[#allocation5 + $0xc] sm:$0xf]
    %v235 = vld [vmem:[#allocation10] sm:$0xf]
    %v236 = vld [vmem:[#allocation10 + $0x4] sm:$0xf]
    %v237 = vld [vmem:[#allocation10 + $0x8] sm:$0xf]
    %v238 = vld [vmem:[#allocation10 + $0xc] sm:$0xf]
    %v239 = vld [vmem:[#allocation10 + $0x10] sm:$0xf]
    %v240 = vld [vmem:[#allocation10 + $0x14] sm:$0xf]
    %v241 = vld [vmem:[#allocation10 + $0x18] sm:$0xf]
    %v242 = vld [vmem:[#allocation10 + $0x1c] sm:$0xf]
    %v243 = vld [vmem:[#allocation10 + $0x20] sm:$0xf]
    %v244 = vld [vmem:[#allocation10 + $0x24] sm:$0xf]
    %v245 = vld [vmem:[#allocation10 + $0x28] sm:$0xf]
    %v246 = vld [vmem:[#allocation10 + $0x2c] sm:$0xf]
    %v247 = vld [vmem:[#allocation10 + $0x30] sm:$0xf]
    %v248 = vld [vmem:[#allocation10 + $0x34] sm:$0xf]
    %v249 = vld [vmem:[#allocation10 + $0x38] sm:$0xf]
    %v250 = vld [vmem:[#allocation10 + $0x3c] sm:$0xf]
    %v255 = vunpack.c.l.b16 %v231
    %v256 = vunpack.c.l.b16 %v232
    %v257 = vunpack.c.l.b16 %v233
    %v258 = vunpack.c.l.b16 %v234
    %v259 = vpack.c.b16 %v256, %v255
    %v260 = vpack.c.b16 %v258, %v257
    %v279 = vunpack.c.l.b16 %v235
    %v280 = vunpack.c.l.b16 %v236
    %v281 = vunpack.c.l.b16 %v237
    %v282 = vunpack.c.l.b16 %v238
    %v283 = vunpack.c.l.b16 %v239
    %v284 = vunpack.c.l.b16 %v240
    %v285 = vunpack.c.l.b16 %v241
    %v286 = vunpack.c.l.b16 %v242
    %v287 = vunpack.c.l.b16 %v243
    %v288 = vunpack.c.l.b16 %v244
    %v289 = vunpack.c.l.b16 %v245
    %v290 = vunpack.c.l.b16 %v246
    %v291 = vunpack.c.l.b16 %v247
    %v292 = vunpack.c.l.b16 %v248
    %v293 = vunpack.c.l.b16 %v249
    %v294 = vunpack.c.l.b16 %v250
    %v295 = vpack.c.b16 %v280, %v279
    %v296 = vpack.c.b16 %v282, %v281
    %v297 = vpack.c.b16 %v284, %v283
    %v298 = vpack.c.b16 %v286, %v285
    %v299 = vpack.c.b16 %v288, %v287
    %v300 = vpack.c.b16 %v290, %v289
    %v301 = vpack.c.b16 %v292, %v291
    %v302 = vpack.c.b16 %v294, %v293
    %311 = vmatprep.subr.bf16.mxu0 0
    %312 = vmatpush1.bf16.msra.mxu0 %v295
    %313 = vmatprep.subr.bf16.mxu0 0
    %314 = vmatpush1.bf16.msra.mxu0 %v296
    %315 = vmatprep.subr.bf16.mxu0 0
    %316 = vmatpush1.bf16.msra.mxu0 %v297
    %317 = vmatprep.subr.bf16.mxu0 0
    %318 = vmatpush1.bf16.msra.mxu0 %v298
    %319 = vmatprep.subr.bf16.mxu0 0
    %320 = vmatpush1.bf16.msra.mxu0 %v299
    %321 = vmatprep.subr.bf16.mxu0 0
    %322 = vmatpush1.bf16.msra.mxu0 %v300
    %323 = vmatprep.subr.bf16.mxu0 0
    %324 = vmatpush1.bf16.msra.mxu0 %v301
    %325 = vmatprep.subr.bf16.mxu0 0
    %326 = vmatpush1.bf16.msra.mxu0 %v302
    %327 = vmatprep.subr.bf16.mxu0 0
    %328 = vmatpush1.bf16.msra.mxu0 0
    %329 = vmatprep.subr.bf16.mxu0 0
    %330 = vmatpush1.bf16.msra.mxu0 0
    %331 = vmatprep.subr.bf16.mxu0 0
    %332 = vmatpush1.bf16.msra.mxu0 0
    %333 = vmatprep.subr.bf16.mxu0 0
    %334 = vmatpush1.bf16.msra.mxu0 0
    %335 = vmatprep.subr.bf16.mxu0 0
    %336 = vmatpush1.bf16.msra.mxu0 0
    %337 = vmatprep.subr.bf16.mxu0 0
    %338 = vmatpush1.bf16.msra.mxu0 0
    %339 = vmatprep.subr.bf16.mxu0 0
    %340 = vmatpush1.bf16.msra.mxu0 0
    %341 = vmatprep.subr.bf16.mxu0 0
    %342 = vmatpush1.bf16.msra.mxu0 0
    %343 = vmatprep.mubr.bf16.mxu0 0
    %344 = vmatmul.mubr.bf16.gmra.mrb[0].mxu0 %v259
    %v345 = vpop.f32.mrb[0].mxu0
    %v346 = vadd.f32 0.0, %v345
    %v347 = vpop.f32.mrb[0].mxu0
    %v348 = vpop.f32.mrb[0].mxu0
    %v349 = vadd.f32 0.0, %v348
    %v350 = vpop.f32.mrb[0].mxu0
    %351 = vmatprep.mubr.bf16.mxu0 0
    %352 = vmatmul.mubr.bf16.gmra.mrb[0].mxu0 %v260
    %v353 = vpop.f32.mrb[0].mxu0
    %v354 = vadd.f32 0.0, %v353
    %v355 = vpop.f32.mrb[0].mxu0
    %v356 = vpop.f32.mrb[0].mxu0
    %v357 = vadd.f32 0.0, %v356
    %v358 = vpop.f32.mrb[0].mxu0
    %359 = vdwg.mxu0
    %v364 = vunpack.c.l.b16 %v211
    %v365 = vunpack.c.l.b16 %v212
    %v366 = vunpack.c.l.b16 %v213
    %v367 = vunpack.c.l.b16 %v214
    %v368 = vpack.c.b16 %v365, %v364
    %v369 = vpack.c.b16 %v367, %v366
    %v388 = vunpack.c.l.b16 %v215
    %v389 = vunpack.c.l.b16 %v216
    %v390 = vunpack.c.l.b16 %v217
    %v391 = vunpack.c.l.b16 %v218
    %v392 = vunpack.c.l.b16 %v219
    %v393 = vunpack.c.l.b16 %v220
    %v394 = vunpack.c.l.b16 %v221
    %v395 = vunpack.c.l.b16 %v222
    %v396 = vunpack.c.l.b16 %v223
    %v397 = vunpack.c.l.b16 %v224
    %v398 = vunpack.c.l.b16 %v225
    %v399 = vunpack.c.l.b16 %v226
    %v400 = vunpack.c.l.b16 %v227
    %v401 = vunpack.c.l.b16 %v228
    %v402 = vunpack.c.l.b16 %v229
    %v403 = vunpack.c.l.b16 %v230
    %v404 = vpack.c.b16 %v389, %v388
    %v405 = vpack.c.b16 %v391, %v390
    %v406 = vpack.c.b16 %v393, %v392
    %v407 = vpack.c.b16 %v395, %v394
    %v408 = vpack.c.b16 %v397, %v396
    %v409 = vpack.c.b16 %v399, %v398
    %v410 = vpack.c.b16 %v401, %v400
    %v411 = vpack.c.b16 %v403, %v402
    %420 = vmatprep.subr.bf16.mxu0 0
    %421 = vmatpush1.bf16.msra.mxu0 %v404
    %422 = vmatprep.subr.bf16.mxu0 0
    %423 = vmatpush1.bf16.msra.mxu0 %v405
    %424 = vmatprep.subr.bf16.mxu0 0
    %425 = vmatpush1.bf16.msra.mxu0 %v406
    %426 = vmatprep.subr.bf16.mxu0 0
    %427 = vmatpush1.bf16.msra.mxu0 %v407
    %428 = vmatprep.subr.bf16.mxu0 0
    %429 = vmatpush1.bf16.msra.mxu0 %v408
    %430 = vmatprep.subr.bf16.mxu0 0
    %431 = vmatpush1.bf16.msra.mxu0 %v409
    %432 = vmatprep.subr.bf16.mxu0 0
    %433 = vmatpush1.bf16.msra.mxu0 %v410
    %434 = vmatprep.subr.bf16.mxu0 0
    %435 = vmatpush1.bf16.msra.mxu0 %v411
    %436 = vmatprep.subr.bf16.mxu0 0
    %437 = vmatpush1.bf16.msra.mxu0 0
    %438 = vmatprep.subr.bf16.mxu0 0
    %439 = vmatpush1.bf16.msra.mxu0 0
    %440 = vmatprep.subr.bf16.mxu0 0
    %441 = vmatpush1.bf16.msra.mxu0 0
    %442 = vmatprep.subr.bf16.mxu0 0
    %443 = vmatpush1.bf16.msra.mxu0 0
    %444 = vmatprep.subr.bf16.mxu0 0
    %445 = vmatpush1.bf16.msra.mxu0 0
    %446 = vmatprep.subr.bf16.mxu0 0
    %447 = vmatpush1.bf16.msra.mxu0 0
    %448 = vmatprep.subr.bf16.mxu0 0
    %449 = vmatpush1.bf16.msra.mxu0 0
    %450 = vmatprep.subr.bf16.mxu0 0
    %451 = vmatpush1.bf16.msra.mxu0 0
    %452 = vmatprep.mubr.bf16.mxu0 0
    %453 = vmatmul.mubr.bf16.gmra.mrb[0].mxu0 %v368
    %v454 = vpop.f32.mrb[0].mxu0
    %v455 = vadd.f32 %v346, %v454
    %v456 = vpop.f32.mrb[0].mxu0
    %v457 = vpop.f32.mrb[0].mxu0
    %v458 = vadd.f32 %v349, %v457
    %v459 = vpop.f32.mrb[0].mxu0
    %460 = vmatprep.mubr.bf16.mxu0 0
    %461 = vmatmul.mubr.bf16.gmra.mrb[0].mxu0 %v369
    %v462 = vpop.f32.mrb[0].mxu0
    %v463 = vadd.f32 %v354, %v462
    %v464 = vpop.f32.mrb[0].mxu0
    %v465 = vpop.f32.mrb[0].mxu0
    %v466 = vadd.f32 %v357, %v465
    %v467 = vpop.f32.mrb[0].mxu0
    %468 = vdwg.mxu0
    %v469 = vld [vmem:[%s5] sm:$0x1]
    %v471 = vlaneseq
    %v472 = vshrl.u32 %v471, 7
    %v473 = vsub.s32 0, %v472
    %v474 = vrot.slane %v469, %v473
    %v476 = vadd.f32 %v455, %v474
    %v477 = vadd.f32 %v458, %v474
    %v478 = vadd.f32 %v463, %v474
    %v479 = vadd.f32 %v466, %v474
    %v480 = vmax.f32 %v476, 0.0
    %v481 = vmax.f32 %v477, 0.0
    %v482 = vmax.f32 %v478, 0.0
    %v483 = vmax.f32 %v479, 0.0
    %v484 = vpack.c.bf16 %v481, %v480
    %v485 = vpack.c.bf16 %v483, %v482
    %v486 = vld [vmem:[#allocation11] sm:$0xf]
    %v487 = vld [vmem:[#allocation11 + $0x4] sm:$0xf]
    %v488 = vld [vmem:[#allocation11 + $0x8] sm:$0xf]
    %v489 = vld [vmem:[#allocation11 + $0xc] sm:$0xf]
    %v490 = vld [vmem:[#allocation11 + $0x10] sm:$0xf]
    %v491 = vld [vmem:[#allocation11 + $0x14] sm:$0xf]
    %v492 = vld [vmem:[#allocation11 + $0x18] sm:$0xf]
    %v493 = vld [vmem:[#allocation11 + $0x1c] sm:$0xf]
    %v494 = vld [vmem:[#allocation11 + $0x20] sm:$0xf]
    %v495 = vld [vmem:[#allocation11 + $0x24] sm:$0xf]
    %v496 = vld [vmem:[#allocation11 + $0x28] sm:$0xf]
    %v497 = vld [vmem:[#allocation11 + $0x2c] sm:$0xf]
    %v498 = vld [vmem:[#allocation11 + $0x30] sm:$0xf]
    %v499 = vld [vmem:[#allocation11 + $0x34] sm:$0xf]
    %v500 = vld [vmem:[#allocation11 + $0x38] sm:$0xf]
    %v501 = vld [vmem:[#allocation11 + $0x3c] sm:$0xf]
    %v502 = vld [vmem:[%s7] sm:$0x1]
    %v504 = vlaneseq
    %v505 = vshrl.u32 %v504, 7
    %v506 = vsub.s32 0, %v505
    %v507 = vrot.slane %v502, %v506
    %v525 = vunpack.c.l.b16 %v486
    %v526 = vunpack.c.l.b16 %v487
    %v527 = vunpack.c.l.b16 %v488
    %v528 = vunpack.c.l.b16 %v489
    %v529 = vunpack.c.l.b16 %v490
    %v530 = vunpack.c.l.b16 %v491
    %v531 = vunpack.c.l.b16 %v492
    %v532 = vunpack.c.l.b16 %v493
    %v533 = vunpack.c.l.b16 %v494
    %v534 = vunpack.c.l.b16 %v495
    %v535 = vunpack.c.l.b16 %v496
    %v536 = vunpack.c.l.b16 %v497
    %v537 = vunpack.c.l.b16 %v498
    %v538 = vunpack.c.l.b16 %v499
    %v539 = vunpack.c.l.b16 %v500
    %v540 = vunpack.c.l.b16 %v501
    %v541 = vpack.c.b16 %v526, %v525
    %v542 = vpack.c.b16 %v528, %v527
    %v543 = vpack.c.b16 %v530, %v529
    %v544 = vpack.c.b16 %v532, %v531
    %v545 = vpack.c.b16 %v534, %v533
    %v546 = vpack.c.b16 %v536, %v535
    %v547 = vpack.c.b16 %v538, %v537
    %v548 = vpack.c.b16 %v540, %v539
    %557 = vmatprep.subr.bf16.mxu0 0
    %558 = vmatpush1.bf16.msra.mxu0 %v541
    %559 = vmatprep.subr.bf16.mxu0 0
    %560 = vmatpush1.bf16.msra.mxu0 %v542
    %561 = vmatprep.subr.bf16.mxu0 0
    %562 = vmatpush1.bf16.msra.mxu0 %v543
    %563 = vmatprep.subr.bf16.mxu0 0
    %564 = vmatpush1.bf16.msra.mxu0 %v544
    %565 = vmatprep.subr.bf16.mxu0 0
    %566 = vmatpush1.bf16.msra.mxu0 %v545
    %567 = vmatprep.subr.bf16.mxu0 0
    %568 = vmatpush1.bf16.msra.mxu0 %v546
    %569 = vmatprep.subr.bf16.mxu0 0
    %570 = vmatpush1.bf16.msra.mxu0 %v547
    %571 = vmatprep.subr.bf16.mxu0 0
    %572 = vmatpush1.bf16.msra.mxu0 %v548
    %573 = vmatprep.subr.bf16.mxu0 0
    %574 = vmatpush1.bf16.msra.mxu0 0
    %575 = vmatprep.subr.bf16.mxu0 0
    %576 = vmatpush1.bf16.msra.mxu0 0
    %577 = vmatprep.subr.bf16.mxu0 0
    %578 = vmatpush1.bf16.msra.mxu0 0
    %579 = vmatprep.subr.bf16.mxu0 0
    %580 = vmatpush1.bf16.msra.mxu0 0
    %581 = vmatprep.subr.bf16.mxu0 0
    %582 = vmatpush1.bf16.msra.mxu0 0
    %583 = vmatprep.subr.bf16.mxu0 0
    %584 = vmatpush1.bf16.msra.mxu0 0
    %585 = vmatprep.subr.bf16.mxu0 0
    %586 = vmatpush1.bf16.msra.mxu0 0
    %587 = vmatprep.subr.bf16.mxu0 0
    %588 = vmatpush1.bf16.msra.mxu0 0
    %589 = vmatprep.mubr.bf16.mxu0 0
    %590 = vmatmul.mubr.bf16.gmra.mrb[0].mxu0 %v484
    %v591 = vpop.f32.mrb[0].mxu0
    %v592 = vadd.f32 %v507, %v591
    %v593 = vpop.f32.mrb[0].mxu0
    %v594 = vpop.f32.mrb[0].mxu0
    %v595 = vadd.f32 %v507, %v594
    %v596 = vpop.f32.mrb[0].mxu0
    %597 = vmatprep.mubr.bf16.mxu0 0
    %598 = vmatmul.mubr.bf16.gmra.mrb[0].mxu0 %v485
    %v599 = vpop.f32.mrb[0].mxu0
    %v600 = vadd.f32 %v507, %v599
    %v601 = vpop.f32.mrb[0].mxu0
    %v602 = vpop.f32.mrb[0].mxu0
    %v603 = vadd.f32 %v507, %v602
    %v604 = vpop.f32.mrb[0].mxu0
    %605 = vdwg.mxu0
    %v606 = vmax.f32 %v592, 0.0
    %v607 = vmax.f32 %v595, 0.0
    %v608 = vmax.f32 %v600, 0.0
    %v609 = vmax.f32 %v603, 0.0
    %v610 = vpack.c.bf16 %v607, %v606
    %v611 = vpack.c.bf16 %v609, %v608
    %v612 = vld [vmem:[#allocation13] sm:$0xff]
    %v613 = vld [vmem:[#allocation13 + $0x8] sm:$0xff]
    %v614 = vld [vmem:[#allocation13 + $0x10] sm:$0xff]
    %v615 = vld [vmem:[#allocation13 + $0x18] sm:$0xff]
    %v616 = vld [vmem:[#allocation13 + $0x20] sm:$0xff]
    %v617 = vld [vmem:[#allocation13 + $0x28] sm:$0xff]
    %v618 = vld [vmem:[#allocation13 + $0x30] sm:$0xff]
    %v619 = vld [vmem:[#allocation13 + $0x38] sm:$0xff]
    %v620 = vld [vmem:[#allocation13 + $0x40] sm:$0xff]
    %v621 = vld [vmem:[#allocation13 + $0x48] sm:$0xff]
    %v622 = vld [vmem:[#allocation13 + $0x50] sm:$0xff]
    %v623 = vld [vmem:[#allocation13 + $0x58] sm:$0xff]
    %v624 = vld [vmem:[#allocation13 + $0x60] sm:$0xff]
    %v625 = vld [vmem:[#allocation13 + $0x68] sm:$0xff]
    %v626 = vld [vmem:[#allocation13 + $0x70] sm:$0xff]
    %v627 = vld [vmem:[#allocation13 + $0x78] sm:$0xff]
    %v628 = vld [vmem:[%s9] sm:$0x3]
    %v630 = vlaneseq
    %v631 = vshrl.u32 %v630, 7
    %v632 = vsub.s32 0, %v631
    %v633 = vrot.slane %v628, %v632
    %v634 = vlaneseq
    %v635 = vshrl.u32 %v634, 7
    %v636 = vsub.s32 1, %v635
    %v637 = vrot.slane %v628, %v636
    %v656 = vunpack.c.l.b16 %v612
    %v657 = vunpack.c.h.b16 %v612
    %v658 = vunpack.c.l.b16 %v613
    %v659 = vunpack.c.h.b16 %v613
    %v660 = vunpack.c.l.b16 %v614
    %v661 = vunpack.c.h.b16 %v614
    %v662 = vunpack.c.l.b16 %v615
    %v663 = vunpack.c.h.b16 %v615
    %v664 = vunpack.c.l.b16 %v616
    %v665 = vunpack.c.h.b16 %v616
    %v666 = vunpack.c.l.b16 %v617
    %v667 = vunpack.c.h.b16 %v617
    %v668 = vunpack.c.l.b16 %v618
    %v669 = vunpack.c.h.b16 %v618
    %v670 = vunpack.c.l.b16 %v619
    %v671 = vunpack.c.h.b16 %v619
    %v672 = vunpack.c.l.b16 %v620
    %v673 = vunpack.c.h.b16 %v620
    %v674 = vunpack.c.l.b16 %v621
    %v675 = vunpack.c.h.b16 %v621
    %v676 = vunpack.c.l.b16 %v622
    %v677 = vunpack.c.h.b16 %v622
    %v678 = vunpack.c.l.b16 %v623
    %v679 = vunpack.c.h.b16 %v623
    %v680 = vunpack.c.l.b16 %v624
    %v681 = vunpack.c.h.b16 %v624
    %v682 = vunpack.c.l.b16 %v625
    %v683 = vunpack.c.h.b16 %v625
    %v684 = vunpack.c.l.b16 %v626
    %v685 = vunpack.c.h.b16 %v626
    %v686 = vunpack.c.l.b16 %v627
    %v687 = vunpack.c.h.b16 %v627
    %v688 = vpack.c.b16 %v658, %v656
    %v689 = vpack.c.b16 %v659, %v657
    %v690 = vpack.c.b16 %v662, %v660
    %v691 = vpack.c.b16 %v663, %v661
    %v692 = vpack.c.b16 %v666, %v664
    %v693 = vpack.c.b16 %v667, %v665
    %v694 = vpack.c.b16 %v670, %v668
    %v695 = vpack.c.b16 %v671, %v669
    %v696 = vpack.c.b16 %v674, %v672
    %v697 = vpack.c.b16 %v675, %v673
    %v698 = vpack.c.b16 %v678, %v676
    %v699 = vpack.c.b16 %v679, %v677
    %v700 = vpack.c.b16 %v682, %v680
    %v701 = vpack.c.b16 %v683, %v681
    %v702 = vpack.c.b16 %v686, %v684
    %v703 = vpack.c.b16 %v687, %v685
    %720 = vmatprep.subr.bf16.mxu0 %v689
    %721 = vmatpush1.bf16.msra.mxu0 %v688
    %722 = vmatprep.subr.bf16.mxu0 %v691
    %723 = vmatpush1.bf16.msra.mxu0 %v690
    %724 = vmatprep.subr.bf16.mxu0 %v693
    %725 = vmatpush1.bf16.msra.mxu0 %v692
    %726 = vmatprep.subr.bf16.mxu0 %v695
    %727 = vmatpush1.bf16.msra.mxu0 %v694
    %728 = vmatprep.subr.bf16.mxu0 %v697
    %729 = vmatpush1.bf16.msra.mxu0 %v696
    %730 = vmatprep.subr.bf16.mxu0 %v699
    %731 = vmatpush1.bf16.msra.mxu0 %v698
    %732 = vmatprep.subr.bf16.mxu0 %v701
    %733 = vmatpush1.bf16.msra.mxu0 %v700
    %734 = vmatprep.subr.bf16.mxu0 %v703
    %735 = vmatpush1.bf16.msra.mxu0 %v702
    %736 = vmatprep.subr.bf16.mxu0 0
    %737 = vmatpush1.bf16.msra.mxu0 0
    %738 = vmatprep.subr.bf16.mxu0 0
    %739 = vmatpush1.bf16.msra.mxu0 0
    %740 = vmatprep.subr.bf16.mxu0 0
    %741 = vmatpush1.bf16.msra.mxu0 0
    %742 = vmatprep.subr.bf16.mxu0 0
    %743 = vmatpush1.bf16.msra.mxu0 0
    %744 = vmatprep.subr.bf16.mxu0 0
    %745 = vmatpush1.bf16.msra.mxu0 0
    %746 = vmatprep.subr.bf16.mxu0 0
    %747 = vmatpush1.bf16.msra.mxu0 0
    %748 = vmatprep.subr.bf16.mxu0 0
    %749 = vmatpush1.bf16.msra.mxu0 0
    %750 = vmatprep.subr.bf16.mxu0 0
    %751 = vmatpush1.bf16.msra.mxu0 0
    %752 = vmatprep.mubr.bf16.mxu0 0
    %753 = vmatmul.mubr.bf16.gmra.mrb[0].mxu0 %v610
    %v754 = vpop.f32.mrb[0].mxu0
    %v755 = vadd.f32 %v633, %v754
    %v756 = vpop.f32.mrb[0].mxu0
    %v757 = vadd.f32 %v637, %v756
    %v758 = vpop.f32.mrb[0].mxu0
    %v759 = vadd.f32 %v633, %v758
    %v760 = vpop.f32.mrb[0].mxu0
    %v761 = vadd.f32 %v637, %v760
    %762 = vmatprep.mubr.bf16.mxu0 0
    %763 = vmatmul.mubr.bf16.gmra.mrb[0].mxu0 %v611
    %v764 = vpop.f32.mrb[0].mxu0
    %v765 = vadd.f32 %v633, %v764
    %v766 = vpop.f32.mrb[0].mxu0
    %v767 = vadd.f32 %v637, %v766
    %v768 = vpop.f32.mrb[0].mxu0
    %v769 = vadd.f32 %v633, %v768
    %v770 = vpop.f32.mrb[0].mxu0
    %v771 = vadd.f32 %v637, %v770
    %772 = vdwg.mxu0
    %773 = vst [vmem:[#allocation21] sm:$0xff] %v755
    %774 = vst [vmem:[#allocation21 + $0x8] sm:$0xff] %v759
    %775 = vst [vmem:[#allocation21 + $0x10] sm:$0xff] %v765
    %776 = vst [vmem:[#allocation21 + $0x18] sm:$0xff] %v769
    %777 = vst [vmem:[#allocation23] sm:$0xff] %v757
    %778 = vst [vmem:[#allocation23 + $0x8] sm:$0xff] %v761
    %779 = vst [vmem:[#allocation23 + $0x10] sm:$0xff] %v767
    %780 = vst [vmem:[#allocation23 + $0x18] sm:$0xff] %v771
    %v781 = vld [vmem:[#allocation7] sm:$0xff]
    %v782 = vld [vmem:[#allocation7 + $0x8] sm:$0xff]
    %v783 = vld [vmem:[#allocation7 + $0x10] sm:$0xff]
    %v784 = vld [vmem:[#allocation7 + $0x18] sm:$0xff]
    %v785 = vld [vmem:[#allocation23] sm:$0xff]
    %v786 = vld [vmem:[#allocation23 + $0x8] sm:$0xff]
    %v787 = vld [vmem:[#allocation23 + $0x10] sm:$0xff]
    %v788 = vld [vmem:[#allocation23 + $0x18] sm:$0xff]
    %v789 = vmul.f32 %v785, 0.5
    %v790 = vmul.f32 %v786, 0.5
    %v791 = vmul.f32 %v787, 0.5
    %v792 = vmul.f32 %v788, 0.5
    %v793 = vmul.f32 %v789, 1.442695
    %v794 = vpow.pop %v793
    %v795 = vmul.f32 %v790, 1.442695
    %v796 = vpow.pop %v795
    %v797 = vmul.f32 %v791, 1.442695
    %v798 = vpow.pop %v797
    %v799 = vmul.f32 %v792, 1.442695
    %v800 = vpow.pop %v799
    %v801 = vmul.f32 %v781, %v794
    %v802 = vmul.f32 %v782, %v796
    %v803 = vmul.f32 %v783, %v798
    %v804 = vmul.f32 %v784, %v800
    %v805 = vld [vmem:[#allocation21] sm:$0xff]
    %v806 = vld [vmem:[#allocation21 + $0x8] sm:$0xff]
    %v807 = vld [vmem:[#allocation21 + $0x10] sm:$0xff]
    %v808 = vld [vmem:[#allocation21 + $0x18] sm:$0xff]
    %v809 = vadd.f32 %v801, %v805
    %v810 = vadd.f32 %v802, %v806
    %v811 = vadd.f32 %v803, %v807
    %v812 = vadd.f32 %v804, %v808
    %v813 = vpack.c.bf16 %v810, %v809
    %v814 = vpack.c.bf16 %v812, %v811
    %v815 = vld [vmem:[#allocation14] sm:$0xf]
    %v816 = vld [vmem:[#allocation14 + $0x4] sm:$0xf]
    %v817 = vld [vmem:[#allocation14 + $0x8] sm:$0xf]
    %v818 = vld [vmem:[#allocation14 + $0xc] sm:$0xf]
    %v819 = vld [vmem:[#allocation14 + $0x10] sm:$0xf]
    %v820 = vld [vmem:[#allocation14 + $0x14] sm:$0xf]
    %v821 = vld [vmem:[#allocation14 + $0x18] sm:$0xf]
    %v822 = vld [vmem:[#allocation14 + $0x1c] sm:$0xf]
    %v823 = vld [vmem:[#allocation14 + $0x20] sm:$0xf]
    %v824 = vld [vmem:[#allocation14 + $0x24] sm:$0xf]
    %v825 = vld [vmem:[#allocation14 + $0x28] sm:$0xf]
    %v826 = vld [vmem:[#allocation14 + $0x2c] sm:$0xf]
    %v827 = vld [vmem:[#allocation14 + $0x30] sm:$0xf]
    %v828 = vld [vmem:[#allocation14 + $0x34] sm:$0xf]
    %v829 = vld [vmem:[#allocation14 + $0x38] sm:$0xf]
    %v830 = vld [vmem:[#allocation14 + $0x3c] sm:$0xf]
    %v831 = vld [vmem:[#allocation5] sm:$0xf]
    %v832 = vld [vmem:[#allocation5 + $0x4] sm:$0xf]
    %v833 = vld [vmem:[#allocation5 + $0x8] sm:$0xf]
    %v834 = vld [vmem:[#allocation5 + $0xc] sm:$0xf]
    %v835 = vld [vmem:[#allocation16] sm:$0xf]
    %v836 = vld [vmem:[#allocation16 + $0x4] sm:$0xf]
    %v837 = vld [vmem:[#allocation16 + $0x8] sm:$0xf]
    %v838 = vld [vmem:[#allocation16 + $0xc] sm:$0xf]
    %v839 = vld [vmem:[#allocation16 + $0x10] sm:$0xf]
    %v840 = vld [vmem:[#allocation16 + $0x14] sm:$0xf]
    %v841 = vld [vmem:[#allocation16 + $0x18] sm:$0xf]
    %v842 = vld [vmem:[#allocation16 + $0x1c] sm:$0xf]
    %v843 = vld [vmem:[#allocation16 + $0x20] sm:$0xf]
    %v844 = vld [vmem:[#allocation16 + $0x24] sm:$0xf]
    %v845 = vld [vmem:[#allocation16 + $0x28] sm:$0xf]
    %v846 = vld [vmem:[#allocation16 + $0x2c] sm:$0xf]
    %v847 = vld [vmem:[#allocation16 + $0x30] sm:$0xf]
    %v848 = vld [vmem:[#allocation16 + $0x34] sm:$0xf]
    %v849 = vld [vmem:[#allocation16 + $0x38] sm:$0xf]
    %v850 = vld [vmem:[#allocation16 + $0x3c] sm:$0xf]
    %v855 = vunpack.c.l.b16 %v831
    %v856 = vunpack.c.l.b16 %v832
    %v857 = vunpack.c.l.b16 %v833
    %v858 = vunpack.c.l.b16 %v834
    %v859 = vpack.c.b16 %v856, %v855
    %v860 = vpack.c.b16 %v858, %v857
    %v879 = vunpack.c.l.b16 %v835
    %v880 = vunpack.c.l.b16 %v836
    %v881 = vunpack.c.l.b16 %v837
    %v882 = vunpack.c.l.b16 %v838
    %v883 = vunpack.c.l.b16 %v839
    %v884 = vunpack.c.l.b16 %v840
    %v885 = vunpack.c.l.b16 %v841
    %v886 = vunpack.c.l.b16 %v842
    %v887 = vunpack.c.l.b16 %v843
    %v888 = vunpack.c.l.b16 %v844
    %v889 = vunpack.c.l.b16 %v845
    %v890 = vunpack.c.l.b16 %v846
    %v891 = vunpack.c.l.b16 %v847
    %v892 = vunpack.c.l.b16 %v848
    %v893 = vunpack.c.l.b16 %v849
    %v894 = vunpack.c.l.b16 %v850
    %v895 = vpack.c.b16 %v880, %v879
    %v896 = vpack.c.b16 %v882, %v881
    %v897 = vpack.c.b16 %v884, %v883
    %v898 = vpack.c.b16 %v886, %v885
    %v899 = vpack.c.b16 %v888, %v887
    %v900 = vpack.c.b16 %v890, %v889
    %v901 = vpack.c.b16 %v892, %v891
    %v902 = vpack.c.b16 %v894, %v893
    %911 = vmatprep.subr.bf16.mxu0 0
    %912 = vmatpush1.bf16.msra.mxu0 %v895
    %913 = vmatprep.subr.bf16.mxu0 0
    %914 = vmatpush1.bf16.msra.mxu0 %v896
    %915 = vmatprep.subr.bf16.mxu0 0
    %916 = vmatpush1.bf16.msra.mxu0 %v897
    %917 = vmatprep.subr.bf16.mxu0 0
    %918 = vmatpush1.bf16.msra.mxu0 %v898
    %919 = vmatprep.subr.bf16.mxu0 0
    %920 = vmatpush1.bf16.msra.mxu0 %v899
    %921 = vmatprep.subr.bf16.mxu0 0
    %922 = vmatpush1.bf16.msra.mxu0 %v900
    %923 = vmatprep.subr.bf16.mxu0 0
    %924 = vmatpush1.bf16.msra.mxu0 %v901
    %925 = vmatprep.subr.bf16.mxu0 0
    %926 = vmatpush1.bf16.msra.mxu0 %v902
    %927 = vmatprep.subr.bf16.mxu0 0
    %928 = vmatpush1.bf16.msra.mxu0 0
    %929 = vmatprep.subr.bf16.mxu0 0
    %930 = vmatpush1.bf16.msra.mxu0 0
    %931 = vmatprep.subr.bf16.mxu0 0
    %932 = vmatpush1.bf16.msra.mxu0 0
    %933 = vmatprep.subr.bf16.mxu0 0
    %934 = vmatpush1.bf16.msra.mxu0 0
    %935 = vmatprep.subr.bf16.mxu0 0
    %936 = vmatpush1.bf16.msra.mxu0 0
    %937 = vmatprep.subr.bf16.mxu0 0
    %938 = vmatpush1.bf16.msra.mxu0 0
    %939 = vmatprep.subr.bf16.mxu0 0
    %940 = vmatpush1.bf16.msra.mxu0 0
    %941 = vmatprep.subr.bf16.mxu0 0
    %942 = vmatpush1.bf16.msra.mxu0 0
    %943 = vmatprep.mubr.bf16.mxu0 0
    %944 = vmatmul.mubr.bf16.gmra.mrb[0].mxu0 %v859
    %v945 = vpop.f32.mrb[0].mxu0
    %v946 = vadd.f32 0.0, %v945
    %v947 = vpop.f32.mrb[0].mxu0
    %v948 = vpop.f32.mrb[0].mxu0
    %v949 = vadd.f32 0.0, %v948
    %v950 = vpop.f32.mrb[0].mxu0
    %951 = vmatprep.mubr.bf16.mxu0 0
    %952 = vmatmul.mubr.bf16.gmra.mrb[0].mxu0 %v860
    %v953 = vpop.f32.mrb[0].mxu0
    %v954 = vadd.f32 0.0, %v953
    %v955 = vpop.f32.mrb[0].mxu0
    %v956 = vpop.f32.mrb[0].mxu0
    %v957 = vadd.f32 0.0, %v956
    %v958 = vpop.f32.mrb[0].mxu0
    %959 = vdwg.mxu0
    %v976 = vunpack.c.l.b16 %v815
    %v977 = vunpack.c.l.b16 %v816
    %v978 = vunpack.c.l.b16 %v817
    %v979 = vunpack.c.l.b16 %v818
    %v980 = vunpack.c.l.b16 %v819
    %v981 = vunpack.c.l.b16 %v820
    %v982 = vunpack.c.l.b16 %v821
    %v983 = vunpack.c.l.b16 %v822
    %v984 = vunpack.c.l.b16 %v823
    %v985 = vunpack.c.l.b16 %v824
    %v986 = vunpack.c.l.b16 %v825
    %v987 = vunpack.c.l.b16 %v826
    %v988 = vunpack.c.l.b16 %v827
    %v989 = vunpack.c.l.b16 %v828
    %v990 = vunpack.c.l.b16 %v829
    %v991 = vunpack.c.l.b16 %v830
    %v992 = vpack.c.b16 %v977, %v976
    %v993 = vpack.c.b16 %v979, %v978
    %v994 = vpack.c.b16 %v981, %v980
    %v995 = vpack.c.b16 %v983, %v982
    %v996 = vpack.c.b16 %v985, %v984
    %v997 = vpack.c.b16 %v987, %v986
    %v998 = vpack.c.b16 %v989, %v988
    %v999 = vpack.c.b16 %v991, %v990
    %1008 = vmatprep.subr.bf16.mxu0 0
    %1009 = vmatpush1.bf16.msra.mxu0 %v992
    %1010 = vmatprep.subr.bf16.mxu0 0
    %1011 = vmatpush1.bf16.msra.mxu0 %v993
    %1012 = vmatprep.subr.bf16.mxu0 0
    %1013 = vmatpush1.bf16.msra.mxu0 %v994
    %1014 = vmatprep.subr.bf16.mxu0 0
    %1015 = vmatpush1.bf16.msra.mxu0 %v995
    %1016 = vmatprep.subr.bf16.mxu0 0
    %1017 = vmatpush1.bf16.msra.mxu0 %v996
    %1018 = vmatprep.subr.bf16.mxu0 0
    %1019 = vmatpush1.bf16.msra.mxu0 %v997
    %1020 = vmatprep.subr.bf16.mxu0 0
    %1021 = vmatpush1.bf16.msra.mxu0 %v998
    %1022 = vmatprep.subr.bf16.mxu0 0
    %1023 = vmatpush1.bf16.msra.mxu0 %v999
    %1024 = vmatprep.subr.bf16.mxu0 0
    %1025 = vmatpush1.bf16.msra.mxu0 0
    %1026 = vmatprep.subr.bf16.mxu0 0
    %1027 = vmatpush1.bf16.msra.mxu0 0
    %1028 = vmatprep.subr.bf16.mxu0 0
    %1029 = vmatpush1.bf16.msra.mxu0 0
    %1030 = vmatprep.subr.bf16.mxu0 0
    %1031 = vmatpush1.bf16.msra.mxu0 0
    %1032 = vmatprep.subr.bf16.mxu0 0
    %1033 = vmatpush1.bf16.msra.mxu0 0
    %1034 = vmatprep.subr.bf16.mxu0 0
    %1035 = vmatpush1.bf16.msra.mxu0 0
    %1036 = vmatprep.subr.bf16.mxu0 0
    %1037 = vmatpush1.bf16.msra.mxu0 0
    %1038 = vmatprep.subr.bf16.mxu0 0
    %1039 = vmatpush1.bf16.msra.mxu0 0
    %1040 = vmatprep.mubr.bf16.mxu0 0
    %1041 = vmatmul.mubr.bf16.gmra.mrb[0].mxu0 %v813
    %v1042 = vpop.f32.mrb[0].mxu0
    %v1043 = vadd.f32 %v946, %v1042
    %v1044 = vpop.f32.mrb[0].mxu0
    %v1045 = vpop.f32.mrb[0].mxu0
    %v1046 = vadd.f32 %v949, %v1045
    %v1047 = vpop.f32.mrb[0].mxu0
    %1048 = vmatprep.mubr.bf16.mxu0 0
    %1049 = vmatmul.mubr.bf16.gmra.mrb[0].mxu0 %v814
    %v1050 = vpop.f32.mrb[0].mxu0
    %v1051 = vadd.f32 %v954, %v1050
    %v1052 = vpop.f32.mrb[0].mxu0
    %v1053 = vpop.f32.mrb[0].mxu0
    %v1054 = vadd.f32 %v957, %v1053
    %v1055 = vpop.f32.mrb[0].mxu0
    %1056 = vdwg.mxu0
    %v1057 = vld [vmem:[%s12] sm:$0x1]
    %v1059 = vlaneseq
    %v1060 = vshrl.u32 %v1059, 7
    %v1061 = vsub.s32 0, %v1060
    %v1062 = vrot.slane %v1057, %v1061
    %v1064 = vadd.f32 %v1043, %v1062
    %v1065 = vadd.f32 %v1046, %v1062
    %v1066 = vadd.f32 %v1051, %v1062
    %v1067 = vadd.f32 %v1054, %v1062
    %v1068 = vmax.f32 %v1064, 0.0
    %v1069 = vmax.f32 %v1065, 0.0
    %v1070 = vmax.f32 %v1066, 0.0
    %v1071 = vmax.f32 %v1067, 0.0
    %v1072 = vpack.c.bf16 %v1069, %v1068
    %v1073 = vpack.c.bf16 %v1071, %v1070
    %v1074 = vld [vmem:[#allocation17] sm:$0xf]
    %v1075 = vld [vmem:[#allocation17 + $0x4] sm:$0xf]
    %v1076 = vld [vmem:[#allocation17 + $0x8] sm:$0xf]
    %v1077 = vld [vmem:[#allocation17 + $0xc] sm:$0xf]
    %v1078 = vld [vmem:[#allocation17 + $0x10] sm:$0xf]
    %v1079 = vld [vmem:[#allocation17 + $0x14] sm:$0xf]
    %v1080 = vld [vmem:[#allocation17 + $0x18] sm:$0xf]
    %v1081 = vld [vmem:[#allocation17 + $0x1c] sm:$0xf]
    %v1082 = vld [vmem:[#allocation17 + $0x20] sm:$0xf]
    %v1083 = vld [vmem:[#allocation17 + $0x24] sm:$0xf]
    %v1084 = vld [vmem:[#allocation17 + $0x28] sm:$0xf]
    %v1085 = vld [vmem:[#allocation17 + $0x2c] sm:$0xf]
    %v1086 = vld [vmem:[#allocation17 + $0x30] sm:$0xf]
    %v1087 = vld [vmem:[#allocation17 + $0x34] sm:$0xf]
    %v1088 = vld [vmem:[#allocation17 + $0x38] sm:$0xf]
    %v1089 = vld [vmem:[#allocation17 + $0x3c] sm:$0xf]
    %v1090 = vld [vmem:[%s14] sm:$0x1]
    %v1092 = vlaneseq
    %v1093 = vshrl.u32 %v1092, 7
    %v1094 = vsub.s32 0, %v1093
    %v1095 = vrot.slane %v1090, %v1094
    %v1113 = vunpack.c.l.b16 %v1074
    %v1114 = vunpack.c.l.b16 %v1075
    %v1115 = vunpack.c.l.b16 %v1076
    %v1116 = vunpack.c.l.b16 %v1077
    %v1117 = vunpack.c.l.b16 %v1078
    %v1118 = vunpack.c.l.b16 %v1079
    %v1119 = vunpack.c.l.b16 %v1080
    %v1120 = vunpack.c.l.b16 %v1081
    %v1121 = vunpack.c.l.b16 %v1082
    %v1122 = vunpack.c.l.b16 %v1083
    %v1123 = vunpack.c.l.b16 %v1084
    %v1124 = vunpack.c.l.b16 %v1085
    %v1125 = vunpack.c.l.b16 %v1086
    %v1126 = vunpack.c.l.b16 %v1087
    %v1127 = vunpack.c.l.b16 %v1088
    %v1128 = vunpack.c.l.b16 %v1089
    %v1129 = vpack.c.b16 %v1114, %v1113
    %v1130 = vpack.c.b16 %v1116, %v1115
    %v1131 = vpack.c.b16 %v1118, %v1117
    %v1132 = vpack.c.b16 %v1120, %v1119
    %v1133 = vpack.c.b16 %v1122, %v1121
    %v1134 = vpack.c.b16 %v1124, %v1123
    %v1135 = vpack.c.b16 %v1126, %v1125
    %v1136 = vpack.c.b16 %v1128, %v1127
    %1145 = vmatprep.subr.bf16.mxu0 0
    %1146 = vmatpush1.bf16.msra.mxu0 %v1129
    %1147 = vmatprep.subr.bf16.mxu0 0
    %1148 = vmatpush1.bf16.msra.mxu0 %v1130
    %1149 = vmatprep.subr.bf16.mxu0 0
    %1150 = vmatpush1.bf16.msra.mxu0 %v1131
    %1151 = vmatprep.subr.bf16.mxu0 0
    %1152 = vmatpush1.bf16.msra.mxu0 %v1132
    %1153 = vmatprep.subr.bf16.mxu0 0
    %1154 = vmatpush1.bf16.msra.mxu0 %v1133
    %1155 = vmatprep.subr.bf16.mxu0 0
    %1156 = vmatpush1.bf16.msra.mxu0 %v1134
    %1157 = vmatprep.subr.bf16.mxu0 0
    %1158 = vmatpush1.bf16.msra.mxu0 %v1135
    %1159 = vmatprep.subr.bf16.mxu0 0
    %1160 = vmatpush1.bf16.msra.mxu0 %v1136
    %1161 = vmatprep.subr.bf16.mxu0 0
    %1162 = vmatpush1.bf16.msra.mxu0 0
    %1163 = vmatprep.subr.bf16.mxu0 0
    %1164 = vmatpush1.bf16.msra.mxu0 0
    %1165 = vmatprep.subr.bf16.mxu0 0
    %1166 = vmatpush1.bf16.msra.mxu0 0
    %1167 = vmatprep.subr.bf16.mxu0 0
    %1168 = vmatpush1.bf16.msra.mxu0 0
    %1169 = vmatprep.subr.bf16.mxu0 0
    %1170 = vmatpush1.bf16.msra.mxu0 0
    %1171 = vmatprep.subr.bf16.mxu0 0
    %1172 = vmatpush1.bf16.msra.mxu0 0
    %1173 = vmatprep.subr.bf16.mxu0 0
    %1174 = vmatpush1.bf16.msra.mxu0 0
    %1175 = vmatprep.subr.bf16.mxu0 0
    %1176 = vmatpush1.bf16.msra.mxu0 0
    %1177 = vmatprep.mubr.bf16.mxu0 0
    %1178 = vmatmul.mubr.bf16.gmra.mrb[0].mxu0 %v1072
    %v1179 = vpop.f32.mrb[0].mxu0
    %v1180 = vadd.f32 %v1095, %v1179
    %v1181 = vpop.f32.mrb[0].mxu0
    %v1182 = vpop.f32.mrb[0].mxu0
    %v1183 = vadd.f32 %v1095, %v1182
    %v1184 = vpop.f32.mrb[0].mxu0
    %1185 = vmatprep.mubr.bf16.mxu0 0
    %1186 = vmatmul.mubr.bf16.gmra.mrb[0].mxu0 %v1073
    %v1187 = vpop.f32.mrb[0].mxu0
    %v1188 = vadd.f32 %v1095, %v1187
    %v1189 = vpop.f32.mrb[0].mxu0
    %v1190 = vpop.f32.mrb[0].mxu0
    %v1191 = vadd.f32 %v1095, %v1190
    %v1192 = vpop.f32.mrb[0].mxu0
    %1193 = vdwg.mxu0
    %v1194 = vmax.f32 %v1180, 0.0
    %v1195 = vmax.f32 %v1183, 0.0
    %v1196 = vmax.f32 %v1188, 0.0
    %v1197 = vmax.f32 %v1191, 0.0
    %v1198 = vpack.c.bf16 %v1195, %v1194
    %v1199 = vpack.c.bf16 %v1197, %v1196
    %v1200 = vld [vmem:[#allocation19] sm:$0xf]
    %v1201 = vld [vmem:[#allocation19 + $0x4] sm:$0xf]
    %v1202 = vld [vmem:[#allocation19 + $0x8] sm:$0xf]
    %v1203 = vld [vmem:[#allocation19 + $0xc] sm:$0xf]
    %v1204 = vld [vmem:[#allocation19 + $0x10] sm:$0xf]
    %v1205 = vld [vmem:[#allocation19 + $0x14] sm:$0xf]
    %v1206 = vld [vmem:[#allocation19 + $0x18] sm:$0xf]
    %v1207 = vld [vmem:[#allocation19 + $0x1c] sm:$0xf]
    %v1208 = vld [vmem:[#allocation19 + $0x20] sm:$0xf]
    %v1209 = vld [vmem:[#allocation19 + $0x24] sm:$0xf]
    %v1210 = vld [vmem:[#allocation19 + $0x28] sm:$0xf]
    %v1211 = vld [vmem:[#allocation19 + $0x2c] sm:$0xf]
    %v1212 = vld [vmem:[#allocation19 + $0x30] sm:$0xf]
    %v1213 = vld [vmem:[#allocation19 + $0x34] sm:$0xf]
    %v1214 = vld [vmem:[#allocation19 + $0x38] sm:$0xf]
    %v1215 = vld [vmem:[#allocation19 + $0x3c] sm:$0xf]
    %v1216 = vld [vmem:[%s16] sm:$0x1]
    %v1218 = vlaneseq
    %v1219 = vshrl.u32 %v1218, 7
    %v1220 = vsub.s32 0, %v1219
    %v1221 = vrot.slane %v1216, %v1220
    %v1239 = vunpack.c.l.b16 %v1200
    %v1240 = vunpack.c.l.b16 %v1201
    %v1241 = vunpack.c.l.b16 %v1202
    %v1242 = vunpack.c.l.b16 %v1203
    %v1243 = vunpack.c.l.b16 %v1204
    %v1244 = vunpack.c.l.b16 %v1205
    %v1245 = vunpack.c.l.b16 %v1206
    %v1246 = vunpack.c.l.b16 %v1207
    %v1247 = vunpack.c.l.b16 %v1208
    %v1248 = vunpack.c.l.b16 %v1209
    %v1249 = vunpack.c.l.b16 %v1210
    %v1250 = vunpack.c.l.b16 %v1211
    %v1251 = vunpack.c.l.b16 %v1212
    %v1252 = vunpack.c.l.b16 %v1213
    %v1253 = vunpack.c.l.b16 %v1214
    %v1254 = vunpack.c.l.b16 %v1215
    %v1255 = vpack.c.b16 %v1240, %v1239
    %v1256 = vpack.c.b16 %v1242, %v1241
    %v1257 = vpack.c.b16 %v1244, %v1243
    %v1258 = vpack.c.b16 %v1246, %v1245
    %v1259 = vpack.c.b16 %v1248, %v1247
    %v1260 = vpack.c.b16 %v1250, %v1249
    %v1261 = vpack.c.b16 %v1252, %v1251
    %v1262 = vpack.c.b16 %v1254, %v1253
    %1271 = vmatprep.subr.bf16.mxu0 0
    %1272 = vmatpush1.bf16.msra.mxu0 %v1255
    %1273 = vmatprep.subr.bf16.mxu0 0
    %1274 = vmatpush1.bf16.msra.mxu0 %v1256
    %1275 = vmatprep.subr.bf16.mxu0 0
    %1276 = vmatpush1.bf16.msra.mxu0 %v1257
    %1277 = vmatprep.subr.bf16.mxu0 0
    %1278 = vmatpush1.bf16.msra.mxu0 %v1258
    %1279 = vmatprep.subr.bf16.mxu0 0
    %1280 = vmatpush1.bf16.msra.mxu0 %v1259
    %1281 = vmatprep.subr.bf16.mxu0 0
    %1282 = vmatpush1.bf16.msra.mxu0 %v1260
    %1283 = vmatprep.subr.bf16.mxu0 0
    %1284 = vmatpush1.bf16.msra.mxu0 %v1261
    %1285 = vmatprep.subr.bf16.mxu0 0
    %1286 = vmatpush1.bf16.msra.mxu0 %v1262
    %1287 = vmatprep.subr.bf16.mxu0 0
    %1288 = vmatpush1.bf16.msra.mxu0 0
    %1289 = vmatprep.subr.bf16.mxu0 0
    %1290 = vmatpush1.bf16.msra.mxu0 0
    %1291 = vmatprep.subr.bf16.mxu0 0
    %1292 = vmatpush1.bf16.msra.mxu0 0
    %1293 = vmatprep.subr.bf16.mxu0 0
    %1294 = vmatpush1.bf16.msra.mxu0 0
    %1295 = vmatprep.subr.bf16.mxu0 0
    %1296 = vmatpush1.bf16.msra.mxu0 0
    %1297 = vmatprep.subr.bf16.mxu0 0
    %1298 = vmatpush1.bf16.msra.mxu0 0
    %1299 = vmatprep.subr.bf16.mxu0 0
    %1300 = vmatpush1.bf16.msra.mxu0 0
    %1301 = vmatprep.subr.bf16.mxu0 0
    %1302 = vmatpush1.bf16.msra.mxu0 0
    %1303 = vmatprep.mubr.bf16.mxu0 0
    %1304 = vmatmul.mubr.bf16.gmra.mrb[0].mxu0 %v1198
    %v1305 = vpop.f32.mrb[0].mxu0
    %v1306 = vadd.f32 %v1221, %v1305
    %v1307 = vpop.f32.mrb[0].mxu0
    %v1308 = vpop.f32.mrb[0].mxu0
    %v1309 = vadd.f32 %v1221, %v1308
    %v1310 = vpop.f32.mrb[0].mxu0
    %1311 = vmatprep.mubr.bf16.mxu0 0
    %1312 = vmatmul.mubr.bf16.gmra.mrb[0].mxu0 %v1199
    %v1313 = vpop.f32.mrb[0].mxu0
    %v1314 = vadd.f32 %v1221, %v1313
    %v1315 = vpop.f32.mrb[0].mxu0
    %v1316 = vpop.f32.mrb[0].mxu0
    %v1317 = vadd.f32 %v1221, %v1316
    %v1318 = vpop.f32.mrb[0].mxu0
    %1319 = vdwg.mxu0
    %1320 = vst [vmem:[#allocation20] sm:$0xff] %v1306
    %1321 = vst [vmem:[#allocation20 + $0x8] sm:$0xff] %v1309
    %1322 = vst [vmem:[#allocation20 + $0x10] sm:$0xff] %v1314
    %1323 = vst [vmem:[#allocation20 + $0x18] sm:$0xff] %v1317
    // Predicated region
    $region114: #{tpu_custom_call.1} parent=1 // pred_check
      _
    $region115: #{tpu_custom_call.1} parent=1 // pred_check_branch
      %1325 = sbr.rel (0) target = $region117
    $region116: #{tpu_custom_call.1} parent=1 // pred_region
      %s1327 = ssub.s32 512, 512
      %1328 = vsyncadd [#allocation4], %s1327
      %s1329 = sshll.u32 [#allocation20], 4
      %s1330 = int_to_ptr.vmem [resolvable:$true] %s1329
      %1335 = dma.vmem_to_hbm [thread:$0]  %s1330, 512, %s17, [#allocation4], 128, 128, 8
    $region117: #{tpu_custom_call.1} parent=1 // pred_fallthru
      _
    // Predicated region
    $region118: #{tpu_custom_call.1} parent=1 // pred_check
      _
    $region119: #{tpu_custom_call.1} parent=1 // pred_check_branch
      %1337 = sbr.rel (0) target = $region121
    $region120: #{tpu_custom_call.1} parent=1 // pred_region
      %s1339 = ssub.s32 512, 512
      %1340 = vsyncadd [#allocation22], %s1339
      %s1341 = sshll.u32 [#allocation21], 4
      %s1342 = int_to_ptr.vmem [resolvable:$true] %s1341
      %1347 = dma.vmem_to_hbm [thread:$0]  %s1342, 512, %s18, [#allocation22], 128, 128, 8
    $region121: #{tpu_custom_call.1} parent=1 // pred_fallthru
      _
    // Predicated region
    $region122: #{tpu_custom_call.1} parent=1 // pred_check
      _
    $region123: #{tpu_custom_call.1} parent=1 // pred_check_branch
      %1349 = sbr.rel (0) target = $region125
    $region124: #{tpu_custom_call.1} parent=1 // pred_region
      %s1351 = ssub.s32 512, 512
      %1352 = vsyncadd [#allocation22], %s1351
      %s1353 = sshll.u32 [#allocation23], 4
      %s1354 = int_to_ptr.vmem [resolvable:$true] %s1353
      %1359 = dma.vmem_to_hbm [thread:$0]  %s1354, 512, %s19, [#allocation22], 128, 128, 8
    $region125: #{tpu_custom_call.1} parent=1 // pred_fallthru
      _
    // Predicated region
    $region126: #{tpu_custom_call.1} parent=1 // pred_check
      _
    $region127: #{tpu_custom_call.1} parent=1 // pred_check_branch
      %1361 = sbr.rel (0) target = $region129
    $region128: #{tpu_custom_call.1} parent=1 // pred_region
      %1362 = dma.done [#allocation4], 512
    $region129: #{tpu_custom_call.1} parent=1 // pred_fallthru
      _
    // Predicated region
    $region130: #{tpu_custom_call.1} parent=1 // pred_check
      _
    $region131: #{tpu_custom_call.1} parent=1 // pred_check_branch
      %1364 = sbr.rel (0) target = $region133
    $region132: #{tpu_custom_call.1} parent=1 // pred_region
      %1365 = dma.done [#allocation22], 512
    $region133: #{tpu_custom_call.1} parent=1 // pred_fallthru
      _
    // Predicated region
    $region134: #{tpu_custom_call.1} parent=1 // pred_check
      _
    $region135: #{tpu_custom_call.1} parent=1 // pred_check_branch
      %1367 = sbr.rel (0) target = $region137
    $region136: #{tpu_custom_call.1} parent=1 // pred_region
      %1368 = dma.done [#allocation22], 512
    $region137: #{tpu_custom_call.1} parent=1 // pred_fallthru
      _
    %1369 = vsyncpa [#allocation3], 1
    %1370 = vsyncpa [#allocation6], 1
    %1371 = vsyncpa [#allocation9], 1
    %1372 = vsyncpa [#allocation12], 1
    %1373 = vsyncpa [#allocation15], 1
    %1374 = vsyncpa [#allocation18], 1
    %1375 = vsyncpa [#allocation4], 1
    %1376 = vsyncpa [#allocation22], 1

// kernel: tpu_custom_call.1
$region0: #{tpu_custom_call.1}
  #allocation0 [shape = 'u32[]', space=smem, size = 0x4, offset = 0x4, fixed_abs, tag = 'smem constant byte address 0x4 - core index']
  #allocation1 [shape = 'u32[144,128]{1,0:T(1,128)}', space=vmem, size = 0x12000, scoped, tag = 'internal scratch']
  %s0 = inlined_call_operand.hbm [shape: bf16[32,128], index: 0, kind: input, shape index: {}]
  %s1 = inlined_call_operand.hbm [shape: bf16[32,128], index: 1, kind: input, shape index: {}]
  %s2 = inlined_call_operand.hbm [shape: f32[32,128], index: 2, kind: input, shape index: {}]
  %s3 = inlined_call_operand.hbm [shape: bf16[128,128], index: 3, kind: input, shape index: {}]
  %s4 = inlined_call_operand.hbm [shape: bf16[128,128], index: 4, kind: input, shape index: {}]
  %s5 = inlined_call_operand.vmem [shape: f32[1,128], index: 5, kind: input, shape index: {}]
  %s6 = inlined_call_operand.hbm [shape: bf16[128,128], index: 6, kind: input, shape index: {}]
  %s7 = inlined_call_operand.vmem [shape: f32[1,128], index: 7, kind: input, shape index: {}]
  %s8 = inlined_call_operand.hbm [shape: bf16[128,256], index: 8, kind: input, shape index: {}]
  %s9 = inlined_call_operand.vmem [shape: f32[1,256], index: 9, kind: input, shape index: {}]
  %s10 = inlined_call_operand.hbm [shape: bf16[128,128], index: 10, kind: input, shape index: {}]
  %s11 = inlined_call_operand.hbm [shape: bf16[128,128], index: 11, kind: input, shape index: {}]
  %s12 = inlined_call_operand.vmem [shape: f32[1,128], index: 12, kind: input, shape index: {}]
  %s13 = inlined_call_operand.hbm [shape: bf16[128,128], index: 13, kind: input, shape index: {}]
  %s14 = inlined_call_operand.vmem [shape: f32[1,128], index: 14, kind: input, shape index: {}]
  %s15 = inlined_call_operand.hbm [shape: bf16[128,128], index: 15, kind: input, shape index: {}]
  %s16 = inlined_call_operand.vmem [shape: f32[1,128], index: 16, kind: input, shape index: {}]
  %s17 = inlined_call_operand.hbm [shape: f32[32,128], index: 17, kind: output, shape index: {0}]
  %s18 = inlined_call_operand.hbm [shape: f32[32,128], index: 18, kind: output, shape index: {1}]
  %s19 = inlined_call_operand.hbm [shape: f32[32,128], index: 19, kind: output, shape index: {2}]
  %20 = xla_tuple %s17, %s18, %s19
  %s21 = sld [smem:[#allocation0]]
  $region138: #{tpu_custom_call.1} parent=0
    _
  %s23 = ssub.s32 1, %s21
  %s24 = scalar_select 0, %s23, %s21
  $region1: #{tpu_custom_call.1} parent=0
    #allocation2 [shape = 'u8[8192]{0}', space=vmem, size = 0x2000, scoped, tag = 'input window, operand 0, single buffered']
    #allocation3 [shape = 's32[1]{0}', space=sflag, size = 0x4, scoped, tag = 'scoped memory for tpu_custom_call.1']
    #allocation4 [shape = 's32[1]{0}', space=sflag, size = 0x4, scoped, tag = 'scoped memory for tpu_custom_call.1']
    #allocation5 [shape = 'u8[8192]{0}', space=vmem, size = 0x2000, scoped, tag = 'input window, operand 1, single buffered']
    #allocation6 [shape = 's32[1]{0}', space=sflag, size = 0x4, scoped, tag = 'scoped memory for tpu_custom_call.1']
    #allocation7 [shape = 'u8[16384]{0}', space=vmem, size = 0x4000, scoped, tag = 'input window, operand 2, single buffered']
    #allocation8 [shape = 'u8[32768]{0}', space=vmem, size = 0x8000, scoped, tag = 'input window, operand 3, single buffered']
    #allocation9 [shape = 's32[1]{0}', space=sflag, size = 0x4, scoped, tag = 'scoped memory for tpu_custom_call.1']
    #allocation10 [shape = 'u8[32768]{0}', space=vmem, size = 0x8000, scoped, tag = 'input window, operand 4, single buffered']
    #allocation11 [shape = 'u8[32768]{0}', space=vmem, size = 0x8000, scoped, tag = 'input window, operand 6, single buffered']
    #allocation12 [shape = 's32[1]{0}', space=sflag, size = 0x4, scoped, tag = 'scoped memory for tpu_custom_call.1']
    #allocation13 [shape = 'u8[65536]{0}', space=vmem, size = 0x10000, scoped, tag = 'input window, operand 8, single buffered']
    #allocation14 [shape = 'u8[32768]{0}', space=vmem, size = 0x8000, scoped, tag = 'input window, operand 10, single buffered']
    #allocation15 [shape = 's32[1]{0}', space=sflag, size = 0x4, scoped, tag = 'scoped memory for tpu_custom_call.1']
    #allocation16 [shape = 'u8[32768]{0}', space=vmem, size = 0x8000, scoped, tag = 'input window, operand 11, single buffered']
    #allocation17 [shape = 'u8[32768]{0}', space=vmem, size = 0x8000, scoped, tag = 'input window, operand 13, single buffered']
    #allocation18 [shape = 's32[1]{0}', space=sflag, size = 0x4, scoped, tag = 'scoped memory for tpu_custom_call.1']
    #allocation19 [shape = 'u8[32768]{0}', space=vmem, size = 0x8000, scoped, tag = 'input window, operand 15, single buffered']
    #allocation20 [shape = 'u8[16384]{0}', space=vmem, size = 0x4000, scoped, tag = 'output window, operand 0, single buffered']
    #allocation21 [shape = 'u8[16384]{0}', space=vmem, size = 0x4000, scoped, tag = 'output window, operand 1, single buffered']
    #allocation22 [shape = 's32[1]{0}', space=sflag, size = 0x4, scoped, tag = 'scoped memory for tpu_custom_call.1']
    #allocation23 [shape = 'u8[16384]{0}', space=vmem, size = 0x4000, scoped, tag = 'output window, operand 2, single buffered']
    %25 = vsyncpa [#allocation3], 0
    %26 = vsyncpa [#allocation6], 0
    %27 = vsyncpa [#allocation9], 0
    %28 = vsyncpa [#allocation12], 0
    %29 = vsyncpa [#allocation15], 0
    %30 = vsyncpa [#allocation18], 0
    %31 = vsyncpa [#allocation4], 0
    %32 = vsyncpa [#allocation22], 0
    // Predicated region
    $region2: #{tpu_custom_call.1} parent=1 // pred_check
      _
    $region3: #{tpu_custom_call.1} parent=1 // pred_check_branch
      %34 = sbr.rel (0) target = $region5
    $region4: #{tpu_custom_call.1} parent=1 // pred_region
      %s36 = ssub.s32 256, 256
      %37 = vsyncadd [#allocation3], %s36
      %s38 = sshll.u32 [#allocation2], 4
      %s39 = int_to_ptr.vmem [resolvable:$true] %s38
      %44 = dma.hbm_to_vmem [thread:$0]  %s0, 256, %s39, [#allocation3], 64, 64, 4
    $region5: #{tpu_custom_call.1} parent=1 // pred_fallthru
      _
    // Predicated region
    $region6: #{tpu_custom_call.1} parent=1 // pred_check
      _
    $region7: #{tpu_custom_call.1} parent=1 // pred_check_branch
      %46 = sbr.rel (0) target = $region9
    $region8: #{tpu_custom_call.1} parent=1 // pred_region
      %s48 = ssub.s32 256, 256
      %49 = vsyncadd [#allocation6], %s48
      %s50 = sshll.u32 [#allocation5], 4
      %s51 = int_to_ptr.vmem [resolvable:$true] %s50
      %56 = dma.hbm_to_vmem [thread:$0]  %s1, 256, %s51, [#allocation6], 64, 64, 4
    $region9: #{tpu_custom_call.1} parent=1 // pred_fallthru
      _
    // Predicated region
    $region10: #{tpu_custom_call.1} parent=1 // pred_check
      _
    $region11: #{tpu_custom_call.1} parent=1 // pred_check_branch
      %58 = sbr.rel (0) target = $region13
    $region12: #{tpu_custom_call.1} parent=1 // pred_region
      %s60 = ssub.s32 512, 512
      %61 = vsyncadd [#allocation6], %s60
      %s62 = sshll.u32 [#allocation7], 4
      %s63 = int_to_ptr.vmem [resolvable:$true] %s62
      %68 = dma.hbm_to_vmem [thread:$0]  %s2, 512, %s63, [#allocation6], 128, 128, 8
    $region13: #{tpu_custom_call.1} parent=1 // pred_fallthru
      _
    // Predicated region
    $region14: #{tpu_custom_call.1} parent=1 // pred_check
      _
    $region15: #{tpu_custom_call.1} parent=1 // pred_check_branch
      %70 = sbr.rel (0) target = $region17
    $region16: #{tpu_custom_call.1} parent=1 // pred_region
      %s72 = ssub.s32 1024, 1024
      %73 = vsyncadd [#allocation9], %s72
      %s74 = sshll.u32 [#allocation8], 4
      %s75 = int_to_ptr.vmem [resolvable:$true] %s74
      %80 = dma.hbm_to_vmem [thread:$0]  %s3, 1024, %s75, [#allocation9], 64, 64, 4
    $region17: #{tpu_custom_call.1} parent=1 // pred_fallthru
      _
    // Predicated region
    $region18: #{tpu_custom_call.1} parent=1 // pred_check
      _
    $region19: #{tpu_custom_call.1} parent=1 // pred_check_branch
      %82 = sbr.rel (0) target = $region21
    $region20: #{tpu_custom_call.1} parent=1 // pred_region
      %s84 = ssub.s32 1024, 1024
      %85 = vsyncadd [#allocation9], %s84
      %s86 = sshll.u32 [#allocation10], 4
      %s87 = int_to_ptr.vmem [resolvable:$true] %s86
      %92 = dma.hbm_to_vmem [thread:$0]  %s4, 1024, %s87, [#allocation9], 64, 64, 4
    $region21: #{tpu_custom_call.1} parent=1 // pred_fallthru
      _
    // Predicated region
    $region22: #{tpu_custom_call.1} parent=1 // pred_check
      _
    $region23: #{tpu_custom_call.1} parent=1 // pred_check_branch
      %94 = sbr.rel (0) target = $region25
    $region24: #{tpu_custom_call.1} parent=1 // pred_region
      _
    $region25: #{tpu_custom_call.1} parent=1 // pred_fallthru
      _
    // Predicated region
    $region26: #{tpu_custom_call.1} parent=1 // pred_check
      _
    $region27: #{tpu_custom_call.1} parent=1 // pred_check_branch
      %96 = sbr.rel (0) target = $region29
    $region28: #{tpu_custom_call.1} parent=1 // pred_region
      %s98 = ssub.s32 1024, 1024
      %99 = vsyncadd [#allocation12], %s98
      %s100 = sshll.u32 [#allocation11], 4
      %s101 = int_to_ptr.vmem [resolvable:$true] %s100
      %106 = dma.hbm_to_vmem [thread:$0]  %s6, 1024, %s101, [#allocation12], 64, 64, 4
    $region29: #{tpu_custom_call.1} parent=1 // pred_fallthru
      _
    // Predicated region
    $region30: #{tpu_custom_call.1} parent=1 // pred_check
      _
    $region31: #{tpu_custom_call.1} parent=1 // pred_check_branch
      %108 = sbr.rel (0) target = $region33
    $region32: #{tpu_custom_call.1} parent=1 // pred_region
      _
    $region33: #{tpu_custom_call.1} parent=1 // pred_fallthru
      _
    // Predicated region
    $region34: #{tpu_custom_call.1} parent=1 // pred_check
      _
    $region35: #{tpu_custom_call.1} parent=1 // pred_check_branch
      %110 = sbr.rel (0) target = $region37
    $region36: #{tpu_custom_call.1} parent=1 // pred_region
      %s112 = ssub.s32 2048, 2048
      %113 = vsyncadd [#allocation12], %s112
      %s114 = sshll.u32 [#allocation13], 4
      %s115 = int_to_ptr.vmem [resolvable:$true] %s114
      %120 = dma.hbm_to_vmem [thread:$0]  %s8, 2048, %s115, [#allocation12], 128, 128, 8
    $region37: #{tpu_custom_call.1} parent=1 // pred_fallthru
      _
    // Predicated region
    $region38: #{tpu_custom_call.1} parent=1 // pred_check
      _
    $region39: #{tpu_custom_call.1} parent=1 // pred_check_branch
      %122 = sbr.rel (0) target = $region41
    $region40: #{tpu_custom_call.1} parent=1 // pred_region
      _
    $region41: #{tpu_custom_call.1} parent=1 // pred_fallthru
      _
    // Predicated region
    $region42: #{tpu_custom_call.1} parent=1 // pred_check
      _
    $region43: #{tpu_custom_call.1} parent=1 // pred_check_branch
      %124 = sbr.rel (0) target = $region45
    $region44: #{tpu_custom_call.1} parent=1 // pred_region
      %s126 = ssub.s32 1024, 1024
      %127 = vsyncadd [#allocation15], %s126
      %s128 = sshll.u32 [#allocation14], 4
      %s129 = int_to_ptr.vmem [resolvable:$true] %s128
      %134 = dma.hbm_to_vmem [thread:$0]  %s10, 1024, %s129, [#allocation15], 64, 64, 4
    $region45: #{tpu_custom_call.1} parent=1 // pred_fallthru
      _
    // Predicated region
    $region46: #{tpu_custom_call.1} parent=1 // pred_check
      _
    $region47: #{tpu_custom_call.1} parent=1 // pred_check_branch
      %136 = sbr.rel (0) target = $region49
    $region48: #{tpu_custom_call.1} parent=1 // pred_region
      %s138 = ssub.s32 1024, 1024
      %139 = vsyncadd [#allocation15], %s138
      %s140 = sshll.u32 [#allocation16], 4
      %s141 = int_to_ptr.vmem [resolvable:$true] %s140
      %146 = dma.hbm_to_vmem [thread:$0]  %s11, 1024, %s141, [#allocation15], 64, 64, 4
    $region49: #{tpu_custom_call.1} parent=1 // pred_fallthru
      _
    // Predicated region
    $region50: #{tpu_custom_call.1} parent=1 // pred_check
      _
    $region51: #{tpu_custom_call.1} parent=1 // pred_check_branch
      %148 = sbr.rel (0) target = $region53
    $region52: #{tpu_custom_call.1} parent=1 // pred_region
      _
    $region53: #{tpu_custom_call.1} parent=1 // pred_fallthru
      _
    // Predicated region
    $region54: #{tpu_custom_call.1} parent=1 // pred_check
      _
    $region55: #{tpu_custom_call.1} parent=1 // pred_check_branch
      %150 = sbr.rel (0) target = $region57
    $region56: #{tpu_custom_call.1} parent=1 // pred_region
      %s152 = ssub.s32 1024, 1024
      %153 = vsyncadd [#allocation18], %s152
      %s154 = sshll.u32 [#allocation17], 4
      %s155 = int_to_ptr.vmem [resolvable:$true] %s154
      %160 = dma.hbm_to_vmem [thread:$0]  %s13, 1024, %s155, [#allocation18], 64, 64, 4
    $region57: #{tpu_custom_call.1} parent=1 // pred_fallthru
      _
    // Predicated region
    $region58: #{tpu_custom_call.1} parent=1 // pred_check
      _
    $region59: #{tpu_custom_call.1} parent=1 // pred_check_branch
      %162 = sbr.rel (0) target = $region61
    $region60: #{tpu_custom_call.1} parent=1 // pred_region
      _
    $region61: #{tpu_custom_call.1} parent=1 // pred_fallthru
      _
    // Predicated region
    $region62: #{tpu_custom_call.1} parent=1 // pred_check
      _
    $region63: #{tpu_custom_call.1} parent=1 // pred_check_branch
      %164 = sbr.rel (0) target = $region65
    $region64: #{tpu_custom_call.1} parent=1 // pred_region
      %s166 = ssub.s32 1024, 1024
      %167 = vsyncadd [#allocation18], %s166
      %s168 = sshll.u32 [#allocation19], 4
      %s169 = int_to_ptr.vmem [resolvable:$true] %s168
      %174 = dma.hbm_to_vmem [thread:$0]  %s15, 1024, %s169, [#allocation18], 64, 64, 4
    $region65: #{tpu_custom_call.1} parent=1 // pred_fallthru
      _
    // Predicated region
    $region66: #{tpu_custom_call.1} parent=1 // pred_check
      _
    $region67: #{tpu_custom_call.1} parent=1 // pred_check_branch
      %176 = sbr.rel (0) target = $region69
    $region68: #{tpu_custom_call.1} parent=1 // pred_region
      _
    $region69: #{tpu_custom_call.1} parent=1 // pred_fallthru
      _
    // Predicated region
    $region70: #{tpu_custom_call.1} parent=1 // pred_check
      _
    $region71: #{tpu_custom_call.1} parent=1 // pred_check_branch
      %178 = sbr.rel (0) target = $region73
    $region72: #{tpu_custom_call.1} parent=1 // pred_region
      %179 = dma.done [#allocation3], 256
    $region73: #{tpu_custom_call.1} parent=1 // pred_fallthru
      _
    // Predicated region
    $region74: #{tpu_custom_call.1} parent=1 // pred_check
      _
    $region75: #{tpu_custom_call.1} parent=1 // pred_check_branch
      %181 = sbr.rel (0) target = $region77
    $region76: #{tpu_custom_call.1} parent=1 // pred_region
      %182 = dma.done [#allocation6], 256
    $region77: #{tpu_custom_call.1} parent=1 // pred_fallthru
      _
    // Predicated region
    $region78: #{tpu_custom_call.1} parent=1 // pred_check
      _
    $region79: #{tpu_custom_call.1} parent=1 // pred_check_branch
      %184 = sbr.rel (0) target = $region81
    $region80: #{tpu_custom_call.1} parent=1 // pred_region
      %185 = dma.done [#allocation6], 512
    $region81: #{tpu_custom_call.1} parent=1 // pred_fallthru
      _
    // Predicated region
    $region82: #{tpu_custom_call.1} parent=1 // pred_check
      _
    $region83: #{tpu_custom_call.1} parent=1 // pred_check_branch
      %187 = sbr.rel (0) target = $region85
    $region84: #{tpu_custom_call.1} parent=1 // pred_region
      %188 = dma.done [#allocation9], 1024
    $region85: #{tpu_custom_call.1} parent=1 // pred_fallthru
      _
    // Predicated region
    $region86: #{tpu_custom_call.1} parent=1 // pred_check
      _
    $region87: #{tpu_custom_call.1} parent=1 // pred_check_branch
      %190 = sbr.rel (0) target = $region89
    $region88: #{tpu_custom_call.1} parent=1 // pred_region
      %191 = dma.done [#allocation9], 1024
    $region89: #{tpu_custom_call.1} parent=1 // pred_fallthru
      _
    // Predicated region
    $region90: #{tpu_custom_call.1} parent=1 // pred_check
      _
    $region91: #{tpu_custom_call.1} parent=1 // pred_check_branch
      %193 = sbr.rel (0) target = $region93
    $region92: #{tpu_custom_call.1} parent=1 // pred_region
      %194 = dma.done [#allocation12], 1024
    $region93: #{tpu_custom_call.1} parent=1 // pred_fallthru
      _
    // Predicated region
    $region94: #{tpu_custom_call.1} parent=1 // pred_check
      _
    $region95: #{tpu_custom_call.1} parent=1 // pred_check_branch
      %196 = sbr.rel (0) target = $region97
    $region96: #{tpu_custom_call.1} parent=1 // pred_region
      %197 = dma.done [#allocation12], 2048
    $region97: #{tpu_custom_call.1} parent=1 // pred_fallthru
      _
    // Predicated region
    $region98: #{tpu_custom_call.1} parent=1 // pred_check
      _
    $region99: #{tpu_custom_call.1} parent=1 // pred_check_branch
      %199 = sbr.rel (0) target = $region101
    $region100: #{tpu_custom_call.1} parent=1 // pred_region
      %200 = dma.done [#allocation15], 1024
    $region101: #{tpu_custom_call.1} parent=1 // pred_fallthru
      _
    // Predicated region
    $region102: #{tpu_custom_call.1} parent=1 // pred_check
      _
    $region103: #{tpu_custom_call.1} parent=1 // pred_check_branch
      %202 = sbr.rel (0) target = $region105
    $region104: #{tpu_custom_call.1} parent=1 // pred_region
      %203 = dma.done [#allocation15], 1024
    $region105: #{tpu_custom_call.1} parent=1 // pred_fallthru
      _
    // Predicated region
    $region106: #{tpu_custom_call.1} parent=1 // pred_check
      _
    $region107: #{tpu_custom_call.1} parent=1 // pred_check_branch
      %205 = sbr.rel (0) target = $region109
    $region108: #{tpu_custom_call.1} parent=1 // pred_region
      %206 = dma.done [#allocation18], 1024
    $region109: #{tpu_custom_call.1} parent=1 // pred_fallthru
      _
    // Predicated region
    $region110: #{tpu_custom_call.1} parent=1 // pred_check
      _
    $region111: #{tpu_custom_call.1} parent=1 // pred_check_branch
      %208 = sbr.rel (0) target = $region113
    $region112: #{tpu_custom_call.1} parent=1 // pred_region
      %209 = dma.done [#allocation18], 1024
    $region113: #{tpu_custom_call.1} parent=1 // pred_fallthru
      _
    %v211 = vld [vmem:[#allocation2] sm:$0xf]
    %v212 = vld [vmem:[#allocation2 + $0x4] sm:$0xf]
    %v213 = vld [vmem:[#allocation2 + $0x8] sm:$0xf]
    %v214 = vld [vmem:[#allocation2 + $0xc] sm:$0xf]
    %v215 = vld [vmem:[#allocation8] sm:$0xf]
    %v216 = vld [vmem:[#allocation8 + $0x4] sm:$0xf]
    %v217 = vld [vmem:[#allocation8 + $0x8] sm:$0xf]
    %v218 = vld [vmem:[#allocation8 + $0xc] sm:$0xf]
    %v219 = vld [vmem:[#allocation8 + $0x10] sm:$0xf]
    %v220 = vld [vmem:[#allocation8 + $0x14] sm:$0xf]
    %v221 = vld [vmem:[#allocation8 + $0x18] sm:$0xf]
    %v222 = vld [vmem:[#allocation8 + $0x1c] sm:$0xf]
    %v223 = vld [vmem:[#allocation8 + $0x20] sm:$0xf]
    %v224 = vld [vmem:[#allocation8 + $0x24] sm:$0xf]
    %v225 = vld [vmem:[#allocation8 + $0x28] sm:$0xf]
    %v226 = vld [vmem:[#allocation8 + $0x2c] sm:$0xf]
    %v227 = vld [vmem:[#allocation8 + $0x30] sm:$0xf]
    %v228 = vld [vmem:[#allocation8 + $0x34] sm:$0xf]
    %v229 = vld [vmem:[#allocation8 + $0x38] sm:$0xf]
    %v230 = vld [vmem:[#allocation8 + $0x3c] sm:$0xf]
    %v231 = vld [vmem:[#allocation5] sm:$0xf]
    %v232 = vld [vmem:[#allocation5 + $0x4] sm:$0xf]
    %v233 = vld [vmem:[#allocation5 + $0x8] sm:$0xf]
    %v234 = vld [vmem:[#allocation5 + $0xc] sm:$0xf]
    %v235 = vld [vmem:[#allocation10] sm:$0xf]
    %v236 = vld [vmem:[#allocation10 + $0x4] sm:$0xf]
    %v237 = vld [vmem:[#allocation10 + $0x8] sm:$0xf]
    %v238 = vld [vmem:[#allocation10 + $0xc] sm:$0xf]
    %v239 = vld [vmem:[#allocation10 + $0x10] sm:$0xf]
    %v240 = vld [vmem:[#allocation10 + $0x14] sm:$0xf]
    %v241 = vld [vmem:[#allocation10 + $0x18] sm:$0xf]
    %v242 = vld [vmem:[#allocation10 + $0x1c] sm:$0xf]
    %v243 = vld [vmem:[#allocation10 + $0x20] sm:$0xf]
    %v244 = vld [vmem:[#allocation10 + $0x24] sm:$0xf]
    %v245 = vld [vmem:[#allocation10 + $0x28] sm:$0xf]
    %v246 = vld [vmem:[#allocation10 + $0x2c] sm:$0xf]
    %v247 = vld [vmem:[#allocation10 + $0x30] sm:$0xf]
    %v248 = vld [vmem:[#allocation10 + $0x34] sm:$0xf]
    %v249 = vld [vmem:[#allocation10 + $0x38] sm:$0xf]
    %v250 = vld [vmem:[#allocation10 + $0x3c] sm:$0xf]
    %v255 = vunpack.c.l.b16 %v231
    %v256 = vunpack.c.l.b16 %v232
    %v257 = vunpack.c.l.b16 %v233
    %v258 = vunpack.c.l.b16 %v234
    %v259 = vpack.c.b16 %v256, %v255
    %v260 = vpack.c.b16 %v258, %v257
    %v279 = vunpack.c.l.b16 %v235
    %v280 = vunpack.c.l.b16 %v236
    %v281 = vunpack.c.l.b16 %v237
    %v282 = vunpack.c.l.b16 %v238
    %v283 = vunpack.c.l.b16 %v239
    %v284 = vunpack.c.l.b16 %v240
    %v285 = vunpack.c.l.b16 %v241
    %v286 = vunpack.c.l.b16 %v242
    %v287 = vunpack.c.l.b16 %v243
    %v288 = vunpack.c.l.b16 %v244
    %v289 = vunpack.c.l.b16 %v245
    %v290 = vunpack.c.l.b16 %v246
    %v291 = vunpack.c.l.b16 %v247
    %v292 = vunpack.c.l.b16 %v248
    %v293 = vunpack.c.l.b16 %v249
    %v294 = vunpack.c.l.b16 %v250
    %v295 = vpack.c.b16 %v280, %v279
    %v296 = vpack.c.b16 %v282, %v281
    %v297 = vpack.c.b16 %v284, %v283
    %v298 = vpack.c.b16 %v286, %v285
    %v299 = vpack.c.b16 %v288, %v287
    %v300 = vpack.c.b16 %v290, %v289
    %v301 = vpack.c.b16 %v292, %v291
    %v302 = vpack.c.b16 %v294, %v293
    %311 = vmatprep.subr.bf16.mxu0 0
    %312 = vmatpush1.bf16.msra.mxu0 %v295
    %313 = vmatprep.subr.bf16.mxu0 0
    %314 = vmatpush1.bf16.msra.mxu0 %v296
    %315 = vmatprep.subr.bf16.mxu0 0
    %316 = vmatpush1.bf16.msra.mxu0 %v297
    %317 = vmatprep.subr.bf16.mxu0 0
    %318 = vmatpush1.bf16.msra.mxu0 %v298
    %319 = vmatprep.subr.bf16.mxu0 0
    %320 = vmatpush1.bf16.msra.mxu0 %v299
    %321 = vmatprep.subr.bf16.mxu0 0
    %322 = vmatpush1.bf16.msra.mxu0 %v300
    %323 = vmatprep.subr.bf16.mxu0 0
    %324 = vmatpush1.bf16.msra.mxu0 %v301
    %325 = vmatprep.subr.bf16.mxu0 0
    %326 = vmatpush1.bf16.msra.mxu0 %v302
    %327 = vmatprep.subr.bf16.mxu0 0
    %328 = vmatpush1.bf16.msra.mxu0 0
    %329 = vmatprep.subr.bf16.mxu0 0
    %330 = vmatpush1.bf16.msra.mxu0 0
    %331 = vmatprep.subr.bf16.mxu0 0
    %332 = vmatpush1.bf16.msra.mxu0 0
    %333 = vmatprep.subr.bf16.mxu0 0
    %334 = vmatpush1.bf16.msra.mxu0 0
    %335 = vmatprep.subr.bf16.mxu0 0
    %336 = vmatpush1.bf16.msra.mxu0 0
    %337 = vmatprep.subr.bf16.mxu0 0
    %338 = vmatpush1.bf16.msra.mxu0 0
    %339 = vmatprep.subr.bf16.mxu0 0
    %340 = vmatpush1.bf16.msra.mxu0 0
    %341 = vmatprep.subr.bf16.mxu0 0
    %342 = vmatpush1.bf16.msra.mxu0 0
    %343 = vmatprep.mubr.bf16.mxu0 0
    %344 = vmatmul.mubr.bf16.gmra.mrb[0].mxu0 %v259
    %v345 = vpop.f32.mrb[0].mxu0
    %v346 = vadd.f32 0.0, %v345
    %v347 = vpop.f32.mrb[0].mxu0
    %v348 = vpop.f32.mrb[0].mxu0
    %v349 = vadd.f32 0.0, %v348
    %v350 = vpop.f32.mrb[0].mxu0
    %351 = vmatprep.mubr.bf16.mxu0 0
    %352 = vmatmul.mubr.bf16.gmra.mrb[0].mxu0 %v260
    %v353 = vpop.f32.mrb[0].mxu0
    %v354 = vadd.f32 0.0, %v353
    %v355 = vpop.f32.mrb[0].mxu0
    %v356 = vpop.f32.mrb[0].mxu0
    %v357 = vadd.f32 0.0, %v356
    %v358 = vpop.f32.mrb[0].mxu0
    %359 = vdwg.mxu0
    %v364 = vunpack.c.l.b16 %v211
    %v365 = vunpack.c.l.b16 %v212
    %v366 = vunpack.c.l.b16 %v213
    %v367 = vunpack.c.l.b16 %v214
    %v368 = vpack.c.b16 %v365, %v364
    %v369 = vpack.c.b16 %v367, %v366
    %v388 = vunpack.c.l.b16 %v215
    %v389 = vunpack.c.l.b16 %v216
    %v390 = vunpack.c.l.b16 %v217
    %v391 = vunpack.c.l.b16 %v218
    %v392 = vunpack.c.l.b16 %v219
    %v393 = vunpack.c.l.b16 %v220
    %v394 = vunpack.c.l.b16 %v221
    %v395 = vunpack.c.l.b16 %v222
    %v396 = vunpack.c.l.b16 %v223
    %v397 = vunpack.c.l.b16 %v224
    %v398 = vunpack.c.l.b16 %v225
    %v399 = vunpack.c.l.b16 %v226
    %v400 = vunpack.c.l.b16 %v227
    %v401 = vunpack.c.l.b16 %v228
    %v402 = vunpack.c.l.b16 %v229
    %v403 = vunpack.c.l.b16 %v230
    %v404 = vpack.c.b16 %v389, %v388
    %v405 = vpack.c.b16 %v391, %v390
    %v406 = vpack.c.b16 %v393, %v392
    %v407 = vpack.c.b16 %v395, %v394
    %v408 = vpack.c.b16 %v397, %v396
    %v409 = vpack.c.b16 %v399, %v398
    %v410 = vpack.c.b16 %v401, %v400
    %v411 = vpack.c.b16 %v403, %v402
    %420 = vmatprep.subr.bf16.mxu0 0
    %421 = vmatpush1.bf16.msra.mxu0 %v404
    %422 = vmatprep.subr.bf16.mxu0 0
    %423 = vmatpush1.bf16.msra.mxu0 %v405
    %424 = vmatprep.subr.bf16.mxu0 0
    %425 = vmatpush1.bf16.msra.mxu0 %v406
    %426 = vmatprep.subr.bf16.mxu0 0
    %427 = vmatpush1.bf16.msra.mxu0 %v407
    %428 = vmatprep.subr.bf16.mxu0 0
    %429 = vmatpush1.bf16.msra.mxu0 %v408
    %430 = vmatprep.subr.bf16.mxu0 0
    %431 = vmatpush1.bf16.msra.mxu0 %v409
    %432 = vmatprep.subr.bf16.mxu0 0
    %433 = vmatpush1.bf16.msra.mxu0 %v410
    %434 = vmatprep.subr.bf16.mxu0 0
    %435 = vmatpush1.bf16.msra.mxu0 %v411
    %436 = vmatprep.subr.bf16.mxu0 0
    %437 = vmatpush1.bf16.msra.mxu0 0
    %438 = vmatprep.subr.bf16.mxu0 0
    %439 = vmatpush1.bf16.msra.mxu0 0
    %440 = vmatprep.subr.bf16.mxu0 0
    %441 = vmatpush1.bf16.msra.mxu0 0
    %442 = vmatprep.subr.bf16.mxu0 0
    %443 = vmatpush1.bf16.msra.mxu0 0
    %444 = vmatprep.subr.bf16.mxu0 0
    %445 = vmatpush1.bf16.msra.mxu0 0
    %446 = vmatprep.subr.bf16.mxu0 0
    %447 = vmatpush1.bf16.msra.mxu0 0
    %448 = vmatprep.subr.bf16.mxu0 0
    %449 = vmatpush1.bf16.msra.mxu0 0
    %450 = vmatprep.subr.bf16.mxu0 0
    %451 = vmatpush1.bf16.msra.mxu0 0
    %452 = vmatprep.mubr.bf16.mxu0 0
    %453 = vmatmul.mubr.bf16.gmra.mrb[0].mxu0 %v368
    %v454 = vpop.f32.mrb[0].mxu0
    %v455 = vadd.f32 %v346, %v454
    %v456 = vpop.f32.mrb[0].mxu0
    %v457 = vpop.f32.mrb[0].mxu0
    %v458 = vadd.f32 %v349, %v457
    %v459 = vpop.f32.mrb[0].mxu0
    %460 = vmatprep.mubr.bf16.mxu0 0
    %461 = vmatmul.mubr.bf16.gmra.mrb[0].mxu0 %v369
    %v462 = vpop.f32.mrb[0].mxu0
    %v463 = vadd.f32 %v354, %v462
    %v464 = vpop.f32.mrb[0].mxu0
    %v465 = vpop.f32.mrb[0].mxu0
    %v466 = vadd.f32 %v357, %v465
    %v467 = vpop.f32.mrb[0].mxu0
    %468 = vdwg.mxu0
    %v469 = vld [vmem:[%s5] sm:$0x1]
    %v471 = vlaneseq
    %v472 = vshrl.u32 %v471, 7
    %v473 = vsub.s32 0, %v472
    %v474 = vrot.slane %v469, %v473
    %v476 = vadd.f32 %v455, %v474
    %v477 = vadd.f32 %v458, %v474
    %v478 = vadd.f32 %v463, %v474
    %v479 = vadd.f32 %v466, %v474
    %v480 = vmax.f32 %v476, 0.0
    %v481 = vmax.f32 %v477, 0.0
    %v482 = vmax.f32 %v478, 0.0
    %v483 = vmax.f32 %v479, 0.0
    %v484 = vpack.c.bf16 %v481, %v480
    %v485 = vpack.c.bf16 %v483, %v482
    %v486 = vld [vmem:[#allocation11] sm:$0xf]
    %v487 = vld [vmem:[#allocation11 + $0x4] sm:$0xf]
    %v488 = vld [vmem:[#allocation11 + $0x8] sm:$0xf]
    %v489 = vld [vmem:[#allocation11 + $0xc] sm:$0xf]
    %v490 = vld [vmem:[#allocation11 + $0x10] sm:$0xf]
    %v491 = vld [vmem:[#allocation11 + $0x14] sm:$0xf]
    %v492 = vld [vmem:[#allocation11 + $0x18] sm:$0xf]
    %v493 = vld [vmem:[#allocation11 + $0x1c] sm:$0xf]
    %v494 = vld [vmem:[#allocation11 + $0x20] sm:$0xf]
    %v495 = vld [vmem:[#allocation11 + $0x24] sm:$0xf]
    %v496 = vld [vmem:[#allocation11 + $0x28] sm:$0xf]
    %v497 = vld [vmem:[#allocation11 + $0x2c] sm:$0xf]
    %v498 = vld [vmem:[#allocation11 + $0x30] sm:$0xf]
    %v499 = vld [vmem:[#allocation11 + $0x34] sm:$0xf]
    %v500 = vld [vmem:[#allocation11 + $0x38] sm:$0xf]
    %v501 = vld [vmem:[#allocation11 + $0x3c] sm:$0xf]
    %v502 = vld [vmem:[%s7] sm:$0x1]
    %v504 = vlaneseq
    %v505 = vshrl.u32 %v504, 7
    %v506 = vsub.s32 0, %v505
    %v507 = vrot.slane %v502, %v506
    %v525 = vunpack.c.l.b16 %v486
    %v526 = vunpack.c.l.b16 %v487
    %v527 = vunpack.c.l.b16 %v488
    %v528 = vunpack.c.l.b16 %v489
    %v529 = vunpack.c.l.b16 %v490
    %v530 = vunpack.c.l.b16 %v491
    %v531 = vunpack.c.l.b16 %v492
    %v532 = vunpack.c.l.b16 %v493
    %v533 = vunpack.c.l.b16 %v494
    %v534 = vunpack.c.l.b16 %v495
    %v535 = vunpack.c.l.b16 %v496
    %v536 = vunpack.c.l.b16 %v497
    %v537 = vunpack.c.l.b16 %v498
    %v538 = vunpack.c.l.b16 %v499
    %v539 = vunpack.c.l.b16 %v500
    %v540 = vunpack.c.l.b16 %v501
    %v541 = vpack.c.b16 %v526, %v525
    %v542 = vpack.c.b16 %v528, %v527
    %v543 = vpack.c.b16 %v530, %v529
    %v544 = vpack.c.b16 %v532, %v531
    %v545 = vpack.c.b16 %v534, %v533
    %v546 = vpack.c.b16 %v536, %v535
    %v547 = vpack.c.b16 %v538, %v537
    %v548 = vpack.c.b16 %v540, %v539
    %557 = vmatprep.subr.bf16.mxu0 0
    %558 = vmatpush1.bf16.msra.mxu0 %v541
    %559 = vmatprep.subr.bf16.mxu0 0
    %560 = vmatpush1.bf16.msra.mxu0 %v542
    %561 = vmatprep.subr.bf16.mxu0 0
    %562 = vmatpush1.bf16.msra.mxu0 %v543
    %563 = vmatprep.subr.bf16.mxu0 0
    %564 = vmatpush1.bf16.msra.mxu0 %v544
    %565 = vmatprep.subr.bf16.mxu0 0
    %566 = vmatpush1.bf16.msra.mxu0 %v545
    %567 = vmatprep.subr.bf16.mxu0 0
    %568 = vmatpush1.bf16.msra.mxu0 %v546
    %569 = vmatprep.subr.bf16.mxu0 0
    %570 = vmatpush1.bf16.msra.mxu0 %v547
    %571 = vmatprep.subr.bf16.mxu0 0
    %572 = vmatpush1.bf16.msra.mxu0 %v548
    %573 = vmatprep.subr.bf16.mxu0 0
    %574 = vmatpush1.bf16.msra.mxu0 0
    %575 = vmatprep.subr.bf16.mxu0 0
    %576 = vmatpush1.bf16.msra.mxu0 0
    %577 = vmatprep.subr.bf16.mxu0 0
    %578 = vmatpush1.bf16.msra.mxu0 0
    %579 = vmatprep.subr.bf16.mxu0 0
    %580 = vmatpush1.bf16.msra.mxu0 0
    %581 = vmatprep.subr.bf16.mxu0 0
    %582 = vmatpush1.bf16.msra.mxu0 0
    %583 = vmatprep.subr.bf16.mxu0 0
    %584 = vmatpush1.bf16.msra.mxu0 0
    %585 = vmatprep.subr.bf16.mxu0 0
    %586 = vmatpush1.bf16.msra.mxu0 0
    %587 = vmatprep.subr.bf16.mxu0 0
    %588 = vmatpush1.bf16.msra.mxu0 0
    %589 = vmatprep.mubr.bf16.mxu0 0
    %590 = vmatmul.mubr.bf16.gmra.mrb[0].mxu0 %v484
    %v591 = vpop.f32.mrb[0].mxu0
    %v592 = vadd.f32 %v507, %v591
    %v593 = vpop.f32.mrb[0].mxu0
    %v594 = vpop.f32.mrb[0].mxu0
    %v595 = vadd.f32 %v507, %v594
    %v596 = vpop.f32.mrb[0].mxu0
    %597 = vmatprep.mubr.bf16.mxu0 0
    %598 = vmatmul.mubr.bf16.gmra.mrb[0].mxu0 %v485
    %v599 = vpop.f32.mrb[0].mxu0
    %v600 = vadd.f32 %v507, %v599
    %v601 = vpop.f32.mrb[0].mxu0
    %v602 = vpop.f32.mrb[0].mxu0
    %v603 = vadd.f32 %v507, %v602
    %v604 = vpop.f32.mrb[0].mxu0
    %605 = vdwg.mxu0
    %v606 = vmax.f32 %v592, 0.0
    %v607 = vmax.f32 %v595, 0.0
    %v608 = vmax.f32 %v600, 0.0
    %v609 = vmax.f32 %v603, 0.0
    %v610 = vpack.c.bf16 %v607, %v606
    %v611 = vpack.c.bf16 %v609, %v608
    %v612 = vld [vmem:[#allocation13] sm:$0xff]
    %v613 = vld [vmem:[#allocation13 + $0x8] sm:$0xff]
    %v614 = vld [vmem:[#allocation13 + $0x10] sm:$0xff]
    %v615 = vld [vmem:[#allocation13 + $0x18] sm:$0xff]
    %v616 = vld [vmem:[#allocation13 + $0x20] sm:$0xff]
    %v617 = vld [vmem:[#allocation13 + $0x28] sm:$0xff]
    %v618 = vld [vmem:[#allocation13 + $0x30] sm:$0xff]
    %v619 = vld [vmem:[#allocation13 + $0x38] sm:$0xff]
    %v620 = vld [vmem:[#allocation13 + $0x40] sm:$0xff]
    %v621 = vld [vmem:[#allocation13 + $0x48] sm:$0xff]
    %v622 = vld [vmem:[#allocation13 + $0x50] sm:$0xff]
    %v623 = vld [vmem:[#allocation13 + $0x58] sm:$0xff]
    %v624 = vld [vmem:[#allocation13 + $0x60] sm:$0xff]
    %v625 = vld [vmem:[#allocation13 + $0x68] sm:$0xff]
    %v626 = vld [vmem:[#allocation13 + $0x70] sm:$0xff]
    %v627 = vld [vmem:[#allocation13 + $0x78] sm:$0xff]
    %v628 = vld [vmem:[%s9] sm:$0x3]
    %v630 = vlaneseq
    %v631 = vshrl.u32 %v630, 7
    %v632 = vsub.s32 0, %v631
    %v633 = vrot.slane %v628, %v632
    %v634 = vlaneseq
    %v635 = vshrl.u32 %v634, 7
    %v636 = vsub.s32 1, %v635
    %v637 = vrot.slane %v628, %v636
    %v656 = vunpack.c.l.b16 %v612
    %v657 = vunpack.c.h.b16 %v612
    %v658 = vunpack.c.l.b16 %v613
    %v659 = vunpack.c.h.b16 %v613
    %v660 = vunpack.c.l.b16 %v614
    %v661 = vunpack.c.h.b16 %v614
    %v662 = vunpack.c.l.b16 %v615
    %v663 = vunpack.c.h.b16 %v615
    %v664 = vunpack.c.l.b16 %v616
    %v665 = vunpack.c.h.b16 %v616
    %v666 = vunpack.c.l.b16 %v617
    %v667 = vunpack.c.h.b16 %v617
    %v668 = vunpack.c.l.b16 %v618
    %v669 = vunpack.c.h.b16 %v618
    %v670 = vunpack.c.l.b16 %v619
    %v671 = vunpack.c.h.b16 %v619
    %v672 = vunpack.c.l.b16 %v620
    %v673 = vunpack.c.h.b16 %v620
    %v674 = vunpack.c.l.b16 %v621
    %v675 = vunpack.c.h.b16 %v621
    %v676 = vunpack.c.l.b16 %v622
    %v677 = vunpack.c.h.b16 %v622
    %v678 = vunpack.c.l.b16 %v623
    %v679 = vunpack.c.h.b16 %v623
    %v680 = vunpack.c.l.b16 %v624
    %v681 = vunpack.c.h.b16 %v624
    %v682 = vunpack.c.l.b16 %v625
    %v683 = vunpack.c.h.b16 %v625
    %v684 = vunpack.c.l.b16 %v626
    %v685 = vunpack.c.h.b16 %v626
    %v686 = vunpack.c.l.b16 %v627
    %v687 = vunpack.c.h.b16 %v627
    %v688 = vpack.c.b16 %v658, %v656
    %v689 = vpack.c.b16 %v659, %v657
    %v690 = vpack.c.b16 %v662, %v660
    %v691 = vpack.c.b16 %v663, %v661
    %v692 = vpack.c.b16 %v666, %v664
    %v693 = vpack.c.b16 %v667, %v665
    %v694 = vpack.c.b16 %v670, %v668
    %v695 = vpack.c.b16 %v671, %v669
    %v696 = vpack.c.b16 %v674, %v672
    %v697 = vpack.c.b16 %v675, %v673
    %v698 = vpack.c.b16 %v678, %v676
    %v699 = vpack.c.b16 %v679, %v677
    %v700 = vpack.c.b16 %v682, %v680
    %v701 = vpack.c.b16 %v683, %v681
    %v702 = vpack.c.b16 %v686, %v684
    %v703 = vpack.c.b16 %v687, %v685
    %720 = vmatprep.subr.bf16.mxu0 %v689
    %721 = vmatpush1.bf16.msra.mxu0 %v688
    %722 = vmatprep.subr.bf16.mxu0 %v691
    %723 = vmatpush1.bf16.msra.mxu0 %v690
    %724 = vmatprep.subr.bf16.mxu0 %v693
    %725 = vmatpush1.bf16.msra.mxu0 %v692
    %726 = vmatprep.subr.bf16.mxu0 %v695
    %727 = vmatpush1.bf16.msra.mxu0 %v694
    %728 = vmatprep.subr.bf16.mxu0 %v697
    %729 = vmatpush1.bf16.msra.mxu0 %v696
    %730 = vmatprep.subr.bf16.mxu0 %v699
    %731 = vmatpush1.bf16.msra.mxu0 %v698
    %732 = vmatprep.subr.bf16.mxu0 %v701
    %733 = vmatpush1.bf16.msra.mxu0 %v700
    %734 = vmatprep.subr.bf16.mxu0 %v703
    %735 = vmatpush1.bf16.msra.mxu0 %v702
    %736 = vmatprep.subr.bf16.mxu0 0
    %737 = vmatpush1.bf16.msra.mxu0 0
    %738 = vmatprep.subr.bf16.mxu0 0
    %739 = vmatpush1.bf16.msra.mxu0 0
    %740 = vmatprep.subr.bf16.mxu0 0
    %741 = vmatpush1.bf16.msra.mxu0 0
    %742 = vmatprep.subr.bf16.mxu0 0
    %743 = vmatpush1.bf16.msra.mxu0 0
    %744 = vmatprep.subr.bf16.mxu0 0
    %745 = vmatpush1.bf16.msra.mxu0 0
    %746 = vmatprep.subr.bf16.mxu0 0
    %747 = vmatpush1.bf16.msra.mxu0 0
    %748 = vmatprep.subr.bf16.mxu0 0
    %749 = vmatpush1.bf16.msra.mxu0 0
    %750 = vmatprep.subr.bf16.mxu0 0
    %751 = vmatpush1.bf16.msra.mxu0 0
    %752 = vmatprep.mubr.bf16.mxu0 0
    %753 = vmatmul.mubr.bf16.gmra.mrb[0].mxu0 %v610
    %v754 = vpop.f32.mrb[0].mxu0
    %v755 = vadd.f32 %v633, %v754
    %v756 = vpop.f32.mrb[0].mxu0
    %v757 = vadd.f32 %v637, %v756
    %v758 = vpop.f32.mrb[0].mxu0
    %v759 = vadd.f32 %v633, %v758
    %v760 = vpop.f32.mrb[0].mxu0
    %v761 = vadd.f32 %v637, %v760
    %762 = vmatprep.mubr.bf16.mxu0 0
    %763 = vmatmul.mubr.bf16.gmra.mrb[0].mxu0 %v611
    %v764 = vpop.f32.mrb[0].mxu0
    %v765 = vadd.f32 %v633, %v764
    %v766 = vpop.f32.mrb[0].mxu0
    %v767 = vadd.f32 %v637, %v766
    %v768 = vpop.f32.mrb[0].mxu0
    %v769 = vadd.f32 %v633, %v768
    %v770 = vpop.f32.mrb[0].mxu0
    %v771 = vadd.f32 %v637, %v770
    %772 = vdwg.mxu0
    %773 = vst [vmem:[#allocation21] sm:$0xff] %v755
    %774 = vst [vmem:[#allocation21 + $0x8] sm:$0xff] %v759
    %775 = vst [vmem:[#allocation21 + $0x10] sm:$0xff] %v765
    %776 = vst [vmem:[#allocation21 + $0x18] sm:$0xff] %v769
    %777 = vst [vmem:[#allocation23] sm:$0xff] %v757
    %778 = vst [vmem:[#allocation23 + $0x8] sm:$0xff] %v761
    %779 = vst [vmem:[#allocation23 + $0x10] sm:$0xff] %v767
    %780 = vst [vmem:[#allocation23 + $0x18] sm:$0xff] %v771
    %v781 = vld [vmem:[#allocation7] sm:$0xff]
    %v782 = vld [vmem:[#allocation7 + $0x8] sm:$0xff]
    %v783 = vld [vmem:[#allocation7 + $0x10] sm:$0xff]
    %v784 = vld [vmem:[#allocation7 + $0x18] sm:$0xff]
    %v785 = vld [vmem:[#allocation23] sm:$0xff]
    %v786 = vld [vmem:[#allocation23 + $0x8] sm:$0xff]
    %v787 = vld [vmem:[#allocation23 + $0x10] sm:$0xff]
    %v788 = vld [vmem:[#allocation23 + $0x18] sm:$0xff]
    %v789 = vmul.f32 %v785, 0.5
    %v790 = vmul.f32 %v786, 0.5
    %v791 = vmul.f32 %v787, 0.5
    %v792 = vmul.f32 %v788, 0.5
    %v793 = vmul.f32 %v789, 1.442695
    %v794 = vpow.pop %v793
    %v795 = vmul.f32 %v790, 1.442695
    %v796 = vpow.pop %v795
    %v797 = vmul.f32 %v791, 1.442695
    %v798 = vpow.pop %v797
    %v799 = vmul.f32 %v792, 1.442695
    %v800 = vpow.pop %v799
    %v801 = vmul.f32 %v781, %v794
    %v802 = vmul.f32 %v782, %v796
    %v803 = vmul.f32 %v783, %v798
    %v804 = vmul.f32 %v784, %v800
    %v805 = vld [vmem:[#allocation21] sm:$0xff]
    %v806 = vld [vmem:[#allocation21 + $0x8] sm:$0xff]
    %v807 = vld [vmem:[#allocation21 + $0x10] sm:$0xff]
    %v808 = vld [vmem:[#allocation21 + $0x18] sm:$0xff]
    %v809 = vadd.f32 %v801, %v805
    %v810 = vadd.f32 %v802, %v806
    %v811 = vadd.f32 %v803, %v807
    %v812 = vadd.f32 %v804, %v808
    %v813 = vpack.c.bf16 %v810, %v809
    %v814 = vpack.c.bf16 %v812, %v811
    %v815 = vld [vmem:[#allocation14] sm:$0xf]
    %v816 = vld [vmem:[#allocation14 + $0x4] sm:$0xf]
    %v817 = vld [vmem:[#allocation14 + $0x8] sm:$0xf]
    %v818 = vld [vmem:[#allocation14 + $0xc] sm:$0xf]
    %v819 = vld [vmem:[#allocation14 + $0x10] sm:$0xf]
    %v820 = vld [vmem:[#allocation14 + $0x14] sm:$0xf]
    %v821 = vld [vmem:[#allocation14 + $0x18] sm:$0xf]
    %v822 = vld [vmem:[#allocation14 + $0x1c] sm:$0xf]
    %v823 = vld [vmem:[#allocation14 + $0x20] sm:$0xf]
    %v824 = vld [vmem:[#allocation14 + $0x24] sm:$0xf]
    %v825 = vld [vmem:[#allocation14 + $0x28] sm:$0xf]
    %v826 = vld [vmem:[#allocation14 + $0x2c] sm:$0xf]
    %v827 = vld [vmem:[#allocation14 + $0x30] sm:$0xf]
    %v828 = vld [vmem:[#allocation14 + $0x34] sm:$0xf]
    %v829 = vld [vmem:[#allocation14 + $0x38] sm:$0xf]
    %v830 = vld [vmem:[#allocation14 + $0x3c] sm:$0xf]
    %v831 = vld [vmem:[#allocation5] sm:$0xf]
    %v832 = vld [vmem:[#allocation5 + $0x4] sm:$0xf]
    %v833 = vld [vmem:[#allocation5 + $0x8] sm:$0xf]
    %v834 = vld [vmem:[#allocation5 + $0xc] sm:$0xf]
    %v835 = vld [vmem:[#allocation16] sm:$0xf]
    %v836 = vld [vmem:[#allocation16 + $0x4] sm:$0xf]
    %v837 = vld [vmem:[#allocation16 + $0x8] sm:$0xf]
    %v838 = vld [vmem:[#allocation16 + $0xc] sm:$0xf]
    %v839 = vld [vmem:[#allocation16 + $0x10] sm:$0xf]
    %v840 = vld [vmem:[#allocation16 + $0x14] sm:$0xf]
    %v841 = vld [vmem:[#allocation16 + $0x18] sm:$0xf]
    %v842 = vld [vmem:[#allocation16 + $0x1c] sm:$0xf]
    %v843 = vld [vmem:[#allocation16 + $0x20] sm:$0xf]
    %v844 = vld [vmem:[#allocation16 + $0x24] sm:$0xf]
    %v845 = vld [vmem:[#allocation16 + $0x28] sm:$0xf]
    %v846 = vld [vmem:[#allocation16 + $0x2c] sm:$0xf]
    %v847 = vld [vmem:[#allocation16 + $0x30] sm:$0xf]
    %v848 = vld [vmem:[#allocation16 + $0x34] sm:$0xf]
    %v849 = vld [vmem:[#allocation16 + $0x38] sm:$0xf]
    %v850 = vld [vmem:[#allocation16 + $0x3c] sm:$0xf]
    %v855 = vunpack.c.l.b16 %v831
    %v856 = vunpack.c.l.b16 %v832
    %v857 = vunpack.c.l.b16 %v833
    %v858 = vunpack.c.l.b16 %v834
    %v859 = vpack.c.b16 %v856, %v855
    %v860 = vpack.c.b16 %v858, %v857
    %v879 = vunpack.c.l.b16 %v835
    %v880 = vunpack.c.l.b16 %v836
    %v881 = vunpack.c.l.b16 %v837
    %v882 = vunpack.c.l.b16 %v838
    %v883 = vunpack.c.l.b16 %v839
    %v884 = vunpack.c.l.b16 %v840
    %v885 = vunpack.c.l.b16 %v841
    %v886 = vunpack.c.l.b16 %v842
    %v887 = vunpack.c.l.b16 %v843
    %v888 = vunpack.c.l.b16 %v844
    %v889 = vunpack.c.l.b16 %v845
    %v890 = vunpack.c.l.b16 %v846
    %v891 = vunpack.c.l.b16 %v847
    %v892 = vunpack.c.l.b16 %v848
    %v893 = vunpack.c.l.b16 %v849
    %v894 = vunpack.c.l.b16 %v850
    %v895 = vpack.c.b16 %v880, %v879
    %v896 = vpack.c.b16 %v882, %v881
    %v897 = vpack.c.b16 %v884, %v883
    %v898 = vpack.c.b16 %v886, %v885
    %v899 = vpack.c.b16 %v888, %v887
    %v900 = vpack.c.b16 %v890, %v889
    %v901 = vpack.c.b16 %v892, %v891
    %v902 = vpack.c.b16 %v894, %v893
    %911 = vmatprep.subr.bf16.mxu0 0
    %912 = vmatpush1.bf16.msra.mxu0 %v895
    %913 = vmatprep.subr.bf16.mxu0 0
    %914 = vmatpush1.bf16.msra.mxu0 %v896
    %915 = vmatprep.subr.bf16.mxu0 0
    %916 = vmatpush1.bf16.msra.mxu0 %v897
    %917 = vmatprep.subr.bf16.mxu0 0
    %918 = vmatpush1.bf16.msra.mxu0 %v898
    %919 = vmatprep.subr.bf16.mxu0 0
    %920 = vmatpush1.bf16.msra.mxu0 %v899
    %921 = vmatprep.subr.bf16.mxu0 0
    %922 = vmatpush1.bf16.msra.mxu0 %v900
    %923 = vmatprep.subr.bf16.mxu0 0
    %924 = vmatpush1.bf16.msra.mxu0 %v901
    %925 = vmatprep.subr.bf16.mxu0 0
    %926 = vmatpush1.bf16.msra.mxu0 %v902
    %927 = vmatprep.subr.bf16.mxu0 0
    %928 = vmatpush1.bf16.msra.mxu0 0
    %929 = vmatprep.subr.bf16.mxu0 0
    %930 = vmatpush1.bf16.msra.mxu0 0
    %931 = vmatprep.subr.bf16.mxu0 0
    %932 = vmatpush1.bf16.msra.mxu0 0
    %933 = vmatprep.subr.bf16.mxu0 0
    %934 = vmatpush1.bf16.msra.mxu0 0
    %935 = vmatprep.subr.bf16.mxu0 0
    %936 = vmatpush1.bf16.msra.mxu0 0
    %937 = vmatprep.subr.bf16.mxu0 0
    %938 = vmatpush1.bf16.msra.mxu0 0
    %939 = vmatprep.subr.bf16.mxu0 0
    %940 = vmatpush1.bf16.msra.mxu0 0
    %941 = vmatprep.subr.bf16.mxu0 0
    %942 = vmatpush1.bf16.msra.mxu0 0
    %943 = vmatprep.mubr.bf16.mxu0 0
    %944 = vmatmul.mubr.bf16.gmra.mrb[0].mxu0 %v859
    %v945 = vpop.f32.mrb[0].mxu0
    %v946 = vadd.f32 0.0, %v945
    %v947 = vpop.f32.mrb[0].mxu0
    %v948 = vpop.f32.mrb[0].mxu0
    %v949 = vadd.f32 0.0, %v948
    %v950 = vpop.f32.mrb[0].mxu0
    %951 = vmatprep.mubr.bf16.mxu0 0
    %952 = vmatmul.mubr.bf16.gmra.mrb[0].mxu0 %v860
    %v953 = vpop.f32.mrb[0].mxu0
    %v954 = vadd.f32 0.0, %v953
    %v955 = vpop.f32.mrb[0].mxu0
    %v956 = vpop.f32.mrb[0].mxu0
    %v957 = vadd.f32 0.0, %v956
    %v958 = vpop.f32.mrb[0].mxu0
    %959 = vdwg.mxu0
    %v976 = vunpack.c.l.b16 %v815
    %v977 = vunpack.c.l.b16 %v816
    %v978 = vunpack.c.l.b16 %v817
    %v979 = vunpack.c.l.b16 %v818
    %v980 = vunpack.c.l.b16 %v819
    %v981 = vunpack.c.l.b16 %v820
    %v982 = vunpack.c.l.b16 %v821
    %v983 = vunpack.c.l.b16 %v822
    %v984 = vunpack.c.l.b16 %v823
    %v985 = vunpack.c.l.b16 %v824
    %v986 = vunpack.c.l.b16 %v825
    %v987 = vunpack.c.l.b16 %v826
    %v988 = vunpack.c.l.b16 %v827
    %v989 = vunpack.c.l.b16 %v828
    %v990 = vunpack.c.l.b16 %v829
    %v991 = vunpack.c.l.b16 %v830
    %v992 = vpack.c.b16 %v977, %v976
    %v993 = vpack.c.b16 %v979, %v978
    %v994 = vpack.c.b16 %v981, %v980
    %v995 = vpack.c.b16 %v983, %v982
    %v996 = vpack.c.b16 %v985, %v984
    %v997 = vpack.c.b16 %v987, %v986
    %v998 = vpack.c.b16 %v989, %v988
    %v999 = vpack.c.b16 %v991, %v990
    %1008 = vmatprep.subr.bf16.mxu0 0
    %1009 = vmatpush1.bf16.msra.mxu0 %v992
    %1010 = vmatprep.subr.bf16.mxu0 0
    %1011 = vmatpush1.bf16.msra.mxu0 %v993
    %1012 = vmatprep.subr.bf16.mxu0 0
    %1013 = vmatpush1.bf16.msra.mxu0 %v994
    %1014 = vmatprep.subr.bf16.mxu0 0
    %1015 = vmatpush1.bf16.msra.mxu0 %v995
    %1016 = vmatprep.subr.bf16.mxu0 0
    %1017 = vmatpush1.bf16.msra.mxu0 %v996
    %1018 = vmatprep.subr.bf16.mxu0 0
    %1019 = vmatpush1.bf16.msra.mxu0 %v997
    %1020 = vmatprep.subr.bf16.mxu0 0
    %1021 = vmatpush1.bf16.msra.mxu0 %v998
    %1022 = vmatprep.subr.bf16.mxu0 0
    %1023 = vmatpush1.bf16.msra.mxu0 %v999
    %1024 = vmatprep.subr.bf16.mxu0 0
    %1025 = vmatpush1.bf16.msra.mxu0 0
    %1026 = vmatprep.subr.bf16.mxu0 0
    %1027 = vmatpush1.bf16.msra.mxu0 0
    %1028 = vmatprep.subr.bf16.mxu0 0
    %1029 = vmatpush1.bf16.msra.mxu0 0
    %1030 = vmatprep.subr.bf16.mxu0 0
    %1031 = vmatpush1.bf16.msra.mxu0 0
    %1032 = vmatprep.subr.bf16.mxu0 0
    %1033 = vmatpush1.bf16.msra.mxu0 0
    %1034 = vmatprep.subr.bf16.mxu0 0
    %1035 = vmatpush1.bf16.msra.mxu0 0
    %1036 = vmatprep.subr.bf16.mxu0 0
    %1037 = vmatpush1.bf16.msra.mxu0 0
    %1038 = vmatprep.subr.bf16.mxu0 0
    %1039 = vmatpush1.bf16.msra.mxu0 0
    %1040 = vmatprep.mubr.bf16.mxu0 0
    %1041 = vmatmul.mubr.bf16.gmra.mrb[0].mxu0 %v813
    %v1042 = vpop.f32.mrb[0].mxu0
    %v1043 = vadd.f32 %v946, %v1042
    %v1044 = vpop.f32.mrb[0].mxu0
    %v1045 = vpop.f32.mrb[0].mxu0
    %v1046 = vadd.f32 %v949, %v1045
    %v1047 = vpop.f32.mrb[0].mxu0
    %1048 = vmatprep.mubr.bf16.mxu0 0
    %1049 = vmatmul.mubr.bf16.gmra.mrb[0].mxu0 %v814
    %v1050 = vpop.f32.mrb[0].mxu0
    %v1051 = vadd.f32 %v954, %v1050
    %v1052 = vpop.f32.mrb[0].mxu0
    %v1053 = vpop.f32.mrb[0].mxu0
    %v1054 = vadd.f32 %v957, %v1053
    %v1055 = vpop.f32.mrb[0].mxu0
    %1056 = vdwg.mxu0
    %v1057 = vld [vmem:[%s12] sm:$0x1]
    %v1059 = vlaneseq
    %v1060 = vshrl.u32 %v1059, 7
    %v1061 = vsub.s32 0, %v1060
    %v1062 = vrot.slane %v1057, %v1061
    %v1064 = vadd.f32 %v1043, %v1062
    %v1065 = vadd.f32 %v1046, %v1062
    %v1066 = vadd.f32 %v1051, %v1062
    %v1067 = vadd.f32 %v1054, %v1062
    %v1068 = vmax.f32 %v1064, 0.0
    %v1069 = vmax.f32 %v1065, 0.0
    %v1070 = vmax.f32 %v1066, 0.0
    %v1071 = vmax.f32 %v1067, 0.0
    %v1072 = vpack.c.bf16 %v1069, %v1068
    %v1073 = vpack.c.bf16 %v1071, %v1070
    %v1074 = vld [vmem:[#allocation17] sm:$0xf]
    %v1075 = vld [vmem:[#allocation17 + $0x4] sm:$0xf]
    %v1076 = vld [vmem:[#allocation17 + $0x8] sm:$0xf]
    %v1077 = vld [vmem:[#allocation17 + $0xc] sm:$0xf]
    %v1078 = vld [vmem:[#allocation17 + $0x10] sm:$0xf]
    %v1079 = vld [vmem:[#allocation17 + $0x14] sm:$0xf]
    %v1080 = vld [vmem:[#allocation17 + $0x18] sm:$0xf]
    %v1081 = vld [vmem:[#allocation17 + $0x1c] sm:$0xf]
    %v1082 = vld [vmem:[#allocation17 + $0x20] sm:$0xf]
    %v1083 = vld [vmem:[#allocation17 + $0x24] sm:$0xf]
    %v1084 = vld [vmem:[#allocation17 + $0x28] sm:$0xf]
    %v1085 = vld [vmem:[#allocation17 + $0x2c] sm:$0xf]
    %v1086 = vld [vmem:[#allocation17 + $0x30] sm:$0xf]
    %v1087 = vld [vmem:[#allocation17 + $0x34] sm:$0xf]
    %v1088 = vld [vmem:[#allocation17 + $0x38] sm:$0xf]
    %v1089 = vld [vmem:[#allocation17 + $0x3c] sm:$0xf]
    %v1090 = vld [vmem:[%s14] sm:$0x1]
    %v1092 = vlaneseq
    %v1093 = vshrl.u32 %v1092, 7
    %v1094 = vsub.s32 0, %v1093
    %v1095 = vrot.slane %v1090, %v1094
    %v1113 = vunpack.c.l.b16 %v1074
    %v1114 = vunpack.c.l.b16 %v1075
    %v1115 = vunpack.c.l.b16 %v1076
    %v1116 = vunpack.c.l.b16 %v1077
    %v1117 = vunpack.c.l.b16 %v1078
    %v1118 = vunpack.c.l.b16 %v1079
    %v1119 = vunpack.c.l.b16 %v1080
    %v1120 = vunpack.c.l.b16 %v1081
    %v1121 = vunpack.c.l.b16 %v1082
    %v1122 = vunpack.c.l.b16 %v1083
    %v1123 = vunpack.c.l.b16 %v1084
    %v1124 = vunpack.c.l.b16 %v1085
    %v1125 = vunpack.c.l.b16 %v1086
    %v1126 = vunpack.c.l.b16 %v1087
    %v1127 = vunpack.c.l.b16 %v1088
    %v1128 = vunpack.c.l.b16 %v1089
    %v1129 = vpack.c.b16 %v1114, %v1113
    %v1130 = vpack.c.b16 %v1116, %v1115
    %v1131 = vpack.c.b16 %v1118, %v1117
    %v1132 = vpack.c.b16 %v1120, %v1119
    %v1133 = vpack.c.b16 %v1122, %v1121
    %v1134 = vpack.c.b16 %v1124, %v1123
    %v1135 = vpack.c.b16 %v1126, %v1125
    %v1136 = vpack.c.b16 %v1128, %v1127
    %1145 = vmatprep.subr.bf16.mxu0 0
    %1146 = vmatpush1.bf16.msra.mxu0 %v1129
    %1147 = vmatprep.subr.bf16.mxu0 0
    %1148 = vmatpush1.bf16.msra.mxu0 %v1130
    %1149 = vmatprep.subr.bf16.mxu0 0
    %1150 = vmatpush1.bf16.msra.mxu0 %v1131
    %1151 = vmatprep.subr.bf16.mxu0 0
    %1152 = vmatpush1.bf16.msra.mxu0 %v1132
    %1153 = vmatprep.subr.bf16.mxu0 0
    %1154 = vmatpush1.bf16.msra.mxu0 %v1133
    %1155 = vmatprep.subr.bf16.mxu0 0
    %1156 = vmatpush1.bf16.msra.mxu0 %v1134
    %1157 = vmatprep.subr.bf16.mxu0 0
    %1158 = vmatpush1.bf16.msra.mxu0 %v1135
    %1159 = vmatprep.subr.bf16.mxu0 0
    %1160 = vmatpush1.bf16.msra.mxu0 %v1136
    %1161 = vmatprep.subr.bf16.mxu0 0
    %1162 = vmatpush1.bf16.msra.mxu0 0
    %1163 = vmatprep.subr.bf16.mxu0 0
    %1164 = vmatpush1.bf16.msra.mxu0 0
    %1165 = vmatprep.subr.bf16.mxu0 0
    %1166 = vmatpush1.bf16.msra.mxu0 0
    %1167 = vmatprep.subr.bf16.mxu0 0
    %1168 = vmatpush1.bf16.msra.mxu0 0
    %1169 = vmatprep.subr.bf16.mxu0 0
    %1170 = vmatpush1.bf16.msra.mxu0 0
    %1171 = vmatprep.subr.bf16.mxu0 0
    %1172 = vmatpush1.bf16.msra.mxu0 0
    %1173 = vmatprep.subr.bf16.mxu0 0
    %1174 = vmatpush1.bf16.msra.mxu0 0
    %1175 = vmatprep.subr.bf16.mxu0 0
    %1176 = vmatpush1.bf16.msra.mxu0 0
    %1177 = vmatprep.mubr.bf16.mxu0 0
    %1178 = vmatmul.mubr.bf16.gmra.mrb[0].mxu0 %v1072
    %v1179 = vpop.f32.mrb[0].mxu0
    %v1180 = vadd.f32 %v1095, %v1179
    %v1181 = vpop.f32.mrb[0].mxu0
    %v1182 = vpop.f32.mrb[0].mxu0
    %v1183 = vadd.f32 %v1095, %v1182
    %v1184 = vpop.f32.mrb[0].mxu0
    %1185 = vmatprep.mubr.bf16.mxu0 0
    %1186 = vmatmul.mubr.bf16.gmra.mrb[0].mxu0 %v1073
    %v1187 = vpop.f32.mrb[0].mxu0
    %v1188 = vadd.f32 %v1095, %v1187
    %v1189 = vpop.f32.mrb[0].mxu0
    %v1190 = vpop.f32.mrb[0].mxu0
    %v1191 = vadd.f32 %v1095, %v1190
    %v1192 = vpop.f32.mrb[0].mxu0
    %1193 = vdwg.mxu0
    %v1194 = vmax.f32 %v1180, 0.0
    %v1195 = vmax.f32 %v1183, 0.0
    %v1196 = vmax.f32 %v1188, 0.0
    %v1197 = vmax.f32 %v1191, 0.0
    %v1198 = vpack.c.bf16 %v1195, %v1194
    %v1199 = vpack.c.bf16 %v1197, %v1196
    %v1200 = vld [vmem:[#allocation19] sm:$0xf]
    %v1201 = vld [vmem:[#allocation19 + $0x4] sm:$0xf]
    %v1202 = vld [vmem:[#allocation19 + $0x8] sm:$0xf]
    %v1203 = vld [vmem:[#allocation19 + $0xc] sm:$0xf]
    %v1204 = vld [vmem:[#allocation19 + $0x10] sm:$0xf]
    %v1205 = vld [vmem:[#allocation19 + $0x14] sm:$0xf]
    %v1206 = vld [vmem:[#allocation19 + $0x18] sm:$0xf]
    %v1207 = vld [vmem:[#allocation19 + $0x1c] sm:$0xf]
    %v1208 = vld [vmem:[#allocation19 + $0x20] sm:$0xf]
    %v1209 = vld [vmem:[#allocation19 + $0x24] sm:$0xf]
    %v1210 = vld [vmem:[#allocation19 + $0x28] sm:$0xf]
    %v1211 = vld [vmem:[#allocation19 + $0x2c] sm:$0xf]
    %v1212 = vld [vmem:[#allocation19 + $0x30] sm:$0xf]
    %v1213 = vld [vmem:[#allocation19 + $0x34] sm:$0xf]
    %v1214 = vld [vmem:[#allocation19 + $0x38] sm:$0xf]
    %v1215 = vld [vmem:[#allocation19 + $0x3c] sm:$0xf]
    %v1216 = vld [vmem:[%s16] sm:$0x1]
    %v1218 = vlaneseq
    %v1219 = vshrl.u32 %v1218, 7
    %v1220 = vsub.s32 0, %v1219
    %v1221 = vrot.slane %v1216, %v1220
    %v1239 = vunpack.c.l.b16 %v1200
    %v1240 = vunpack.c.l.b16 %v1201
    %v1241 = vunpack.c.l.b16 %v1202
    %v1242 = vunpack.c.l.b16 %v1203
    %v1243 = vunpack.c.l.b16 %v1204
    %v1244 = vunpack.c.l.b16 %v1205
    %v1245 = vunpack.c.l.b16 %v1206
    %v1246 = vunpack.c.l.b16 %v1207
    %v1247 = vunpack.c.l.b16 %v1208
    %v1248 = vunpack.c.l.b16 %v1209
    %v1249 = vunpack.c.l.b16 %v1210
    %v1250 = vunpack.c.l.b16 %v1211
    %v1251 = vunpack.c.l.b16 %v1212
    %v1252 = vunpack.c.l.b16 %v1213
    %v1253 = vunpack.c.l.b16 %v1214
    %v1254 = vunpack.c.l.b16 %v1215
    %v1255 = vpack.c.b16 %v1240, %v1239
    %v1256 = vpack.c.b16 %v1242, %v1241
    %v1257 = vpack.c.b16 %v1244, %v1243
    %v1258 = vpack.c.b16 %v1246, %v1245
    %v1259 = vpack.c.b16 %v1248, %v1247
    %v1260 = vpack.c.b16 %v1250, %v1249
    %v1261 = vpack.c.b16 %v1252, %v1251
    %v1262 = vpack.c.b16 %v1254, %v1253
    %1271 = vmatprep.subr.bf16.mxu0 0
    %1272 = vmatpush1.bf16.msra.mxu0 %v1255
    %1273 = vmatprep.subr.bf16.mxu0 0
    %1274 = vmatpush1.bf16.msra.mxu0 %v1256
    %1275 = vmatprep.subr.bf16.mxu0 0
    %1276 = vmatpush1.bf16.msra.mxu0 %v1257
    %1277 = vmatprep.subr.bf16.mxu0 0
    %1278 = vmatpush1.bf16.msra.mxu0 %v1258
    %1279 = vmatprep.subr.bf16.mxu0 0
    %1280 = vmatpush1.bf16.msra.mxu0 %v1259
    %1281 = vmatprep.subr.bf16.mxu0 0
    %1282 = vmatpush1.bf16.msra.mxu0 %v1260
    %1283 = vmatprep.subr.bf16.mxu0 0
    %1284 = vmatpush1.bf16.msra.mxu0 %v1261
    %1285 = vmatprep.subr.bf16.mxu0 0
    %1286 = vmatpush1.bf16.msra.mxu0 %v1262
    %1287 = vmatprep.subr.bf16.mxu0 0
    %1288 = vmatpush1.bf16.msra.mxu0 0
    %1289 = vmatprep.subr.bf16.mxu0 0
    %1290 = vmatpush1.bf16.msra.mxu0 0
    %1291 = vmatprep.subr.bf16.mxu0 0
    %1292 = vmatpush1.bf16.msra.mxu0 0
    %1293 = vmatprep.subr.bf16.mxu0 0
    %1294 = vmatpush1.bf16.msra.mxu0 0
    %1295 = vmatprep.subr.bf16.mxu0 0
    %1296 = vmatpush1.bf16.msra.mxu0 0
    %1297 = vmatprep.subr.bf16.mxu0 0
    %1298 = vmatpush1.bf16.msra.mxu0 0
    %1299 = vmatprep.subr.bf16.mxu0 0
    %1300 = vmatpush1.bf16.msra.mxu0 0
    %1301 = vmatprep.subr.bf16.mxu0 0
    %1302 = vmatpush1.bf16.msra.mxu0 0
    %1303 = vmatprep.mubr.bf16.mxu0 0
    %1304 = vmatmul.mubr.bf16.gmra.mrb[0].mxu0 %v1198
    %v1305 = vpop.f32.mrb[0].mxu0
    %v1306 = vadd.f32 %v1221, %v1305
    %v1307 = vpop.f32.mrb[0].mxu0
    %v1308 = vpop.f32.mrb[0].mxu0
    %v1309 = vadd.f32 %v1221, %v1308
    %v1310 = vpop.f32.mrb[0].mxu0
    %1311 = vmatprep.mubr.bf16.mxu0 0
    %1312 = vmatmul.mubr.bf16.gmra.mrb[0].mxu0 %v1199
    %v1313 = vpop.f32.mrb[0].mxu0
    %v1314 = vadd.f32 %v1221, %v1313
    %v1315 = vpop.f32.mrb[0].mxu0
    %v1316 = vpop.f32.mrb[0].mxu0
    %v1317 = vadd.f32 %v1221, %v1316
    %v1318 = vpop.f32.mrb[0].mxu0
    %1319 = vdwg.mxu0
    %1320 = vst [vmem:[#allocation20] sm:$0xff] %v1306
    %1321 = vst [vmem:[#allocation20 + $0x8] sm:$0xff] %v1309
    %1322 = vst [vmem:[#allocation20 + $0x10] sm:$0xff] %v1314
    %1323 = vst [vmem:[#allocation20 + $0x18] sm:$0xff] %v1317
    // Predicated region
    $region114: #{tpu_custom_call.1} parent=1 // pred_check
      _
    $region115: #{tpu_custom_call.1} parent=1 // pred_check_branch
      %1325 = sbr.rel (0) target = $region117
    $region116: #{tpu_custom_call.1} parent=1 // pred_region
      %s1327 = ssub.s32 512, 512
      %1328 = vsyncadd [#allocation4], %s1327
      %s1329 = sshll.u32 [#allocation20], 4
      %s1330 = int_to_ptr.vmem [resolvable:$true] %s1329
      %1335 = dma.vmem_to_hbm [thread:$0]  %s1330, 512, %s17, [#allocation4], 128, 128, 8
    $region117: #{tpu_custom_call.1} parent=1 // pred_fallthru
      _
    // Predicated region
    $region118: #{tpu_custom_call.1} parent=1 // pred_check
      _
    $region119: #{tpu_custom_call.1} parent=1 // pred_check_branch
      %1337 = sbr.rel (0) target = $region121
    $region120: #{tpu_custom_call.1} parent=1 // pred_region
      %s1339 = ssub.s32 512, 512
      %1340 = vsyncadd [#allocation22], %s1339
      %s1341 = sshll.u32 [#allocation21], 4
      %s1342 = int_to_ptr.vmem [resolvable:$true] %s1341
      %1347 = dma.vmem_to_hbm [thread:$0]  %s1342, 512, %s18, [#allocation22], 128, 128, 8
    $region121: #{tpu_custom_call.1} parent=1 // pred_fallthru
      _
    // Predicated region
    $region122: #{tpu_custom_call.1} parent=1 // pred_check
      _
    $region123: #{tpu_custom_call.1} parent=1 // pred_check_branch
      %1349 = sbr.rel (0) target = $region125
    $region124: #{tpu_custom_call.1} parent=1 // pred_region
      %s1351 = ssub.s32 512, 512
      %1352 = vsyncadd [#allocation22], %s1351
      %s1353 = sshll.u32 [#allocation23], 4
      %s1354 = int_to_ptr.vmem [resolvable:$true] %s1353
      %1359 = dma.vmem_to_hbm [thread:$0]  %s1354, 512, %s19, [#allocation22], 128, 128, 8
    $region125: #{tpu_custom_call.1} parent=1 // pred_fallthru
      _
    // Predicated region
    $region126: #{tpu_custom_call.1} parent=1 // pred_check
      _
    $region127: #{tpu_custom_call.1} parent=1 // pred_check_branch
      %1361 = sbr.rel (0) target = $region129
    $region128: #{tpu_custom_call.1} parent=1 // pred_region
      %1362 = dma.done [#allocation4], 512
    $region129: #{tpu_custom_call.1} parent=1 // pred_fallthru
      _
    // Predicated region
    $region130: #{tpu_custom_call.1} parent=1 // pred_check
      _
    $region131: #{tpu_custom_call.1} parent=1 // pred_check_branch
      %1364 = sbr.rel (0) target = $region133
    $region132: #{tpu_custom_call.1} parent=1 // pred_region
      %1365 = dma.done [#allocation22], 512
    $region133: #{tpu_custom_call.1} parent=1 // pred_fallthru
      _
    // Predicated region
    $region134: #{tpu_custom_call.1} parent=1 // pred_check
      _
    $region135: #{tpu_custom_call.1} parent=1 // pred_check_branch
      %1367 = sbr.rel (0) target = $region137
    $region136: #{tpu_custom_call.1} parent=1 // pred_region
      %1368 = dma.done [#allocation22], 512
    $region137: #{tpu_custom_call.1} parent=1 // pred_fallthru
      _
    %1369 = vsyncpa [#allocation3], 1
    %1370 = vsyncpa [#allocation6], 1
    %1371 = vsyncpa [#allocation9], 1
    %1372 = vsyncpa [#allocation12], 1
    %1373 = vsyncpa [#allocation15], 1
    %1374 = vsyncpa [#allocation18], 1
    %1375 = vsyncpa [#allocation4], 1
    %1376 = vsyncpa [#allocation22], 1

</llo_original>
